<compile_context>
chip_gen: v7x
topology: tpu7x:2x2x1
jax: 0.10.0
libtpu: 0.0.40
codegen_flags: <defaults>
</compile_context>

<pallas_src>
import math
import functools

import jax
import jax.numpy as jnp
from jax import lax
from jax.experimental import pallas as pl
from jax.experimental.pallas import tpu as pltpu


_BIG_NEG = -1e30  # finite "-inf": keeps fully-masked rows NaN-free


# ----------------------------------------------------------------------------
# Pallas kernel: one (batch, head-block) pair per grid step.
# ----------------------------------------------------------------------------
def _rel_mha_kernel(q_ref, k_ref, v_ref, pt_ref, bias_ref, m01_ref,
                    wq_ref, bq_ref, wk_ref, bk_ref, wv_ref, bv_ref,
                    wo_ref, bo_ref, pbu_ref, pbv_ref,
                    out_ref, acc_ref,
                    *, scale, t1, hb, dk, n_blocks, exact_softmax):
    f32 = jnp.float32
    cdt = q_ref.dtype                       # MXU-input dtype (bf16 or f32)
    hbdk = hb * dk
    p_pad = pt_ref.shape[-1]
    t2p = k_ref.shape[1]
    g = pl.program_id(1)

    def mm(a, b):      # (M,K) @ (K,N) -> (M,N), f32 accumulation on the MXU
        return lax.dot_general(a, b, (((1,), (0,)), ((), ())),
                               preferred_element_type=f32)

    def mm_nt(a, b):   # (M,K) @ (N,K)^T -> (M,N)
        return lax.dot_general(a, b, (((1,), (1,)), ((), ())),
                               preferred_element_type=f32)

    # Slice the fully-resident weights / biases / positions for this head block.
    p_blk = pt_ref.at[0]                    # (D, p_pad) ref view, no load
    if n_blocks == 1:
        def cds(r):
            return r[...]
        w_o = wo_ref[...]

        def p_rows(c0):
            return p_blk[c0:c0 + dk, :]
    else:
        col = pl.multiple_of(g * hbdk, 128)  # hbdk is a multiple of 128 here

        def cds(r):
            return r[:, pl.ds(col, hbdk)]
        w_o = wo_ref[pl.ds(col, hbdk), :]

        def p_rows(c0):
            return p_blk[pl.ds(col + c0, dk), :]

    wq_g, wk_g, wv_g = cds(wq_ref), cds(wk_ref), cds(wv_ref)
    bq_g, bk_g, bv_g = cds(bq_ref), cds(bk_ref), cds(bv_ref)
    pbu_g, pbv_g = cds(pbu_ref), cds(pbv_ref)

    # Per-block projections: one (T, D) @ (D, hb*dk) matmul each.
    q = mm(q_ref[0], wq_g) + bq_g           # (t1p, hbdk) f32
    k = mm(k_ref[0], wk_g) + bk_g           # (t2p, hbdk) f32
    v = mm(v_ref[0], wv_g) + bv_g           # (t2p, hbdk) f32

    # Fold 1/sqrt(d_k) into the small query tensors, not the (t1, t2) scores.
    qu = ((q + pbu_g) * scale).astype(cdt)
    qv = ((q + pbv_g) * scale).astype(cdt)
    kc = k.astype(cdt)
    vc = v.astype(cdt)

    bias = bias_ref[0]                      # (tm, t2p) f32: 0 / -1e30
    m01 = m01_ref[0]                        # (tm, t2p) f32: 1 / 0

    ov_parts = []
    for hl in range(hb):                    # static loop over heads in the block
        c0 = hl * dk
        qu_h = qu[:, c0:c0 + dk]
        qv_h = qv[:, c0:c0 + dk]
        k_h = kc[:, c0:c0 + dk]
        v_h = vc[:, c0:c0 + dk]
        p_h = p_rows(c0)                    # (dk, p_pad), pre-transposed in wrapper

        ac = mm_nt(qu_h, k_h)               # (t1p, t2p)   f32
        bd = mm(qv_h, p_h)                  # (t1p, p_pad) f32

        # rel_shift: row i needs bd[i, j + (t1 - 1 - i)].  One strided lane roll
        # (XLU); the position axis is padded so no real read ever wraps, and the
        # slice back to t2p columns is lane-aligned.
        bd_s = pltpu.roll(bd, shift=p_pad - (t1 - 1), axis=1,
                          stride=1, stride_axis=0)[:, :t2p]

        s = ac + bd_s + bias                # additive mask; already pre-scaled
        mx = jnp.max(s, axis=-1, keepdims=True)
        e = jnp.exp(s - mx)
        den = jnp.sum(e, axis=-1, keepdims=True)
        if exact_softmax:
            attn = e / den
        else:
            attn = e * pl.reciprocal(den, approx=True)
        attn = attn * m01                   # re-zero masked cols / fully-masked rows
        # TODO(synk): torch.nn.Dropout on attn is identity here (inference mode).
        # TODO(synk): zero_triu=True branch of rel_shift not implemented (default False).

        ov_parts.append(mm(attn.astype(cdt), v_h))          # (t1p, dk) f32

    ov = jnp.concatenate(ov_parts, axis=1).astype(cdt)        # (t1p, hbdk)
    contrib = mm(ov, w_o)                                      # (t1p, D) f32

    if n_blocks == 1:
        out_ref[0] = (contrib + bo_ref[...]).astype(out_ref.dtype)
    else:
        @pl.when(g == 0)
        def _():
            acc_ref[...] = jnp.zeros_like(acc_ref)

        acc_ref[...] += contrib

        @pl.when(g == n_blocks - 1)
        def _():
            out_ref[0] = (acc_ref[...] + bo_ref[...]).astype(out_ref.dtype)


# ----------------------------------------------------------------------------
# Head-block size selection
# ----------------------------------------------------------------------------
def _choose_heads_per_block(H, dk, T1p, T2p, Ppad, D, c_item, budget=20 << 20):
    # Largest divisor of H whose per-step f32 working set fits the budget, with
    # the head-block width lane aligned (or == D) so resident-weight slices are
    # aligned.  Falls back to the smallest aligned divisor.
    cands = [d for d in range(H, 0, -1)
             if H % d == 0 and (d == H or (d * dk) % 128 == 0)]
    for d in cands:
        w = d * dk
        ws = 4 * (T1p * (w + D) + 2 * T2p * w)          # q, k, v projections + acc
        ws += 4 * (2 * T1p * T2p + T1p * Ppad)          # scores/attn + bd temps
        ws += c_item * (T1p * w + dk * Ppad)            # ov concat + per-head p load
        if ws <= budget:
            return d
    return cands[-1]


# ----------------------------------------------------------------------------
# Wrapper
# ----------------------------------------------------------------------------
def rel_position_mha(params, query, key, value, mask, pos_emb, *,
                     compute_dtype=jnp.bfloat16, heads_per_block=None):
    f32 = jnp.float32
    cdt = jnp.dtype(compute_dtype)
    out_dtype = query.dtype

    B, T1, D = query.shape
    T2 = key.shape[1]
    Tpos = pos_emb.shape[1]
    pos_b = pos_emb.shape[0]
    H = int(params["num_head"])
    assert D % H == 0
    dk = D // H
    # The torch broadcast (matrix_ac + rel_shift(matrix_bd)) is only well-formed
    # for the standard usage Tpos == 2*T2 - 1; self-attention also has T1 <= T2.
    assert Tpos == 2 * T2 - 1 and T1 <= T2
    assert pos_b in (1, B)

    def rup(x, m):
        return ((x + m - 1) // m) * m

    T1p = rup(T1, 8)
    T2p = rup(T2, 128)
    n_pos_used = T1 + T2p - 1                 # position rows actually read
    Ppad = rup(n_pos_used, 128)

    # ---- one-time preprocessing outside the kernel (plain XLA) ----------------
    qc = jnp.pad(query, ((0, 0), (0, T1p - T1), (0, 0))).astype(cdt)
    kc = jnp.pad(key, ((0, 0), (0, T2p - T2), (0, 0))).astype(cdt)
    vc = jnp.pad(value, ((0, 0), (0, T2p - T2), (0, 0))).astype(cdt)

    # mask -> additive bias (0 / -1e30) + multiplicative re-zero mask
    if mask is None:
        m01 = jnp.ones((B, 1, T2), f32)
    else:
        m01 = (mask != 0).astype(f32)
    Tm = m01.shape[1]
    assert Tm in (1, T1), "mask must be (B, 1, T2) or (B, T1, T2)"
    m01 = jnp.pad(m01, ((0, 0), (0, (T1p - T1) if Tm == T1 else 0), (0, T2p - T2)))
    Tm2 = m01.shape[1]
    bias = (1.0 - m01) * _BIG_NEG

    # batch/head-invariant position projection hoisted out of the kernel,
    # trimmed to the rows actually read, zero-padded to a lane multiple and
    # pre-transposed so the bd matmul needs no in-kernel transpose.
    p = pos_emb.astype(f32) @ params["wp"].astype(f32)        # (pos_b, Tpos, D)
    p = p[:, :min(Tpos, n_pos_used), :]
    p = jnp.pad(p, ((0, 0), (0, Ppad - p.shape[1]), (0, 0)))
    p_t = jnp.transpose(p, (0, 2, 1)).astype(cdt)             # (pos_b, D, Ppad)

    # Weights stay in their natural head-major (in, out) layout and are kept
    # fully VMEM-resident (constant index_map).  Biases as (1, D) f32 rows.
    wq = params["wq"].astype(cdt)
    wk = params["wk"].astype(cdt)
    wv = params["wv"].astype(cdt)
    wo = params["wo"].astype(cdt)
    bq = params["bq"].reshape(1, D).astype(f32)
    bk = params["bk"].reshape(1, D).astype(f32)
    bv = params["bv"].reshape(1, D).astype(f32)
    bo = params["bo"].reshape(1, D).astype(f32)
    pbu = params["pbu"].reshape(1, D).astype(f32)
    pbv = params["pbv"].reshape(1, D).astype(f32)

    # ---- head-block size -------------------------------------------------------
    if heads_per_block is None:
        hb = _choose_heads_per_block(H, dk, T1p, T2p, Ppad, D, cdt.itemsize)
    else:
        hb = int(heads_per_block)
        assert H % hb == 0 and (hb == H or (hb * dk) % 128 == 0)
    G = H // hb
    hbdk = hb * dk

    kernel = functools.partial(
        _rel_mha_kernel, scale=1.0 / math.sqrt(dk), t1=T1, hb=hb, dk=dk,
        n_blocks=G, exact_softmax=bool(cdt == jnp.float32))

    bmap = lambda b, g: (b, 0, 0)             # per-batch blocks (resident across g)
    cmap3 = lambda b, g: (0, 0, 0)
    cmap2 = lambda b, g: (0, 0)               # fully resident arrays
    pmap = cmap3 if pos_b == 1 else bmap

    in_specs = [
        pl.BlockSpec((1, T1p, D), bmap),        # query
        pl.BlockSpec((1, T2p, D), bmap),        # key
        pl.BlockSpec((1, T2p, D), bmap),        # value
        pl.BlockSpec((1, D, Ppad), pmap),       # projected / transposed positions
        pl.BlockSpec((1, Tm2, T2p), bmap),      # additive mask bias
        pl.BlockSpec((1, Tm2, T2p), bmap),      # multiplicative mask
        pl.BlockSpec((D, D), cmap2),            # wq (resident)
        pl.BlockSpec((1, D), cmap2),            # bq
        pl.BlockSpec((D, D), cmap2),            # wk
        pl.BlockSpec((1, D), cmap2),            # bk
        pl.BlockSpec((D, D), cmap2),            # wv
        pl.BlockSpec((1, D), cmap2),            # bv
        pl.BlockSpec((D, D), cmap2),            # wo
        pl.BlockSpec((1, D), cmap2),            # bo
        pl.BlockSpec((1, D), cmap2),            # pos_bias_u
        pl.BlockSpec((1, D), cmap2),            # pos_bias_v
    ]
    out_specs = pl.BlockSpec((1, T1p, D), bmap)   # resident across head blocks

    out_item = jnp.dtype(out_dtype).itemsize

    # advisory cost estimate for the XLA scheduler
    flops = (2 * B * (2 * T1p + 2 * T2p) * D * D
             + 2 * B * H * T1p * dk * (2 * T2p + Ppad))
    bytes_accessed = ((B * (T1p + 2 * T2p) * D + 4 * D * D + pos_b * D * Ppad)
                      * cdt.itemsize
                      + 2 * B * Tm2 * T2p * 4
                      + B * T1p * D * out_item)
    cost = pl.CostEstimate(flops=int(flops),
                           transcendentals=int(B * H * T1p * T2p),
                           bytes_accessed=int(bytes_accessed))

    # scoped VMEM: double-buffered per-batch blocks + resident weights/positions
    # + f32 temporaries, capped at 75% of physical VMEM (v7x has only 64 MiB).
    blk_in = (T1p + 2 * T2p) * D * cdt.itemsize + 2 * Tm2 * T2p * 4
    resident = (4 * D * D + D * Ppad) * cdt.itemsize + 6 * D * 4
    temps = 4 * (T1p * (hbdk + D) + 2 * T2p * hbdk + 2 * T1p * T2p
                 + T1p * Ppad + T1p * hbdk + T1p * D)
    needed = 2 * (blk_in + T1p * D * out_item) + 2 * resident + temps + (4 << 20)
    try:
        cap = int(pltpu.get_tpu_info().vmem_capacity_bytes)
    except Exception:
        cap = 64 << 20
    vmem_limit = int(min(int(0.75 * cap), max(32 << 20, needed)))

    out = pl.pallas_call(
        kernel,
        out_shape=jax.ShapeDtypeStruct((B, T1p, D), out_dtype),
        grid=(B, G),
        in_specs=in_specs,
        out_specs=out_specs,
        scratch_shapes=[pltpu.VMEM((T1p, D), f32)],
        compiler_params=pltpu.CompilerParams(
            dimension_semantics=("parallel", "arbitrary"),
            vmem_limit_bytes=vmem_limit),
        cost_estimate=cost,
    )(qc, kc, vc, p_t, bias, m01,
      wq, bq, wk, bk, wv, bv, wo, bo, pbu, pbv)

    return out[:, :T1, :]


# ----------------------------------------------------------------------------
# Deterministic parameter init (synthetic; mirrors the shapes in __init__)
# ----------------------------------------------------------------------------
def init_params(rng, num_head, feat_dim):
    dk = feat_dim // num_head
    ks = jax.random.split(rng, 11)

    def lin_w(k):
        return (jax.random.normal(k, (feat_dim, feat_dim), jnp.float32)
                / math.sqrt(feat_dim))

    def lin_b(k):
        return 0.1 * jax.random.normal(k, (1, feat_dim), jnp.float32)

    bound = math.sqrt(6.0 / (num_head + dk))  # xavier_uniform bound
    return {
        "num_head": num_head,
        "wq": lin_w(ks[0]), "bq": lin_b(ks[1]),
        "wk": lin_w(ks[2]), "bk": lin_b(ks[3]),
        "wv": lin_w(ks[4]), "bv": lin_b(ks[5]),
        "wp": lin_w(ks[6]),
        "wo": lin_w(ks[7]), "bo": lin_b(ks[8]),
        "pbu": jax.random.uniform(ks[9], (num_head, dk), jnp.float32, -bound, bound),
        "pbv": jax.random.uniform(ks[10], (num_head, dk), jnp.float32, -bound, bound),
    }


# ----------------------------------------------------------------------------
# Pure-JAX reference (literal transcription of the torch forward) for checking
# ----------------------------------------------------------------------------
def _rel_shift_ref(x):
    b, h, t1, n = x.shape
    zero_pad = jnp.zeros((b, h, t1, 1), x.dtype)
    x_padded = jnp.concatenate([zero_pad, x], axis=-1)
    x_padded = x_padded.reshape(b, h, n + 1, t1)
    x = x_padded[:, :, 1:].reshape(b, h, t1, n)
    return x[:, :, :, : n // 2 + 1]


def rel_position_mha_ref(params, query, key, value, mask, pos_emb):
    B, T1, D = query.shape
    H = params["num_head"]
    dk = D // H
    q = query @ params["wq"] + params["bq"]
    k = key @ params["wk"] + params["bk"]
    v = value @ params["wv"] + params["bv"]
    p = pos_emb @ params["wp"]
    q = q.reshape(B, -1, H, dk)
    k = k.reshape(B, -1, H, dk).transpose(0, 2, 1, 3)
    v = v.reshape(B, -1, H, dk).transpose(0, 2, 1, 3)
    p = p.reshape(pos_emb.shape[0], -1, H, dk).transpose(0, 2, 1, 3)
    q_u = (q + params["pbu"]).transpose(0, 2, 1, 3)
    q_v = (q + params["pbv"]).transpose(0, 2, 1, 3)
    ac = jnp.matmul(q_u, jnp.swapaxes(k, -2, -1))
    bd = _rel_shift_ref(jnp.matmul(q_v, jnp.swapaxes(p, -2, -1)))
    scores = (ac + bd) / math.sqrt(dk)
    if mask is not None:
        m = (mask[:, None, :, :] == 0)
        scores = jnp.where(m, -jnp.inf, scores)
        attn = jax.nn.softmax(scores, axis=-1)
        attn = jnp.where(m, 0.0, attn)
    else:
        attn = jax.nn.softmax(scores, axis=-1)
    x = jnp.matmul(attn, v).transpose(0, 2, 1, 3).reshape(B, -1, D)
    return x @ params["wo"] + params["bo"]


# ----------------------------------------------------------------------------
if __name__ == "__main__":
    root = jax.random.PRNGKey(0)

    # ---- config 1: B=2, H=4, D=32, T1=T2=8, (B,1,T2) padding mask -------------
    B, H, D, T = 2, 4, 32, 8
    kp, kq, kk, kv, kpos = jax.random.split(root, 5)
    params = init_params(kp, H, D)
    query = jax.random.normal(kq, (B, T, D), jnp.float32)
    key_t = jax.random.normal(kk, (B, T, D), jnp.float32)
    value = jax.random.normal(kv, (B, T, D), jnp.float32)
    pos_emb = jax.random.normal(kpos, (1, 2 * T - 1, D), jnp.float32)
    lengths = jnp.array([T, T - 2])
    mask = (jnp.arange(T)[None, None, :] < lengths[:, None, None]).astype(jnp.float32)

    ref = rel_position_mha_ref(params, query, key_t, value, mask, pos_emb)

    out_f32 = jax.block_until_ready(
        rel_position_mha(params, query, key_t, value, mask, pos_emb,
                         compute_dtype=jnp.float32))
    assert out_f32.shape == ref.shape
    if not jnp.allclose(out_f32, ref, atol=1e-2, rtol=1e-2):
        raise AssertionError("f32 Pallas kernel output does not match JAX reference")

    out_bf16 = jax.block_until_ready(
        rel_position_mha(params, query, key_t, value, mask, pos_emb,
                         compute_dtype=jnp.bfloat16))
    if not jnp.allclose(out_bf16, ref, atol=1e-1, rtol=1e-1):
        raise AssertionError("bf16 Pallas kernel output does not match JAX reference")

    # ---- config 2: T1 < T2 (T1 not a multiple of 8), (B, T1, T2) mask with a
    #      fully-masked row; exercises query/key padding paths ------------------
    B2, H2, D2, T1b, T2b = 2, 2, 16, 5, 8
    k2 = jax.random.split(root, 6)
    params2 = init_params(k2[0], H2, D2)
    q2 = jax.random.normal(k2[1], (B2, T1b, D2), jnp.float32)
    key2 = jax.random.normal(k2[2], (B2, T2b, D2), jnp.float32)
    val2 = jax.random.normal(k2[3], (B2, T2b, D2), jnp.float32)
    pos2 = jax.random.normal(k2[4], (1, 2 * T2b - 1, D2), jnp.float32)
    mask2 = (jax.random.uniform(k2[5], (B2, T1b, T2b)) > 0.3).astype(jnp.float32)
    mask2 = mask2.at[:, :, 0].set(1.0)          # ensure most rows have a valid key
    mask2 = mask2.at[1, 0, :].set(0.0)          # one fully-masked query row

    ref2 = rel_position_mha_ref(params2, q2, key2, val2, mask2, pos2)
    out2 = jax.block_until_ready(
        rel_position_mha(params2, q2, key2, val2, mask2, pos2,
                         compute_dtype=jnp.float32))
    if not jnp.allclose(out2, ref2, atol=1e-2, rtol=1e-2):
        raise AssertionError("T1<T2 / padded path does not match JAX reference")

    # ---- config 3: forced multi-head-block path (G > 1): cross-block
    #      accumulation + lane-aligned dynamic weight slicing, mask=None --------
    B3, H3, dk3, T3 = 1, 4, 64, 8
    D3 = H3 * dk3
    k3 = jax.random.split(jax.random.PRNGKey(1), 5)
    params3 = init_params(k3[0], H3, D3)
    q3 = jax.random.normal(k3[1], (B3, T3, D3), jnp.float32)
    key3 = jax.random.normal(k3[2], (B3, T3, D3), jnp.float32)
    val3 = jax.random.normal(k3[3], (B3, T3, D3), jnp.float32)
    pos3 = jax.random.normal(k3[4], (1, 2 * T3 - 1, D3), jnp.float32)

    ref3 = rel_position_mha_ref(params3, q3, key3, val3, None, pos3)
    out3 = jax.block_until_ready(
        rel_position_mha(params3, q3, key3, val3, None, pos3,
                         compute_dtype=jnp.float32, heads_per_block=2))
    if not jnp.allclose(out3, ref3, atol=1e-2, rtol=1e-2):
        raise AssertionError("multi-head-block path does not match JAX reference")

    print("KERNEL_OK")
</pallas_src>

<mosaic_0001>
module attributes {stable_mosaic.version = 11 : i64} {
  func.func @_rel_mha_kernel(%arg0: i32, %arg1: i32, %arg2: memref<1x8x32xf32, #tpu.memory_space<vmem>>, %arg3: memref<1x128x32xf32, #tpu.memory_space<vmem>>, %arg4: memref<1x128x32xf32, #tpu.memory_space<vmem>>, %arg5: memref<1x32x256xf32, #tpu.memory_space<vmem>>, %arg6: memref<1x1x128xf32, #tpu.memory_space<vmem>>, %arg7: memref<1x1x128xf32, #tpu.memory_space<vmem>>, %arg8: memref<32x32xf32, #tpu.memory_space<vmem>>, %arg9: memref<1x32xf32, #tpu.memory_space<vmem>>, %arg10: memref<32x32xf32, #tpu.memory_space<vmem>>, %arg11: memref<1x32xf32, #tpu.memory_space<vmem>>, %arg12: memref<32x32xf32, #tpu.memory_space<vmem>>, %arg13: memref<1x32xf32, #tpu.memory_space<vmem>>, %arg14: memref<32x32xf32, #tpu.memory_space<vmem>>, %arg15: memref<1x32xf32, #tpu.memory_space<vmem>>, %arg16: memref<1x32xf32, #tpu.memory_space<vmem>>, %arg17: memref<1x32xf32, #tpu.memory_space<vmem>>, %arg18: memref<1x8x32xf32, #tpu.memory_space<vmem>>, %arg19: memref<8x32xf32, #tpu.memory_space<vmem>>) attributes {dimension_semantics = [#tpu.dimension_semantics<parallel>, #tpu.dimension_semantics<arbitrary>], iteration_bounds = array<i64: 2, 1>, scalar_prefetch = 0 : i64, scratch_operands = 1 : i64, tpu.core_type = #tpu.core_type<tc>, window_params = [{transform_indices = @transform_0, window_bounds = array<i64: 1, 8, 32>}, {transform_indices = @transform_1, window_bounds = array<i64: 1, 128, 32>}, {transform_indices = @transform_2, window_bounds = array<i64: 1, 128, 32>}, {pipeline_mode = #tpu.pipeline_mode<synchronous>, transform_indices = @transform_3, window_bounds = array<i64: 1, 32, 256>}, {transform_indices = @transform_4, window_bounds = array<i64: 1, 1, 128>}, {transform_indices = @transform_5, window_bounds = array<i64: 1, 1, 128>}, {pipeline_mode = #tpu.pipeline_mode<synchronous>, transform_indices = @transform_6, window_bounds = array<i64: 32, 32>}, {pipeline_mode = #tpu.pipeline_mode<synchronous>, transform_indices = @transform_7, window_bounds = array<i64: 1, 32>}, {pipeline_mode = #tpu.pipeline_mode<synchronous>, transform_indices = @transform_8, window_bounds = array<i64: 32, 32>}, {pipeline_mode = #tpu.pipeline_mode<synchronous>, transform_indices = @transform_9, window_bounds = array<i64: 1, 32>}, {pipeline_mode = #tpu.pipeline_mode<synchronous>, transform_indices = @transform_10, window_bounds = array<i64: 32, 32>}, {pipeline_mode = #tpu.pipeline_mode<synchronous>, transform_indices = @transform_11, window_bounds = array<i64: 1, 32>}, {pipeline_mode = #tpu.pipeline_mode<synchronous>, transform_indices = @transform_12, window_bounds = array<i64: 32, 32>}, {pipeline_mode = #tpu.pipeline_mode<synchronous>, transform_indices = @transform_13, window_bounds = array<i64: 1, 32>}, {pipeline_mode = #tpu.pipeline_mode<synchronous>, transform_indices = @transform_14, window_bounds = array<i64: 1, 32>}, {pipeline_mode = #tpu.pipeline_mode<synchronous>, transform_indices = @transform_15, window_bounds = array<i64: 1, 32>}, {transform_indices = @transform_16, window_bounds = array<i64: 1, 8, 32>}]} {
    %c0 = arith.constant 0 : index
    %c0_0 = arith.constant 0 : index
    %0 = vector.load %arg14[%c0, %c0_0] : memref<32x32xf32, #tpu.memory_space<vmem>>, vector<32x32xf32>
    %c0_1 = arith.constant 0 : index
    %c0_2 = arith.constant 0 : index
    %1 = vector.load %arg8[%c0_1, %c0_2] : memref<32x32xf32, #tpu.memory_space<vmem>>, vector<32x32xf32>
    %c0_3 = arith.constant 0 : index
    %c0_4 = arith.constant 0 : index
    %2 = vector.load %arg10[%c0_3, %c0_4] : memref<32x32xf32, #tpu.memory_space<vmem>>, vector<32x32xf32>
    %c0_5 = arith.constant 0 : index
    %c0_6 = arith.constant 0 : index
    %3 = vector.load %arg12[%c0_5, %c0_6] : memref<32x32xf32, #tpu.memory_space<vmem>>, vector<32x32xf32>
    %c0_7 = arith.constant 0 : index
    %c0_8 = arith.constant 0 : index
    %4 = vector.load %arg9[%c0_7, %c0_8] : memref<1x32xf32, #tpu.memory_space<vmem>>, vector<1x32xf32>
    %c0_9 = arith.constant 0 : index
    %c0_10 = arith.constant 0 : index
    %5 = vector.load %arg11[%c0_9, %c0_10] : memref<1x32xf32, #tpu.memory_space<vmem>>, vector<1x32xf32>
    %c0_11 = arith.constant 0 : index
    %c0_12 = arith.constant 0 : index
    %6 = vector.load %arg13[%c0_11, %c0_12] : memref<1x32xf32, #tpu.memory_space<vmem>>, vector<1x32xf32>
    %c0_13 = arith.constant 0 : index
    %c0_14 = arith.constant 0 : index
    %7 = vector.load %arg16[%c0_13, %c0_14] : memref<1x32xf32, #tpu.memory_space<vmem>>, vector<1x32xf32>
    %c0_15 = arith.constant 0 : index
    %c0_16 = arith.constant 0 : index
    %8 = vector.load %arg17[%c0_15, %c0_16] : memref<1x32xf32, #tpu.memory_space<vmem>>, vector<1x32xf32>
    %c0_17 = arith.constant 0 : index
    %c0_18 = arith.constant 0 : index
    %c0_19 = arith.constant 0 : index
    %9 = vector.load %arg2[%c0_17, %c0_18, %c0_19] : memref<1x8x32xf32, #tpu.memory_space<vmem>>, vector<1x8x32xf32>
    %10 = vector.shape_cast %9 : vector<1x8x32xf32> to vector<8x32xf32>
    %cst = arith.constant dense<0.000000e+00> : vector<8x32xf32>
    %11 = tpu.matmul %10, %1, %cst {dimension_numbers = #tpu.dot_dimension_numbers<[1], [0], [0], [1], [0, 0, 1, 1], [], []>} : vector<8x32xf32>, vector<32x32xf32>, vector<8x32xf32> -> vector<8x32xf32>
    %12 = vector.broadcast %4 : vector<1x32xf32> to vector<8x32xf32>
    %13 = arith.addf %11, %12 : vector<8x32xf32>
    %c0_20 = arith.constant 0 : index
    %c0_21 = arith.constant 0 : index
    %c0_22 = arith.constant 0 : index
    %14 = vector.load %arg3[%c0_20, %c0_21, %c0_22] : memref<1x128x32xf32, #tpu.memory_space<vmem>>, vector<1x128x32xf32>
    %15 = vector.shape_cast %14 : vector<1x128x32xf32> to vector<128x32xf32>
    %cst_23 = arith.constant dense<0.000000e+00> : vector<128x32xf32>
    %16 = tpu.matmul %15, %2, %cst_23 {dimension_numbers = #tpu.dot_dimension_numbers<[1], [0], [0], [1], [0, 0, 1, 1], [], []>} : vector<128x32xf32>, vector<32x32xf32>, vector<128x32xf32> -> vector<128x32xf32>
    %17 = vector.broadcast %5 : vector<1x32xf32> to vector<128x32xf32>
    %18 = arith.addf %16, %17 : vector<128x32xf32>
    %c0_24 = arith.constant 0 : index
    %c0_25 = arith.constant 0 : index
    %c0_26 = arith.constant 0 : index
    %19 = vector.load %arg4[%c0_24, %c0_25, %c0_26] : memref<1x128x32xf32, #tpu.memory_space<vmem>>, vector<1x128x32xf32>
    %20 = vector.shape_cast %19 : vector<1x128x32xf32> to vector<128x32xf32>
    %cst_27 = arith.constant dense<0.000000e+00> : vector<128x32xf32>
    %21 = tpu.matmul %20, %3, %cst_27 {dimension_numbers = #tpu.dot_dimension_numbers<[1], [0], [0], [1], [0, 0, 1, 1], [], []>} : vector<128x32xf32>, vector<32x32xf32>, vector<128x32xf32> -> vector<128x32xf32>
    %22 = vector.broadcast %6 : vector<1x32xf32> to vector<128x32xf32>
    %23 = arith.addf %21, %22 : vector<128x32xf32>
    %24 = vector.broadcast %7 : vector<1x32xf32> to vector<8x32xf32>
    %25 = arith.addf %13, %24 : vector<8x32xf32>
    %cst_28 = arith.constant 0.353553385 : f32
    %26 = vector.broadcast %cst_28 : f32 to vector<8x32xf32>
    %27 = arith.mulf %25, %26 : vector<8x32xf32>
    %28 = vector.broadcast %8 : vector<1x32xf32> to vector<8x32xf32>
    %29 = arith.addf %13, %28 : vector<8x32xf32>
    %cst_29 = arith.constant 0.353553385 : f32
    %30 = vector.broadcast %cst_29 : f32 to vector<8x32xf32>
    %31 = arith.mulf %29, %30 : vector<8x32xf32>
    %c0_30 = arith.constant 0 : index
    %c0_31 = arith.constant 0 : index
    %c0_32 = arith.constant 0 : index
    %32 = vector.load %arg6[%c0_30, %c0_31, %c0_32] : memref<1x1x128xf32, #tpu.memory_space<vmem>>, vector<1x1x128xf32>
    %33 = vector.shape_cast %32 : vector<1x1x128xf32> to vector<1x128xf32>
    %c0_33 = arith.constant 0 : index
    %c0_34 = arith.constant 0 : index
    %c0_35 = arith.constant 0 : index
    %34 = vector.load %arg7[%c0_33, %c0_34, %c0_35] : memref<1x1x128xf32, #tpu.memory_space<vmem>>, vector<1x1x128xf32>
    %35 = vector.shape_cast %34 : vector<1x1x128xf32> to vector<1x128xf32>
    %36 = vector.extract_strided_slice %27 {offsets = [0, 0], sizes = [8, 8], strides = [1, 1]} : vector<8x32xf32> to vector<8x8xf32>
    %37 = vector.extract_strided_slice %31 {offsets = [0, 0], sizes = [8, 8], strides = [1, 1]} : vector<8x32xf32> to vector<8x8xf32>
    %38 = vector.extract_strided_slice %18 {offsets = [0, 0], sizes = [128, 8], strides = [1, 1]} : vector<128x32xf32> to vector<128x8xf32>
    %39 = vector.extract_strided_slice %23 {offsets = [0, 0], sizes = [128, 8], strides = [1, 1]} : vector<128x32xf32> to vector<128x8xf32>
    %c0_i32 = arith.constant 0 : i32
    %c0_i32_36 = arith.constant 0 : i32
    %c0_i32_37 = arith.constant 0 : i32
    %40 = tpu.memref_slice %arg5[%c0_i32, %c0_i32_36, %c0_i32_37] : memref<1x32x256xf32, #tpu.memory_space<vmem>> -> memref<1x32x256xf32, #tpu.memory_space<vmem>>
    %41 = tpu.memref_squeeze %40 : memref<1x32x256xf32, #tpu.memory_space<vmem>> -> memref<32x256xf32, #tpu.memory_space<vmem>>
    %c0_38 = arith.constant 0 : index
    %c0_39 = arith.constant 0 : index
    %42 = vector.load %41[%c0_38, %c0_39] : memref<32x256xf32, #tpu.memory_space<vmem>>, vector<8x256xf32>
    %cst_40 = arith.constant dense<0.000000e+00> : vector<8x128xf32>
    %43 = tpu.matmul %36, %38, %cst_40 {dimension_numbers = #tpu.dot_dimension_numbers<[1], [1], [0], [0], [0, 0, 1, 0], [], []>} : vector<8x8xf32>, vector<128x8xf32>, vector<8x128xf32> -> vector<8x128xf32>
    %cst_41 = arith.constant dense<0.000000e+00> : vector<8x256xf32>
    %44 = tpu.matmul %37, %42, %cst_41 {dimension_numbers = #tpu.dot_dimension_numbers<[1], [0], [0], [1], [0, 0, 1, 1], [], []>} : vector<8x8xf32>, vector<8x256xf32>, vector<8x256xf32> -> vector<8x256xf32>
    %c249_i32 = arith.constant 249 : i32
    %45 = tpu.dynamic_rotate %44 by %c249_i32 dim 1 {stride = 1 : si32, stride_dimension = 0 : si32} : vector<8x256xf32>, i32 -> vector<8x256xf32>
    %46 = vector.extract_strided_slice %45 {offsets = [0, 0], sizes = [8, 128], strides = [1, 1]} : vector<8x256xf32> to vector<8x128xf32>
    %47 = arith.addf %43, %46 : vector<8x128xf32>
    %48 = vector.broadcast %33 : vector<1x128xf32> to vector<8x128xf32>
    %49 = arith.addf %47, %48 : vector<8x128xf32>
    %cst_42 = arith.constant dense<0xFF800000> : vector<8xf32>
    %50 = vector.multi_reduction <maximumf>, %49, %cst_42 [1] : vector<8x128xf32> to vector<8xf32>
    %51 = vector.shape_cast %50 : vector<8xf32> to vector<8x1xf32>
    %52 = vector.broadcast %51 : vector<8x1xf32> to vector<8x128xf32>
    %53 = arith.subf %49, %52 : vector<8x128xf32>
    %54 = math.exp %53 : vector<8x128xf32>
    %cst_43 = arith.constant dense<0.000000e+00> : vector<8xf32>
    %55 = vector.multi_reduction <add>, %54, %cst_43 [1] : vector<8x128xf32> to vector<8xf32>
    %56 = vector.shape_cast %55 : vector<8xf32> to vector<8x1xf32>
    %57 = vector.broadcast %56 : vector<8x1xf32> to vector<8x128xf32>
    %58 = arith.divf %54, %57 : vector<8x128xf32>
    %59 = vector.broadcast %35 : vector<1x128xf32> to vector<8x128xf32>
    %60 = arith.mulf %58, %59 : vector<8x128xf32>
    %cst_44 = arith.constant dense<0.000000e+00> : vector<8x8xf32>
    %61 = tpu.matmul %60, %39, %cst_44 {dimension_numbers = #tpu.dot_dimension_numbers<[1], [0], [0], [1], [0, 0, 1, 1], [], []>} : vector<8x128xf32>, vector<128x8xf32>, vector<8x8xf32> -> vector<8x8xf32>
    %62 = vector.extract_strided_slice %27 {offsets = [0, 8], sizes = [8, 8], strides = [1, 1]} : vector<8x32xf32> to vector<8x8xf32>
    %63 = vector.extract_strided_slice %31 {offsets = [0, 8], sizes = [8, 8], strides = [1, 1]} : vector<8x32xf32> to vector<8x8xf32>
    %64 = vector.extract_strided_slice %18 {offsets = [0, 8], sizes = [128, 8], strides = [1, 1]} : vector<128x32xf32> to vector<128x8xf32>
    %65 = vector.extract_strided_slice %23 {offsets = [0, 8], sizes = [128, 8], strides = [1, 1]} : vector<128x32xf32> to vector<128x8xf32>
    %c0_i32_45 = arith.constant 0 : i32
    %c0_i32_46 = arith.constant 0 : i32
    %c0_i32_47 = arith.constant 0 : i32
    %66 = tpu.memref_slice %arg5[%c0_i32_45, %c0_i32_46, %c0_i32_47] : memref<1x32x256xf32, #tpu.memory_space<vmem>> -> memref<1x32x256xf32, #tpu.memory_space<vmem>>
    %67 = tpu.memref_squeeze %66 : memref<1x32x256xf32, #tpu.memory_space<vmem>> -> memref<32x256xf32, #tpu.memory_space<vmem>>
    %c8 = arith.constant 8 : index
    %c0_48 = arith.constant 0 : index
    %68 = vector.load %67[%c8, %c0_48] : memref<32x256xf32, #tpu.memory_space<vmem>>, vector<8x256xf32>
    %cst_49 = arith.constant dense<0.000000e+00> : vector<8x128xf32>
    %69 = tpu.matmul %62, %64, %cst_49 {dimension_numbers = #tpu.dot_dimension_numbers<[1], [1], [0], [0], [0, 0, 1, 0], [], []>} : vector<8x8xf32>, vector<128x8xf32>, vector<8x128xf32> -> vector<8x128xf32>
    %cst_50 = arith.constant dense<0.000000e+00> : vector<8x256xf32>
    %70 = tpu.matmul %63, %68, %cst_50 {dimension_numbers = #tpu.dot_dimension_numbers<[1], [0], [0], [1], [0, 0, 1, 1], [], []>} : vector<8x8xf32>, vector<8x256xf32>, vector<8x256xf32> -> vector<8x256xf32>
    %c249_i32_51 = arith.constant 249 : i32
    %71 = tpu.dynamic_rotate %70 by %c249_i32_51 dim 1 {stride = 1 : si32, stride_dimension = 0 : si32} : vector<8x256xf32>, i32 -> vector<8x256xf32>
    %72 = vector.extract_strided_slice %71 {offsets = [0, 0], sizes = [8, 128], strides = [1, 1]} : vector<8x256xf32> to vector<8x128xf32>
    %73 = arith.addf %69, %72 : vector<8x128xf32>
    %74 = vector.broadcast %33 : vector<1x128xf32> to vector<8x128xf32>
    %75 = arith.addf %73, %74 : vector<8x128xf32>
    %cst_52 = arith.constant dense<0xFF800000> : vector<8xf32>
    %76 = vector.multi_reduction <maximumf>, %75, %cst_52 [1] : vector<8x128xf32> to vector<8xf32>
    %77 = vector.shape_cast %76 : vector<8xf32> to vector<8x1xf32>
    %78 = vector.broadcast %77 : vector<8x1xf32> to vector<8x128xf32>
    %79 = arith.subf %75, %78 : vector<8x128xf32>
    %80 = math.exp %79 : vector<8x128xf32>
    %cst_53 = arith.constant dense<0.000000e+00> : vector<8xf32>
    %81 = vector.multi_reduction <add>, %80, %cst_53 [1] : vector<8x128xf32> to vector<8xf32>
    %82 = vector.shape_cast %81 : vector<8xf32> to vector<8x1xf32>
    %83 = vector.broadcast %82 : vector<8x1xf32> to vector<8x128xf32>
    %84 = arith.divf %80, %83 : vector<8x128xf32>
    %85 = vector.broadcast %35 : vector<1x128xf32> to vector<8x128xf32>
    %86 = arith.mulf %84, %85 : vector<8x128xf32>
    %cst_54 = arith.constant dense<0.000000e+00> : vector<8x8xf32>
    %87 = tpu.matmul %86, %65, %cst_54 {dimension_numbers = #tpu.dot_dimension_numbers<[1], [0], [0], [1], [0, 0, 1, 1], [], []>} : vector<8x128xf32>, vector<128x8xf32>, vector<8x8xf32> -> vector<8x8xf32>
    %88 = vector.extract_strided_slice %27 {offsets = [0, 16], sizes = [8, 8], strides = [1, 1]} : vector<8x32xf32> to vector<8x8xf32>
    %89 = vector.extract_strided_slice %31 {offsets = [0, 16], sizes = [8, 8], strides = [1, 1]} : vector<8x32xf32> to vector<8x8xf32>
    %90 = vector.extract_strided_slice %18 {offsets = [0, 16], sizes = [128, 8], strides = [1, 1]} : vector<128x32xf32> to vector<128x8xf32>
    %91 = vector.extract_strided_slice %23 {offsets = [0, 16], sizes = [128, 8], strides = [1, 1]} : vector<128x32xf32> to vector<128x8xf32>
    %c0_i32_55 = arith.constant 0 : i32
    %c0_i32_56 = arith.constant 0 : i32
    %c0_i32_57 = arith.constant 0 : i32
    %92 = tpu.memref_slice %arg5[%c0_i32_55, %c0_i32_56, %c0_i32_57] : memref<1x32x256xf32, #tpu.memory_space<vmem>> -> memref<1x32x256xf32, #tpu.memory_space<vmem>>
    %93 = tpu.memref_squeeze %92 : memref<1x32x256xf32, #tpu.memory_space<vmem>> -> memref<32x256xf32, #tpu.memory_space<vmem>>
    %c16 = arith.constant 16 : index
    %c0_58 = arith.constant 0 : index
    %94 = vector.load %93[%c16, %c0_58] : memref<32x256xf32, #tpu.memory_space<vmem>>, vector<8x256xf32>
    %cst_59 = arith.constant dense<0.000000e+00> : vector<8x128xf32>
    %95 = tpu.matmul %88, %90, %cst_59 {dimension_numbers = #tpu.dot_dimension_numbers<[1], [1], [0], [0], [0, 0, 1, 0], [], []>} : vector<8x8xf32>, vector<128x8xf32>, vector<8x128xf32> -> vector<8x128xf32>
    %cst_60 = arith.constant dense<0.000000e+00> : vector<8x256xf32>
    %96 = tpu.matmul %89, %94, %cst_60 {dimension_numbers = #tpu.dot_dimension_numbers<[1], [0], [0], [1], [0, 0, 1, 1], [], []>} : vector<8x8xf32>, vector<8x256xf32>, vector<8x256xf32> -> vector<8x256xf32>
    %c249_i32_61 = arith.constant 249 : i32
    %97 = tpu.dynamic_rotate %96 by %c249_i32_61 dim 1 {stride = 1 : si32, stride_dimension = 0 : si32} : vector<8x256xf32>, i32 -> vector<8x256xf32>
    %98 = vector.extract_strided_slice %97 {offsets = [0, 0], sizes = [8, 128], strides = [1, 1]} : vector<8x256xf32> to vector<8x128xf32>
    %99 = arith.addf %95, %98 : vector<8x128xf32>
    %100 = vector.broadcast %33 : vector<1x128xf32> to vector<8x128xf32>
    %101 = arith.addf %99, %100 : vector<8x128xf32>
    %cst_62 = arith.constant dense<0xFF800000> : vector<8xf32>
    %102 = vector.multi_reduction <maximumf>, %101, %cst_62 [1] : vector<8x128xf32> to vector<8xf32>
    %103 = vector.shape_cast %102 : vector<8xf32> to vector<8x1xf32>
    %104 = vector.broadcast %103 : vector<8x1xf32> to vector<8x128xf32>
    %105 = arith.subf %101, %104 : vector<8x128xf32>
    %106 = math.exp %105 : vector<8x128xf32>
    %cst_63 = arith.constant dense<0.000000e+00> : vector<8xf32>
    %107 = vector.multi_reduction <add>, %106, %cst_63 [1] : vector<8x128xf32> to vector<8xf32>
    %108 = vector.shape_cast %107 : vector<8xf32> to vector<8x1xf32>
    %109 = vector.broadcast %108 : vector<8x1xf32> to vector<8x128xf32>
    %110 = arith.divf %106, %109 : vector<8x128xf32>
    %111 = vector.broadcast %35 : vector<1x128xf32> to vector<8x128xf32>
    %112 = arith.mulf %110, %111 : vector<8x128xf32>
    %cst_64 = arith.constant dense<0.000000e+00> : vector<8x8xf32>
    %113 = tpu.matmul %112, %91, %cst_64 {dimension_numbers = #tpu.dot_dimension_numbers<[1], [0], [0], [1], [0, 0, 1, 1], [], []>} : vector<8x128xf32>, vector<128x8xf32>, vector<8x8xf32> -> vector<8x8xf32>
    %114 = vector.extract_strided_slice %27 {offsets = [0, 24], sizes = [8, 8], strides = [1, 1]} : vector<8x32xf32> to vector<8x8xf32>
    %115 = vector.extract_strided_slice %31 {offsets = [0, 24], sizes = [8, 8], strides = [1, 1]} : vector<8x32xf32> to vector<8x8xf32>
    %116 = vector.extract_strided_slice %18 {offsets = [0, 24], sizes = [128, 8], strides = [1, 1]} : vector<128x32xf32> to vector<128x8xf32>
    %117 = vector.extract_strided_slice %23 {offsets = [0, 24], sizes = [128, 8], strides = [1, 1]} : vector<128x32xf32> to vector<128x8xf32>
    %c0_i32_65 = arith.constant 0 : i32
    %c0_i32_66 = arith.constant 0 : i32
    %c0_i32_67 = arith.constant 0 : i32
    %118 = tpu.memref_slice %arg5[%c0_i32_65, %c0_i32_66, %c0_i32_67] : memref<1x32x256xf32, #tpu.memory_space<vmem>> -> memref<1x32x256xf32, #tpu.memory_space<vmem>>
    %119 = tpu.memref_squeeze %118 : memref<1x32x256xf32, #tpu.memory_space<vmem>> -> memref<32x256xf32, #tpu.memory_space<vmem>>
    %c24 = arith.constant 24 : index
    %c0_68 = arith.constant 0 : index
    %120 = vector.load %119[%c24, %c0_68] : memref<32x256xf32, #tpu.memory_space<vmem>>, vector<8x256xf32>
    %cst_69 = arith.constant dense<0.000000e+00> : vector<8x128xf32>
    %121 = tpu.matmul %114, %116, %cst_69 {dimension_numbers = #tpu.dot_dimension_numbers<[1], [1], [0], [0], [0, 0, 1, 0], [], []>} : vector<8x8xf32>, vector<128x8xf32>, vector<8x128xf32> -> vector<8x128xf32>
    %cst_70 = arith.constant dense<0.000000e+00> : vector<8x256xf32>
    %122 = tpu.matmul %115, %120, %cst_70 {dimension_numbers = #tpu.dot_dimension_numbers<[1], [0], [0], [1], [0, 0, 1, 1], [], []>} : vector<8x8xf32>, vector<8x256xf32>, vector<8x256xf32> -> vector<8x256xf32>
    %c249_i32_71 = arith.constant 249 : i32
    %123 = tpu.dynamic_rotate %122 by %c249_i32_71 dim 1 {stride = 1 : si32, stride_dimension = 0 : si32} : vector<8x256xf32>, i32 -> vector<8x256xf32>
    %124 = vector.extract_strided_slice %123 {offsets = [0, 0], sizes = [8, 128], strides = [1, 1]} : vector<8x256xf32> to vector<8x128xf32>
    %125 = arith.addf %121, %124 : vector<8x128xf32>
    %126 = vector.broadcast %33 : vector<1x128xf32> to vector<8x128xf32>
    %127 = arith.addf %125, %126 : vector<8x128xf32>
    %cst_72 = arith.constant dense<0xFF800000> : vector<8xf32>
    %128 = vector.multi_reduction <maximumf>, %127, %cst_72 [1] : vector<8x128xf32> to vector<8xf32>
    %129 = vector.shape_cast %128 : vector<8xf32> to vector<8x1xf32>
    %130 = vector.broadcast %129 : vector<8x1xf32> to vector<8x128xf32>
    %131 = arith.subf %127, %130 : vector<8x128xf32>
    %132 = math.exp %131 : vector<8x128xf32>
    %cst_73 = arith.constant dense<0.000000e+00> : vector<8xf32>
    %133 = vector.multi_reduction <add>, %132, %cst_73 [1] : vector<8x128xf32> to vector<8xf32>
    %134 = vector.shape_cast %133 : vector<8xf32> to vector<8x1xf32>
    %135 = vector.broadcast %134 : vector<8x1xf32> to vector<8x128xf32>
    %136 = arith.divf %132, %135 : vector<8x128xf32>
    %137 = vector.broadcast %35 : vector<1x128xf32> to vector<8x128xf32>
    %138 = arith.mulf %136, %137 : vector<8x128xf32>
    %cst_74 = arith.constant dense<0.000000e+00> : vector<8x8xf32>
    %139 = tpu.matmul %138, %117, %cst_74 {dimension_numbers = #tpu.dot_dimension_numbers<[1], [0], [0], [1], [0, 0, 1, 1], [], []>} : vector<8x128xf32>, vector<128x8xf32>, vector<8x8xf32> -> vector<8x8xf32>
    %140 = tpu.concatenate %61, %87, %113, %139 in 1 : vector<8x8xf32>, vector<8x8xf32>, vector<8x8xf32>, vector<8x8xf32> -> vector<8x32xf32>
    %cst_75 = arith.constant dense<0.000000e+00> : vector<8x32xf32>
    %141 = tpu.matmul %140, %0, %cst_75 {dimension_numbers = #tpu.dot_dimension_numbers<[1], [0], [0], [1], [0, 0, 1, 1], [], []>} : vector<8x32xf32>, vector<32x32xf32>, vector<8x32xf32> -> vector<8x32xf32>
    %c0_76 = arith.constant 0 : index
    %c0_77 = arith.constant 0 : index
    %142 = vector.load %arg15[%c0_76, %c0_77] : memref<1x32xf32, #tpu.memory_space<vmem>>, vector<1x32xf32>
    %143 = vector.broadcast %142 : vector<1x32xf32> to vector<8x32xf32>
    %144 = arith.addf %141, %143 : vector<8x32xf32>
    %c0_78 = arith.constant 0 : index
    %c0_79 = arith.constant 0 : index
    %c0_80 = arith.constant 0 : index
    %145 = vector.load %arg18[%c0_78, %c0_79, %c0_80] : memref<1x8x32xf32, #tpu.memory_space<vmem>>, vector<1x8x32xf32>
    %146 = vector.shape_cast %145 : vector<1x8x32xf32> to vector<8x32xf32>
    %147 = vector.shape_cast %144 : vector<8x32xf32> to vector<1x8x32xf32>
    tpu.vector_store %arg18[%c0_78, %c0_79, %c0_80], %147 {strides = array<i32>} : memref<1x8x32xf32, #tpu.memory_space<vmem>>, vector<1x8x32xf32>,
    return
  }
  func.func @transform_0(%arg0: i32, %arg1: i32) -> (i32, i32, i32) {
    %c0_i32 = arith.constant 0 : i32
    %c0_i32_0 = arith.constant 0 : i32
    %c0_i32_1 = arith.constant 0 : i32
    return %arg0, %c0_i32, %c0_i32_0 : i32, i32, i32
  }
  func.func @transform_1(%arg0: i32, %arg1: i32) -> (i32, i32, i32) {
    %c0_i32 = arith.constant 0 : i32
    %c0_i32_0 = arith.constant 0 : i32
    %c0_i32_1 = arith.constant 0 : i32
    return %arg0, %c0_i32, %c0_i32_0 : i32, i32, i32
  }
  func.func @transform_2(%arg0: i32, %arg1: i32) -> (i32, i32, i32) {
    %c0_i32 = arith.constant 0 : i32
    %c0_i32_0 = arith.constant 0 : i32
    %c0_i32_1 = arith.constant 0 : i32
    return %arg0, %c0_i32, %c0_i32_0 : i32, i32, i32
  }
  func.func @transform_3(%arg0: i32, %arg1: i32) -> (i32, i32, i32) {
    %c0_i32 = arith.constant 0 : i32
    %c0_i32_0 = arith.constant 0 : i32
    %c0_i32_1 = arith.constant 0 : i32
    %c0_i32_2 = arith.constant 0 : i32
    return %c0_i32, %c0_i32_0, %c0_i32_1 : i32, i32, i32
  }
  func.func @transform_4(%arg0: i32, %arg1: i32) -> (i32, i32, i32) {
    %c0_i32 = arith.constant 0 : i32
    %c0_i32_0 = arith.constant 0 : i32
    %c0_i32_1 = arith.constant 0 : i32
    return %arg0, %c0_i32, %c0_i32_0 : i32, i32, i32
  }
  func.func @transform_5(%arg0: i32, %arg1: i32) -> (i32, i32, i32) {
    %c0_i32 = arith.constant 0 : i32
    %c0_i32_0 = arith.constant 0 : i32
    %c0_i32_1 = arith.constant 0 : i32
    return %arg0, %c0_i32, %c0_i32_0 : i32, i32, i32
  }
  func.func @transform_6(%arg0: i32, %arg1: i32) -> (i32, i32) {
    %c0_i32 = arith.constant 0 : i32
    %c0_i32_0 = arith.constant 0 : i32
    %c0_i32_1 = arith.constant 0 : i32
    return %c0_i32, %c0_i32_0 : i32, i32
  }
  func.func @transform_7(%arg0: i32, %arg1: i32) -> (i32, i32) {
    %c0_i32 = arith.constant 0 : i32
    %c0_i32_0 = arith.constant 0 : i32
    %c0_i32_1 = arith.constant 0 : i32
    return %c0_i32, %c0_i32_0 : i32, i32
  }
  func.func @transform_8(%arg0: i32, %arg1: i32) -> (i32, i32) {
    %c0_i32 = arith.constant 0 : i32
    %c0_i32_0 = arith.constant 0 : i32
    %c0_i32_1 = arith.constant 0 : i32
    return %c0_i32, %c0_i32_0 : i32, i32
  }
  func.func @transform_9(%arg0: i32, %arg1: i32) -> (i32, i32) {
    %c0_i32 = arith.constant 0 : i32
    %c0_i32_0 = arith.constant 0 : i32
    %c0_i32_1 = arith.constant 0 : i32
    return %c0_i32, %c0_i32_0 : i32, i32
  }
  func.func @transform_10(%arg0: i32, %arg1: i32) -> (i32, i32) {
    %c0_i32 = arith.constant 0 : i32
    %c0_i32_0 = arith.constant 0 : i32
    %c0_i32_1 = arith.constant 0 : i32
    return %c0_i32, %c0_i32_0 : i32, i32
  }
  func.func @transform_11(%arg0: i32, %arg1: i32) -> (i32, i32) {
    %c0_i32 = arith.constant 0 : i32
    %c0_i32_0 = arith.constant 0 : i32
    %c0_i32_1 = arith.constant 0 : i32
    return %c0_i32, %c0_i32_0 : i32, i32
  }
  func.func @transform_12(%arg0: i32, %arg1: i32) -> (i32, i32) {
    %c0_i32 = arith.constant 0 : i32
    %c0_i32_0 = arith.constant 0 : i32
    %c0_i32_1 = arith.constant 0 : i32
    return %c0_i32, %c0_i32_0 : i32, i32
  }
  func.func @transform_13(%arg0: i32, %arg1: i32) -> (i32, i32) {
    %c0_i32 = arith.constant 0 : i32
    %c0_i32_0 = arith.constant 0 : i32
    %c0_i32_1 = arith.constant 0 : i32
    return %c0_i32, %c0_i32_0 : i32, i32
  }
  func.func @transform_14(%arg0: i32, %arg1: i32) -> (i32, i32) {
    %c0_i32 = arith.constant 0 : i32
    %c0_i32_0 = arith.constant 0 : i32
    %c0_i32_1 = arith.constant 0 : i32
    return %c0_i32, %c0_i32_0 : i32, i32
  }
  func.func @transform_15(%arg0: i32, %arg1: i32) -> (i32, i32) {
    %c0_i32 = arith.constant 0 : i32
    %c0_i32_0 = arith.constant 0 : i32
    %c0_i32_1 = arith.constant 0 : i32
    return %c0_i32, %c0_i32_0 : i32, i32
  }
  func.func @transform_16(%arg0: i32, %arg1: i32) -> (i32, i32, i32) {
    %c0_i32 = arith.constant 0 : i32
    %c0_i32_0 = arith.constant 0 : i32
    %c0_i32_1 = arith.constant 0 : i32
    return %arg0, %c0_i32, %c0_i32_0 : i32, i32, i32
  }
}

</mosaic_0001>

<llo_original>
// kernel: tpu_custom_call.1
$region0: #{tpu_custom_call.1}
  #allocation0 [shape = 'u32[]', space=smem, size = 0x4, offset = 0x4, fixed_abs, tag = 'smem constant byte address 0x4 - core index']
  #allocation1 [shape = 'u32[144,128]{1,0:T(1,128)}', space=vmem, size = 0x12000, scoped, tag = 'internal scratch']
  #allocation2 [shape = 'f32[8,32]{1,0:T(8,128)}', space=vmem, size = 0x1000, scoped, tag = 'scratch operand']
  %s0 = inlined_call_operand.vmem [shape: f32[2,8,32], index: 0, kind: input, shape index: {}]
  %s1 = inlined_call_operand.vmem [shape: f32[2,128,32], index: 1, kind: input, shape index: {}]
  %s2 = inlined_call_operand.vmem [shape: f32[2,128,32], index: 2, kind: input, shape index: {}]
  %s3 = inlined_call_operand.vmem [shape: f32[1,32,256], index: 3, kind: input, shape index: {}]
  %s4 = inlined_call_operand.vmem [shape: f32[2,1,128], index: 4, kind: input, shape index: {}]
  %s5 = inlined_call_operand.vmem [shape: f32[2,1,128], index: 5, kind: input, shape index: {}]
  %s6 = inlined_call_operand.vmem [shape: f32[32,32], index: 6, kind: input, shape index: {}]
  %s7 = inlined_call_operand.vmem [shape: f32[1,32], index: 7, kind: input, shape index: {}]
  %s8 = inlined_call_operand.vmem [shape: f32[32,32], index: 8, kind: input, shape index: {}]
  %s9 = inlined_call_operand.vmem [shape: f32[1,32], index: 9, kind: input, shape index: {}]
  %s10 = inlined_call_operand.vmem [shape: f32[32,32], index: 10, kind: input, shape index: {}]
  %s11 = inlined_call_operand.vmem [shape: f32[1,32], index: 11, kind: input, shape index: {}]
  %s12 = inlined_call_operand.vmem [shape: f32[32,32], index: 12, kind: input, shape index: {}]
  %s13 = inlined_call_operand.vmem [shape: f32[1,32], index: 13, kind: input, shape index: {}]
  %s14 = inlined_call_operand.vmem [shape: f32[1,32], index: 14, kind: input, shape index: {}]
  %s15 = inlined_call_operand.vmem [shape: f32[1,32], index: 15, kind: input, shape index: {}]
  %s16 = inlined_call_operand.hbm [shape: f32[2,8,32], index: 16, kind: output, shape index: {}]
  %s17 = sld [smem:[#allocation0]]
  $region97: #{tpu_custom_call.1} parent=0
    _
  %s19 = ssub.s32 1, %s17
  %s20 = scalar_select 0, %s19, %s17
  $region1: #{tpu_custom_call.1} parent=0
    #allocation3 [shape = 'u8[8192]{0}', space=vmem, size = 0x2000, scoped, tag = 'output window, operand 0']
    #allocation4 [shape = 's32[2]{0}', space=sflag, size = 0x8, scoped, tag = 'scoped memory for tpu_custom_call.1']
    %21 = vsyncpa [#allocation4], 0
    %s22 = scalar_lea.sflag [#allocation4], 1
    %23 = vsyncpa %s22, 0
    loop: start=0, step=1, limit=4
    $region2: #{tpu_custom_call.1} parent=1 // loop_pre_header
      _
    $region3: #{tpu_custom_call.1} parent=1 // loop_header
      %s25 = sphi 0, %s29
      %p26 = scmp.ge.s32.totalorder %s25, 4
      %s32 = sphi 0, %s44
      %s33 = sphi 0, %s40
      %s34 = sphi 0, %s32
      %s35 = sphi 0, %s33
      %s36 = sphi 0, %s34
      %s37 = sphi 0, %s35
      %s47 = sphi 0, %s49
      %s50 = sphi 0, %s47
      %s51 = sphi 0, %s50
      %s67 = sphi 0, %s51
      %s73 = sphi 0, %s75
      %s76 = sphi 0, %s73
      %s77 = sphi 0, %s76
      %s93 = sphi 0, %s77
      %s99 = sphi 0, %s101
      %s102 = sphi 0, %s99
      %s103 = sphi 0, %s102
      %s119 = sphi 0, %s103
      %s123 = sphi 0, %s123
      %s125 = sphi 0, %s123
      %s126 = sphi 0, %s125
      %s140 = sphi 0, %s126
      %s146 = sphi 0, %s148
      %s149 = sphi 0, %s146
      %s150 = sphi 0, %s149
      %s166 = sphi 0, %s150
      %s172 = sphi 0, %s174
      %s175 = sphi 0, %s172
      %s176 = sphi 0, %s175
      %s192 = sphi 0, %s176
      %s196 = sphi 0, %s196
      %s198 = sphi 0, %s196
      %s199 = sphi 0, %s198
      %s213 = sphi 0, %s199
      %s217 = sphi 0, %s217
      %s219 = sphi 0, %s217
      %s220 = sphi 0, %s219
      %s234 = sphi 0, %s220
      %s238 = sphi 0, %s238
      %s240 = sphi 0, %s238
      %s241 = sphi 0, %s240
      %s255 = sphi 0, %s241
      %s259 = sphi 0, %s259
      %s261 = sphi 0, %s259
      %s262 = sphi 0, %s261
      %s276 = sphi 0, %s262
      %s280 = sphi 0, %s280
      %s282 = sphi 0, %s280
      %s283 = sphi 0, %s282
      %s297 = sphi 0, %s283
      %s301 = sphi 0, %s301
      %s303 = sphi 0, %s301
      %s304 = sphi 0, %s303
      %s318 = sphi 0, %s304
      %s322 = sphi 0, %s322
      %s324 = sphi 0, %s322
      %s325 = sphi 0, %s324
      %s339 = sphi 0, %s325
      %s343 = sphi 0, %s343
      %s345 = sphi 0, %s343
      %s346 = sphi 0, %s345
      %s360 = sphi 0, %s346
      %s364 = sphi 0, %s364
      %s366 = sphi 0, %s364
      %s367 = sphi 0, %s366
      %s381 = sphi 0, %s367
      %s385 = sphi 0, %s385
      %s387 = sphi 0, %s385
      %s388 = sphi 0, %s387
      %s402 = sphi 0, %s388
      %s408 = sphi 0, %s410
      %s411 = sphi 0, %s408
      %s412 = sphi 0, %s411
      %s428 = sphi 0, %s412
    $region4: #{tpu_custom_call.1} parent=1 // loop_header_branch
      %28 = sbr.rel (%p26) target = $region8
    $region5: #{tpu_custom_call.1} parent=1 // loop_body
      %s30 = ssub.s32 %s25, 1
      %s31 = ssub.s32 %s25, 2
      %s38 = sadd.s32 1, %s33
      %p39 = scmp.ge.s32.totalorder %s38, 1
      %s40 = scalar_select %p39, 0, %s38
      %s41 = sadd.s32 1, %s32
      %s42 = scalar_select %p39, %s41, %s32
      %p43 = scmp.ge.s32.totalorder %s42, 2
      %s44 = scalar_select %p43, 0, %s42
      %s45 = ssub.s32 %s32, %s44
      %p46 = scmp.eq.s32.totalorder %s45, 0
      %s48 = sadd.s32 %s47, 1
      %s49 = scalar_select %p46, %s47, %s48
      %p52 = pneg %p46
      %p53 = scmp.eq.s32.totalorder %s25, 1
      %p54 = por %p52, %p53
      %p55 = scmp.ne.s32.totalorder %s47, %s50
      %p56 = scmp.eq.s32.totalorder %s25, 0
      %p57 = por %p55, %p56
      %p58 = scmp.ne.s32.totalorder %s47, %s50
      %p59 = scmp.eq.s32.totalorder %s30, 1
      %p60 = por %p58, %p59
      %p61 = scmp.ne.s32.totalorder %s50, %s51
      %p62 = scmp.eq.s32.totalorder %s30, 0
      %p63 = por %p61, %p62
      %p64 = scmp.ne.s32.totalorder %s50, %s51
      %p65 = scmp.eq.s32.totalorder %s31, 1
      %p66 = por %p64, %p65
      %p68 = scmp.ne.s32.totalorder %s51, %s67
      %p69 = scmp.eq.s32.totalorder %s31, 0
      %p70 = por %p68, %p69
      %s71 = ssub.s32 %s32, %s44
      %p72 = scmp.eq.s32.totalorder %s71, 0
      %s74 = sadd.s32 %s73, 1
      %s75 = scalar_select %p72, %s73, %s74
      %p78 = pneg %p72
      %p79 = scmp.eq.s32.totalorder %s25, 1
      %p80 = por %p78, %p79
      %p81 = scmp.ne.s32.totalorder %s73, %s76
      %p82 = scmp.eq.s32.totalorder %s25, 0
      %p83 = por %p81, %p82
      %p84 = scmp.ne.s32.totalorder %s73, %s76
      %p85 = scmp.eq.s32.totalorder %s30, 1
      %p86 = por %p84, %p85
      %p87 = scmp.ne.s32.totalorder %s76, %s77
      %p88 = scmp.eq.s32.totalorder %s30, 0
      %p89 = por %p87, %p88
      %p90 = scmp.ne.s32.totalorder %s76, %s77
      %p91 = scmp.eq.s32.totalorder %s31, 1
      %p92 = por %p90, %p91
      %p94 = scmp.ne.s32.totalorder %s77, %s93
      %p95 = scmp.eq.s32.totalorder %s31, 0
      %p96 = por %p94, %p95
      %s97 = ssub.s32 %s32, %s44
      %p98 = scmp.eq.s32.totalorder %s97, 0
      %s100 = sadd.s32 %s99, 1
      %s101 = scalar_select %p98, %s99, %s100
      %p104 = pneg %p98
      %p105 = scmp.eq.s32.totalorder %s25, 1
      %p106 = por %p104, %p105
      %p107 = scmp.ne.s32.totalorder %s99, %s102
      %p108 = scmp.eq.s32.totalorder %s25, 0
      %p109 = por %p107, %p108
      %p110 = scmp.ne.s32.totalorder %s99, %s102
      %p111 = scmp.eq.s32.totalorder %s30, 1
      %p112 = por %p110, %p111
      %p113 = scmp.ne.s32.totalorder %s102, %s103
      %p114 = scmp.eq.s32.totalorder %s30, 0
      %p115 = por %p113, %p114
      %p116 = scmp.ne.s32.totalorder %s102, %s103
      %p117 = scmp.eq.s32.totalorder %s31, 1
      %p118 = por %p116, %p117
      %p120 = scmp.ne.s32.totalorder %s103, %s119
      %p121 = scmp.eq.s32.totalorder %s31, 0
      %p122 = por %p120, %p121
      %s124 = sadd.s32 %s123, 1
      %p127 = scmp.eq.s32.totalorder %s25, 1
      %p128 = scmp.ne.s32.totalorder %s123, %s125
      %p129 = scmp.eq.s32.totalorder %s25, 0
      %p130 = por %p128, %p129
      %p131 = scmp.ne.s32.totalorder %s123, %s125
      %p132 = scmp.eq.s32.totalorder %s30, 1
      %p133 = por %p131, %p132
      %p134 = scmp.ne.s32.totalorder %s125, %s126
      %p135 = scmp.eq.s32.totalorder %s30, 0
      %p136 = por %p134, %p135
      %p137 = scmp.ne.s32.totalorder %s125, %s126
      %p138 = scmp.eq.s32.totalorder %s31, 1
      %p139 = por %p137, %p138
      %p141 = scmp.ne.s32.totalorder %s126, %s140
      %p142 = scmp.eq.s32.totalorder %s31, 0
      %p143 = por %p141, %p142
      %s144 = ssub.s32 %s32, %s44
      %p145 = scmp.eq.s32.totalorder %s144, 0
      %s147 = sadd.s32 %s146, 1
      %s148 = scalar_select %p145, %s146, %s147
      %p151 = pneg %p145
      %p152 = scmp.eq.s32.totalorder %s25, 1
      %p153 = por %p151, %p152
      %p154 = scmp.ne.s32.totalorder %s146, %s149
      %p155 = scmp.eq.s32.totalorder %s25, 0
      %p156 = por %p154, %p155
      %p157 = scmp.ne.s32.totalorder %s146, %s149
      %p158 = scmp.eq.s32.totalorder %s30, 1
      %p159 = por %p157, %p158
      %p160 = scmp.ne.s32.totalorder %s149, %s150
      %p161 = scmp.eq.s32.totalorder %s30, 0
      %p162 = por %p160, %p161
      %p163 = scmp.ne.s32.totalorder %s149, %s150
      %p164 = scmp.eq.s32.totalorder %s31, 1
      %p165 = por %p163, %p164
      %p167 = scmp.ne.s32.totalorder %s150, %s166
      %p168 = scmp.eq.s32.totalorder %s31, 0
      %p169 = por %p167, %p168
      %s170 = ssub.s32 %s32, %s44
      %p171 = scmp.eq.s32.totalorder %s170, 0
      %s173 = sadd.s32 %s172, 1
      %s174 = scalar_select %p171, %s172, %s173
      %p177 = pneg %p171
      %p178 = scmp.eq.s32.totalorder %s25, 1
      %p179 = por %p177, %p178
      %p180 = scmp.ne.s32.totalorder %s172, %s175
      %p181 = scmp.eq.s32.totalorder %s25, 0
      %p182 = por %p180, %p181
      %p183 = scmp.ne.s32.totalorder %s172, %s175
      %p184 = scmp.eq.s32.totalorder %s30, 1
      %p185 = por %p183, %p184
      %p186 = scmp.ne.s32.totalorder %s175, %s176
      %p187 = scmp.eq.s32.totalorder %s30, 0
      %p188 = por %p186, %p187
      %p189 = scmp.ne.s32.totalorder %s175, %s176
      %p190 = scmp.eq.s32.totalorder %s31, 1
      %p191 = por %p189, %p190
      %p193 = scmp.ne.s32.totalorder %s176, %s192
      %p194 = scmp.eq.s32.totalorder %s31, 0
      %p195 = por %p193, %p194
      %s197 = sadd.s32 %s196, 1
      %p200 = scmp.eq.s32.totalorder %s25, 1
      %p201 = scmp.ne.s32.totalorder %s196, %s198
      %p202 = scmp.eq.s32.totalorder %s25, 0
      %p203 = por %p201, %p202
      %p204 = scmp.ne.s32.totalorder %s196, %s198
      %p205 = scmp.eq.s32.totalorder %s30, 1
      %p206 = por %p204, %p205
      %p207 = scmp.ne.s32.totalorder %s198, %s199
      %p208 = scmp.eq.s32.totalorder %s30, 0
      %p209 = por %p207, %p208
      %p210 = scmp.ne.s32.totalorder %s198, %s199
      %p211 = scmp.eq.s32.totalorder %s31, 1
      %p212 = por %p210, %p211
      %p214 = scmp.ne.s32.totalorder %s199, %s213
      %p215 = scmp.eq.s32.totalorder %s31, 0
      %p216 = por %p214, %p215
      %s218 = sadd.s32 %s217, 1
      %p221 = scmp.eq.s32.totalorder %s25, 1
      %p222 = scmp.ne.s32.totalorder %s217, %s219
      %p223 = scmp.eq.s32.totalorder %s25, 0
      %p224 = por %p222, %p223
      %p225 = scmp.ne.s32.totalorder %s217, %s219
      %p226 = scmp.eq.s32.totalorder %s30, 1
      %p227 = por %p225, %p226
      %p228 = scmp.ne.s32.totalorder %s219, %s220
      %p229 = scmp.eq.s32.totalorder %s30, 0
      %p230 = por %p228, %p229
      %p231 = scmp.ne.s32.totalorder %s219, %s220
      %p232 = scmp.eq.s32.totalorder %s31, 1
      %p233 = por %p231, %p232
      %p235 = scmp.ne.s32.totalorder %s220, %s234
      %p236 = scmp.eq.s32.totalorder %s31, 0
      %p237 = por %p235, %p236
      %s239 = sadd.s32 %s238, 1
      %p242 = scmp.eq.s32.totalorder %s25, 1
      %p243 = scmp.ne.s32.totalorder %s238, %s240
      %p244 = scmp.eq.s32.totalorder %s25, 0
      %p245 = por %p243, %p244
      %p246 = scmp.ne.s32.totalorder %s238, %s240
      %p247 = scmp.eq.s32.totalorder %s30, 1
      %p248 = por %p246, %p247
      %p249 = scmp.ne.s32.totalorder %s240, %s241
      %p250 = scmp.eq.s32.totalorder %s30, 0
      %p251 = por %p249, %p250
      %p252 = scmp.ne.s32.totalorder %s240, %s241
      %p253 = scmp.eq.s32.totalorder %s31, 1
      %p254 = por %p252, %p253
      %p256 = scmp.ne.s32.totalorder %s241, %s255
      %p257 = scmp.eq.s32.totalorder %s31, 0
      %p258 = por %p256, %p257
      %s260 = sadd.s32 %s259, 1
      %p263 = scmp.eq.s32.totalorder %s25, 1
      %p264 = scmp.ne.s32.totalorder %s259, %s261
      %p265 = scmp.eq.s32.totalorder %s25, 0
      %p266 = por %p264, %p265
      %p267 = scmp.ne.s32.totalorder %s259, %s261
      %p268 = scmp.eq.s32.totalorder %s30, 1
      %p269 = por %p267, %p268
      %p270 = scmp.ne.s32.totalorder %s261, %s262
      %p271 = scmp.eq.s32.totalorder %s30, 0
      %p272 = por %p270, %p271
      %p273 = scmp.ne.s32.totalorder %s261, %s262
      %p274 = scmp.eq.s32.totalorder %s31, 1
      %p275 = por %p273, %p274
      %p277 = scmp.ne.s32.totalorder %s262, %s276
      %p278 = scmp.eq.s32.totalorder %s31, 0
      %p279 = por %p277, %p278
      %s281 = sadd.s32 %s280, 1
      %p284 = scmp.eq.s32.totalorder %s25, 1
      %p285 = scmp.ne.s32.totalorder %s280, %s282
      %p286 = scmp.eq.s32.totalorder %s25, 0
      %p287 = por %p285, %p286
      %p288 = scmp.ne.s32.totalorder %s280, %s282
      %p289 = scmp.eq.s32.totalorder %s30, 1
      %p290 = por %p288, %p289
      %p291 = scmp.ne.s32.totalorder %s282, %s283
      %p292 = scmp.eq.s32.totalorder %s30, 0
      %p293 = por %p291, %p292
      %p294 = scmp.ne.s32.totalorder %s282, %s283
      %p295 = scmp.eq.s32.totalorder %s31, 1
      %p296 = por %p294, %p295
      %p298 = scmp.ne.s32.totalorder %s283, %s297
      %p299 = scmp.eq.s32.totalorder %s31, 0
      %p300 = por %p298, %p299
      %s302 = sadd.s32 %s301, 1
      %p305 = scmp.eq.s32.totalorder %s25, 1
      %p306 = scmp.ne.s32.totalorder %s301, %s303
      %p307 = scmp.eq.s32.totalorder %s25, 0
      %p308 = por %p306, %p307
      %p309 = scmp.ne.s32.totalorder %s301, %s303
      %p310 = scmp.eq.s32.totalorder %s30, 1
      %p311 = por %p309, %p310
      %p312 = scmp.ne.s32.totalorder %s303, %s304
      %p313 = scmp.eq.s32.totalorder %s30, 0
      %p314 = por %p312, %p313
      %p315 = scmp.ne.s32.totalorder %s303, %s304
      %p316 = scmp.eq.s32.totalorder %s31, 1
      %p317 = por %p315, %p316
      %p319 = scmp.ne.s32.totalorder %s304, %s318
      %p320 = scmp.eq.s32.totalorder %s31, 0
      %p321 = por %p319, %p320
      %s323 = sadd.s32 %s322, 1
      %p326 = scmp.eq.s32.totalorder %s25, 1
      %p327 = scmp.ne.s32.totalorder %s322, %s324
      %p328 = scmp.eq.s32.totalorder %s25, 0
      %p329 = por %p327, %p328
      %p330 = scmp.ne.s32.totalorder %s322, %s324
      %p331 = scmp.eq.s32.totalorder %s30, 1
      %p332 = por %p330, %p331
      %p333 = scmp.ne.s32.totalorder %s324, %s325
      %p334 = scmp.eq.s32.totalorder %s30, 0
      %p335 = por %p333, %p334
      %p336 = scmp.ne.s32.totalorder %s324, %s325
      %p337 = scmp.eq.s32.totalorder %s31, 1
      %p338 = por %p336, %p337
      %p340 = scmp.ne.s32.totalorder %s325, %s339
      %p341 = scmp.eq.s32.totalorder %s31, 0
      %p342 = por %p340, %p341
      %s344 = sadd.s32 %s343, 1
      %p347 = scmp.eq.s32.totalorder %s25, 1
      %p348 = scmp.ne.s32.totalorder %s343, %s345
      %p349 = scmp.eq.s32.totalorder %s25, 0
      %p350 = por %p348, %p349
      %p351 = scmp.ne.s32.totalorder %s343, %s345
      %p352 = scmp.eq.s32.totalorder %s30, 1
      %p353 = por %p351, %p352
      %p354 = scmp.ne.s32.totalorder %s345, %s346
      %p355 = scmp.eq.s32.totalorder %s30, 0
      %p356 = por %p354, %p355
      %p357 = scmp.ne.s32.totalorder %s345, %s346
      %p358 = scmp.eq.s32.totalorder %s31, 1
      %p359 = por %p357, %p358
      %p361 = scmp.ne.s32.totalorder %s346, %s360
      %p362 = scmp.eq.s32.totalorder %s31, 0
      %p363 = por %p361, %p362
      %s365 = sadd.s32 %s364, 1
      %p368 = scmp.eq.s32.totalorder %s25, 1
      %p369 = scmp.ne.s32.totalorder %s364, %s366
      %p370 = scmp.eq.s32.totalorder %s25, 0
      %p371 = por %p369, %p370
      %p372 = scmp.ne.s32.totalorder %s364, %s366
      %p373 = scmp.eq.s32.totalorder %s30, 1
      %p374 = por %p372, %p373
      %p375 = scmp.ne.s32.totalorder %s366, %s367
      %p376 = scmp.eq.s32.totalorder %s30, 0
      %p377 = por %p375, %p376
      %p378 = scmp.ne.s32.totalorder %s366, %s367
      %p379 = scmp.eq.s32.totalorder %s31, 1
      %p380 = por %p378, %p379
      %p382 = scmp.ne.s32.totalorder %s367, %s381
      %p383 = scmp.eq.s32.totalorder %s31, 0
      %p384 = por %p382, %p383
      %s386 = sadd.s32 %s385, 1
      %p389 = scmp.eq.s32.totalorder %s25, 1
      %p390 = scmp.ne.s32.totalorder %s385, %s387
      %p391 = scmp.eq.s32.totalorder %s25, 0
      %p392 = por %p390, %p391
      %p393 = scmp.ne.s32.totalorder %s385, %s387
      %p394 = scmp.eq.s32.totalorder %s30, 1
      %p395 = por %p393, %p394
      %p396 = scmp.ne.s32.totalorder %s387, %s388
      %p397 = scmp.eq.s32.totalorder %s30, 0
      %p398 = por %p396, %p397
      %p399 = scmp.ne.s32.totalorder %s387, %s388
      %p400 = scmp.eq.s32.totalorder %s31, 1
      %p401 = por %p399, %p400
      %p403 = scmp.ne.s32.totalorder %s388, %s402
      %p404 = scmp.eq.s32.totalorder %s31, 0
      %p405 = por %p403, %p404
      %s406 = ssub.s32 %s32, %s44
      %p407 = scmp.eq.s32.totalorder %s406, 0
      %s409 = sadd.s32 %s408, 1
      %s410 = scalar_select %p407, %s408, %s409
      %p413 = pneg %p407
      %p414 = scmp.eq.s32.totalorder %s25, 1
      %p415 = por %p413, %p414
      %p416 = scmp.ne.s32.totalorder %s408, %s411
      %p417 = scmp.eq.s32.totalorder %s25, 0
      %p418 = por %p416, %p417
      %p419 = scmp.ne.s32.totalorder %s408, %s411
      %p420 = scmp.eq.s32.totalorder %s30, 1
      %p421 = por %p419, %p420
      %p422 = scmp.ne.s32.totalorder %s411, %s412
      %p423 = scmp.eq.s32.totalorder %s30, 0
      %p424 = por %p422, %p423
      %p425 = scmp.ne.s32.totalorder %s411, %s412
      %p426 = scmp.eq.s32.totalorder %s31, 1
      %p427 = por %p425, %p426
      %p429 = scmp.ne.s32.totalorder %s412, %s428
      %p430 = scmp.eq.s32.totalorder %s31, 0
      %p431 = por %p429, %p430
      %p432 = scmp.le.s32.totalorder 1, %s25
      %p433 = scmp.lt.s32.totalorder %s25, 3
      %p434 = pnand %p432, %p433
      %p435 = pneg %p434
      // Predicated region
      $region9: #{tpu_custom_call.1} parent=5 // pred_check
        _
      $region10: #{tpu_custom_call.1} parent=5 // pred_check_branch
        %437 = sbr.rel (%p434) target = $region12
      $region11: #{tpu_custom_call.1} parent=5 // pred_region
        %s438 = ssub.s32 %s25, 1
        // Predicated region
        $region13: #{tpu_custom_call.1} parent=11 // pred_check
          %p439 = pneg %p136
        $region14: #{tpu_custom_call.1} parent=11 // pred_check_branch
          %441 = sbr.rel (%p439) target = $region16
        $region15: #{tpu_custom_call.1} parent=11 // pred_region
          _
        $region16: #{tpu_custom_call.1} parent=11 // pred_fallthru
          _
        // Predicated region
        $region17: #{tpu_custom_call.1} parent=11 // pred_check
          %p442 = pneg %p209
        $region18: #{tpu_custom_call.1} parent=11 // pred_check_branch
          %444 = sbr.rel (%p442) target = $region20
        $region19: #{tpu_custom_call.1} parent=11 // pred_region
          _
        $region20: #{tpu_custom_call.1} parent=11 // pred_fallthru
          _
        // Predicated region
        $region21: #{tpu_custom_call.1} parent=11 // pred_check
          %p445 = pneg %p230
        $region22: #{tpu_custom_call.1} parent=11 // pred_check_branch
          %447 = sbr.rel (%p445) target = $region24
        $region23: #{tpu_custom_call.1} parent=11 // pred_region
          _
        $region24: #{tpu_custom_call.1} parent=11 // pred_fallthru
          _
        // Predicated region
        $region25: #{tpu_custom_call.1} parent=11 // pred_check
          %p448 = pneg %p251
        $region26: #{tpu_custom_call.1} parent=11 // pred_check_branch
          %450 = sbr.rel (%p448) target = $region28
        $region27: #{tpu_custom_call.1} parent=11 // pred_region
          _
        $region28: #{tpu_custom_call.1} parent=11 // pred_fallthru
          _
        // Predicated region
        $region29: #{tpu_custom_call.1} parent=11 // pred_check
          %p451 = pneg %p272
        $region30: #{tpu_custom_call.1} parent=11 // pred_check_branch
          %453 = sbr.rel (%p451) target = $region32
        $region31: #{tpu_custom_call.1} parent=11 // pred_region
          _
        $region32: #{tpu_custom_call.1} parent=11 // pred_fallthru
          _
        // Predicated region
        $region33: #{tpu_custom_call.1} parent=11 // pred_check
          %p454 = pneg %p293
        $region34: #{tpu_custom_call.1} parent=11 // pred_check_branch
          %456 = sbr.rel (%p454) target = $region36
        $region35: #{tpu_custom_call.1} parent=11 // pred_region
          _
        $region36: #{tpu_custom_call.1} parent=11 // pred_fallthru
          _
        // Predicated region
        $region37: #{tpu_custom_call.1} parent=11 // pred_check
          %p457 = pneg %p314
        $region38: #{tpu_custom_call.1} parent=11 // pred_check_branch
          %459 = sbr.rel (%p457) target = $region40
        $region39: #{tpu_custom_call.1} parent=11 // pred_region
          _
        $region40: #{tpu_custom_call.1} parent=11 // pred_fallthru
          _
        // Predicated region
        $region41: #{tpu_custom_call.1} parent=11 // pred_check
          %p460 = pneg %p335
        $region42: #{tpu_custom_call.1} parent=11 // pred_check_branch
          %462 = sbr.rel (%p460) target = $region44
        $region43: #{tpu_custom_call.1} parent=11 // pred_region
          _
        $region44: #{tpu_custom_call.1} parent=11 // pred_fallthru
          _
        // Predicated region
        $region45: #{tpu_custom_call.1} parent=11 // pred_check
          %p463 = pneg %p356
        $region46: #{tpu_custom_call.1} parent=11 // pred_check_branch
          %465 = sbr.rel (%p463) target = $region48
        $region47: #{tpu_custom_call.1} parent=11 // pred_region
          _
        $region48: #{tpu_custom_call.1} parent=11 // pred_fallthru
          _
        // Predicated region
        $region49: #{tpu_custom_call.1} parent=11 // pred_check
          %p466 = pneg %p377
        $region50: #{tpu_custom_call.1} parent=11 // pred_check_branch
          %468 = sbr.rel (%p466) target = $region52
        $region51: #{tpu_custom_call.1} parent=11 // pred_region
          _
        $region52: #{tpu_custom_call.1} parent=11 // pred_fallthru
          _
        // Predicated region
        $region53: #{tpu_custom_call.1} parent=11 // pred_check
          %p469 = pneg %p398
        $region54: #{tpu_custom_call.1} parent=11 // pred_check_branch
          %471 = sbr.rel (%p469) target = $region56
        $region55: #{tpu_custom_call.1} parent=11 // pred_region
          _
        $region56: #{tpu_custom_call.1} parent=11 // pred_fallthru
          _
      $region12: #{tpu_custom_call.1} parent=5 // pred_fallthru
        _
      %p472 = scmp.lt.s32.totalorder %s25, 2
      // Predicated region
      $region57: #{tpu_custom_call.1} parent=5 // pred_check
        %p473 = pneg %p472
      $region58: #{tpu_custom_call.1} parent=5 // pred_check_branch
        %475 = sbr.rel (%p473) target = $region60
      $region59: #{tpu_custom_call.1} parent=5 // pred_region
        // Predicated region
        $region61: #{tpu_custom_call.1} parent=59 // pred_check
          %p476 = pneg %p57
        $region62: #{tpu_custom_call.1} parent=59 // pred_check_branch
          %478 = sbr.rel (%p476) target = $region64
        $region63: #{tpu_custom_call.1} parent=59 // pred_region
          %p479 = scmp.lt.s32.totalorder %s32, 1
          %s480 = scalar_select %p479, %s32, 1
          %s481 = smul.addr %s480, 8
          %s482 = scalar_lea.vmem %s0, %s481
        $region64: #{tpu_custom_call.1} parent=59 // pred_fallthru
          _
        // Predicated region
        $region65: #{tpu_custom_call.1} parent=59 // pred_check
          %p483 = pneg %p83
        $region66: #{tpu_custom_call.1} parent=59 // pred_check_branch
          %485 = sbr.rel (%p483) target = $region68
        $region67: #{tpu_custom_call.1} parent=59 // pred_region
          %p486 = scmp.lt.s32.totalorder %s32, 1
          %s487 = scalar_select %p486, %s32, 1
          %s488 = smul.addr %s487, 16
          %s489 = smul.addr %s488, 8
          %s490 = scalar_lea.vmem %s1, %s489
        $region68: #{tpu_custom_call.1} parent=59 // pred_fallthru
          _
        // Predicated region
        $region69: #{tpu_custom_call.1} parent=59 // pred_check
          %p491 = pneg %p109
        $region70: #{tpu_custom_call.1} parent=59 // pred_check_branch
          %493 = sbr.rel (%p491) target = $region72
        $region71: #{tpu_custom_call.1} parent=59 // pred_region
          %p494 = scmp.lt.s32.totalorder %s32, 1
          %s495 = scalar_select %p494, %s32, 1
          %s496 = smul.addr %s495, 16
          %s497 = smul.addr %s496, 8
          %s498 = scalar_lea.vmem %s2, %s497
        $region72: #{tpu_custom_call.1} parent=59 // pred_fallthru
          _
        // Predicated region
        $region73: #{tpu_custom_call.1} parent=59 // pred_check
          %p499 = pneg %p156
        $region74: #{tpu_custom_call.1} parent=59 // pred_check_branch
          %501 = sbr.rel (%p499) target = $region76
        $region75: #{tpu_custom_call.1} parent=59 // pred_region
          %p502 = scmp.lt.s32.totalorder %s32, 1
          %s503 = scalar_select %p502, %s32, 1
          %s504 = scalar_lea.vmem %s4, %s503
        $region76: #{tpu_custom_call.1} parent=59 // pred_fallthru
          _
        // Predicated region
        $region77: #{tpu_custom_call.1} parent=59 // pred_check
          %p505 = pneg %p182
        $region78: #{tpu_custom_call.1} parent=59 // pred_check_branch
          %507 = sbr.rel (%p505) target = $region80
        $region79: #{tpu_custom_call.1} parent=59 // pred_region
          %p508 = scmp.lt.s32.totalorder %s32, 1
          %s509 = scalar_select %p508, %s32, 1
          %s510 = scalar_lea.vmem %s5, %s509
        $region80: #{tpu_custom_call.1} parent=59 // pred_fallthru
          _
      $region60: #{tpu_custom_call.1} parent=5 // pred_fallthru
        _
      %p511 = scmp.le.s32.totalorder 1, %s25
      %p512 = scmp.lt.s32.totalorder %s25, 3
      %p513 = pnand %p511, %p512
      %p514 = pneg %p513
      // Predicated region
      $region81: #{tpu_custom_call.1} parent=5 // pred_check
        _
      $region82: #{tpu_custom_call.1} parent=5 // pred_check_branch
        %516 = sbr.rel (%p513) target = $region84
      $region83: #{tpu_custom_call.1} parent=5 // pred_region
        %s517 = ssub.s32 %s25, 1
        %p518 = scmp.lt.s32.totalorder %s34, 1
        %s519 = scalar_select %p518, %s34, 1
        %s520 = smul.addr %s519, 8
        %s521 = scalar_lea.vmem %s0, %s520
        %p522 = pneg %p63
        %p523 = pneg %p60
        %p524 = scmp.lt.s32.totalorder %s34, 1
        %s525 = scalar_select %p524, %s34, 1
        %s526 = smul.addr %s525, 16
        %s527 = smul.addr %s526, 8
        %s528 = scalar_lea.vmem %s1, %s527
        %p529 = pneg %p89
        %p530 = pneg %p86
        %p531 = scmp.lt.s32.totalorder %s34, 1
        %s532 = scalar_select %p531, %s34, 1
        %s533 = smul.addr %s532, 16
        %s534 = smul.addr %s533, 8
        %s535 = scalar_lea.vmem %s2, %s534
        %p536 = pneg %p115
        %p537 = pneg %p112
        %p538 = pneg %p136
        %p539 = pneg %p133
        %p540 = scmp.lt.s32.totalorder %s34, 1
        %s541 = scalar_select %p540, %s34, 1
        %s542 = scalar_lea.vmem %s4, %s541
        %p543 = pneg %p162
        %p544 = pneg %p159
        %p545 = scmp.lt.s32.totalorder %s34, 1
        %s546 = scalar_select %p545, %s34, 1
        %s547 = scalar_lea.vmem %s5, %s546
        %p548 = pneg %p188
        %p549 = pneg %p185
        %p550 = pneg %p209
        %p551 = pneg %p206
        %p552 = pneg %p230
        %p553 = pneg %p227
        %p554 = pneg %p251
        %p555 = pneg %p248
        %p556 = pneg %p272
        %p557 = pneg %p269
        %p558 = pneg %p293
        %p559 = pneg %p290
        %p560 = pneg %p314
        %p561 = pneg %p311
        %p562 = pneg %p335
        %p563 = pneg %p332
        %p564 = pneg %p356
        %p565 = pneg %p353
        %p566 = pneg %p377
        %p567 = pneg %p374
        %p568 = pneg %p398
        %p569 = pneg %p395
        %p570 = pneg %p424
        %p571 = pneg %p421
        %s572 = sand.u32 %s411, 1
        %s573 = scalar_lea.sflag [#allocation4], %s572
        %s574 = sand.u32 %s411, 1
        %s575 = smul.addr %s574, 8
        %s576 = scalar_lea.vmem [#allocation3], %s575
        %p577 = scmp.lt.s32.totalorder %s34, 1
        %s578 = scalar_select %p577, %s34, 1
        %s579 = smul.addr %s578, 8
        %s580 = scalar_lea.vmem %s0, %s579
        %p581 = scmp.lt.s32.totalorder %s34, 1
        %s582 = scalar_select %p581, %s34, 1
        %s583 = smul.addr %s582, 16
        %s584 = smul.addr %s583, 8
        %s585 = scalar_lea.vmem %s1, %s584
        %p586 = scmp.lt.s32.totalorder %s34, 1
        %s587 = scalar_select %p586, %s34, 1
        %s588 = smul.addr %s587, 16
        %s589 = smul.addr %s588, 8
        %s590 = scalar_lea.vmem %s2, %s589
        %p591 = scmp.lt.s32.totalorder %s34, 1
        %s592 = scalar_select %p591, %s34, 1
        %s593 = scalar_lea.vmem %s4, %s592
        %p594 = scmp.lt.s32.totalorder %s34, 1
        %s595 = scalar_select %p594, %s34, 1
        %s596 = scalar_lea.vmem %s5, %s595
        %v597 = vld [vmem:[%s12] sm:$0xff]
        %v598 = vld [vmem:[%s12 + $0x8] sm:$0xff]
        %v599 = vld [vmem:[%s12 + $0x10] sm:$0xff]
        %v600 = vld [vmem:[%s12 + $0x18] sm:$0xff]
        %v601 = vld [vmem:[%s6] sm:$0xff]
        %v602 = vld [vmem:[%s6 + $0x8] sm:$0xff]
        %v603 = vld [vmem:[%s6 + $0x10] sm:$0xff]
        %v604 = vld [vmem:[%s6 + $0x18] sm:$0xff]
        %v605 = vld [vmem:[%s8] sm:$0xff]
        %v606 = vld [vmem:[%s8 + $0x8] sm:$0xff]
        %v607 = vld [vmem:[%s8 + $0x10] sm:$0xff]
        %v608 = vld [vmem:[%s8 + $0x18] sm:$0xff]
        %v609 = vld [vmem:[%s10] sm:$0xff]
        %v610 = vld [vmem:[%s10 + $0x8] sm:$0xff]
        %v611 = vld [vmem:[%s10 + $0x10] sm:$0xff]
        %v612 = vld [vmem:[%s10 + $0x18] sm:$0xff]
        %v613 = vld [vmem:[%s7] sm:$0x1]
        %v614 = vld [vmem:[%s9] sm:$0x1]
        %v615 = vld [vmem:[%s11] sm:$0x1]
        %v616 = vld [vmem:[%s14] sm:$0x1]
        %v617 = vld [vmem:[%s15] sm:$0x1]
        %v618 = vld [vmem:[%s580] sm:$0xff]
        %v620 = vlaneseq
        %v621 = vshrl.u32 %v620, 7
        %v622 = vsub.s32 0, %v621
        %v623 = vrot.slane %v613, %v622
        %vm625 = vcmask 261120
        %v627 = vsel %vm625, %v618, 0
        %629 = vmatprep.subr.mxu0 0.0
        %630 = vmatpush1.msra.mxu0 %v601
        %631 = vmatprep.subr.mxu0 0.0
        %632 = vmatpush1.msra.mxu0 %v602
        %633 = vmatprep.subr.mxu0 0.0
        %634 = vmatpush1.msra.mxu0 %v603
        %635 = vmatprep.subr.mxu0 0.0
        %636 = vmatpush1.msra.mxu0 %v604
        %637 = vmatprep.subr.mxu0 0.0
        %638 = vmatpush1.msra.mxu0 0.0
        %639 = vmatprep.subr.mxu0 0.0
        %640 = vmatpush1.msra.mxu0 0.0
        %641 = vmatprep.subr.mxu0 0.0
        %642 = vmatpush1.msra.mxu0 0.0
        %643 = vmatprep.subr.mxu0 0.0
        %644 = vmatpush1.msra.mxu0 0.0
        %645 = vmatprep.subr.mxu0 0.0
        %646 = vmatpush1.msra.mxu0 0.0
        %647 = vmatprep.subr.mxu0 0.0
        %648 = vmatpush1.msra.mxu0 0.0
        %649 = vmatprep.subr.mxu0 0.0
        %650 = vmatpush1.msra.mxu0 0.0
        %651 = vmatprep.subr.mxu0 0.0
        %652 = vmatpush1.msra.mxu0 0.0
        %653 = vmatprep.subr.mxu0 0.0
        %654 = vmatpush1.msra.mxu0 0.0
        %655 = vmatprep.subr.mxu0 0.0
        %656 = vmatpush1.msra.mxu0 0.0
        %657 = vmatprep.subr.mxu0 0.0
        %658 = vmatpush1.msra.mxu0 0.0
        %659 = vmatprep.subr.mxu0 0.0
        %660 = vmatpush1.msra.mxu0 0.0
        %661 = vmatprep.subr.mxu0 0.0
        %662 = vmatpush1.msra.mxu0 0.0
        %663 = vmatprep.subr.mxu0 0.0
        %664 = vmatpush1.msra.mxu0 0.0
        %665 = vmatprep.subr.mxu0 0.0
        %666 = vmatpush1.msra.mxu0 0.0
        %667 = vmatprep.subr.mxu0 0.0
        %668 = vmatpush1.msra.mxu0 0.0
        %669 = vmatprep.subr.mxu0 0.0
        %670 = vmatpush1.msra.mxu0 0.0
        %671 = vmatprep.subr.mxu0 0.0
        %672 = vmatpush1.msra.mxu0 0.0
        %673 = vmatprep.subr.mxu0 0.0
        %674 = vmatpush1.msra.mxu0 0.0
        %675 = vmatprep.subr.mxu0 0.0
        %676 = vmatpush1.msra.mxu0 0.0
        %677 = vmatprep.subr.mxu0 0.0
        %678 = vmatpush1.msra.mxu0 0.0
        %679 = vmatprep.subr.mxu0 0.0
        %680 = vmatpush1.msra.mxu0 0.0
        %681 = vmatprep.subr.mxu0 0.0
        %682 = vmatpush1.msra.mxu0 0.0
        %683 = vmatprep.subr.mxu0 0.0
        %684 = vmatpush1.msra.mxu0 0.0
        %685 = vmatprep.subr.mxu0 0.0
        %686 = vmatpush1.msra.mxu0 0.0
        %687 = vmatprep.subr.mxu0 0.0
        %688 = vmatpush1.msra.mxu0 0.0
        %689 = vmatprep.subr.mxu0 0.0
        %690 = vmatpush1.msra.mxu0 0.0
        %691 = vmatprep.subr.mxu0 0.0
        %692 = vmatpush1.msra.mxu0 0.0
        %693 = vmatprep.mubr.f32.mxu0 0.0
        %694 = vmatmul.mubr.f32.gmra.mrb[0].mxu0 %v627
        %v695 = vpop.f32.mrb[0].mxu0
        %v696 = vadd.f32 %v623, %v695
        %v697 = vpop.f32.mrb[0].mxu0
        %698 = vdwg.mxu0
        %v699 = vld [vmem:[%s585] sm:$0xff]
        %v700 = vld [vmem:[%s585 + $0x8] sm:$0xff]
        %v701 = vld [vmem:[%s585 + $0x10] sm:$0xff]
        %v702 = vld [vmem:[%s585 + $0x18] sm:$0xff]
        %v703 = vld [vmem:[%s585 + $0x20] sm:$0xff]
        %v704 = vld [vmem:[%s585 + $0x28] sm:$0xff]
        %v705 = vld [vmem:[%s585 + $0x30] sm:$0xff]
        %v706 = vld [vmem:[%s585 + $0x38] sm:$0xff]
        %v707 = vld [vmem:[%s585 + $0x40] sm:$0xff]
        %v708 = vld [vmem:[%s585 + $0x48] sm:$0xff]
        %v709 = vld [vmem:[%s585 + $0x50] sm:$0xff]
        %v710 = vld [vmem:[%s585 + $0x58] sm:$0xff]
        %v711 = vld [vmem:[%s585 + $0x60] sm:$0xff]
        %v712 = vld [vmem:[%s585 + $0x68] sm:$0xff]
        %v713 = vld [vmem:[%s585 + $0x70] sm:$0xff]
        %v714 = vld [vmem:[%s585 + $0x78] sm:$0xff]
        %v716 = vlaneseq
        %v717 = vshrl.u32 %v716, 7
        %v718 = vsub.s32 0, %v717
        %v719 = vrot.slane %v614, %v718
        %v722 = vsel %vm625, %v699, 0
        %v725 = vsel %vm625, %v700, 0
        %v728 = vsel %vm625, %v701, 0
        %v731 = vsel %vm625, %v702, 0
        %v734 = vsel %vm625, %v703, 0
        %v737 = vsel %vm625, %v704, 0
        %v740 = vsel %vm625, %v705, 0
        %v743 = vsel %vm625, %v706, 0
        %v746 = vsel %vm625, %v707, 0
        %v749 = vsel %vm625, %v708, 0
        %v752 = vsel %vm625, %v709, 0
        %v755 = vsel %vm625, %v710, 0
        %v758 = vsel %vm625, %v711, 0
        %v761 = vsel %vm625, %v712, 0
        %v764 = vsel %vm625, %v713, 0
        %v767 = vsel %vm625, %v714, 0
        %769 = vmatprep.subr.mxu0 0.0
        %770 = vmatpush1.msra.mxu0 %v605
        %771 = vmatprep.subr.mxu0 0.0
        %772 = vmatpush1.msra.mxu0 %v606
        %773 = vmatprep.subr.mxu0 0.0
        %774 = vmatpush1.msra.mxu0 %v607
        %775 = vmatprep.subr.mxu0 0.0
        %776 = vmatpush1.msra.mxu0 %v608
        %777 = vmatprep.subr.mxu0 0.0
        %778 = vmatpush1.msra.mxu0 0.0
        %779 = vmatprep.subr.mxu0 0.0
        %780 = vmatpush1.msra.mxu0 0.0
        %781 = vmatprep.subr.mxu0 0.0
        %782 = vmatpush1.msra.mxu0 0.0
        %783 = vmatprep.subr.mxu0 0.0
        %784 = vmatpush1.msra.mxu0 0.0
        %785 = vmatprep.subr.mxu0 0.0
        %786 = vmatpush1.msra.mxu0 0.0
        %787 = vmatprep.subr.mxu0 0.0
        %788 = vmatpush1.msra.mxu0 0.0
        %789 = vmatprep.subr.mxu0 0.0
        %790 = vmatpush1.msra.mxu0 0.0
        %791 = vmatprep.subr.mxu0 0.0
        %792 = vmatpush1.msra.mxu0 0.0
        %793 = vmatprep.subr.mxu0 0.0
        %794 = vmatpush1.msra.mxu0 0.0
        %795 = vmatprep.subr.mxu0 0.0
        %796 = vmatpush1.msra.mxu0 0.0
        %797 = vmatprep.subr.mxu0 0.0
        %798 = vmatpush1.msra.mxu0 0.0
        %799 = vmatprep.subr.mxu0 0.0
        %800 = vmatpush1.msra.mxu0 0.0
        %801 = vmatprep.subr.mxu0 0.0
        %802 = vmatpush1.msra.mxu0 0.0
        %803 = vmatprep.subr.mxu0 0.0
        %804 = vmatpush1.msra.mxu0 0.0
        %805 = vmatprep.subr.mxu0 0.0
        %806 = vmatpush1.msra.mxu0 0.0
        %807 = vmatprep.subr.mxu0 0.0
        %808 = vmatpush1.msra.mxu0 0.0
        %809 = vmatprep.subr.mxu0 0.0
        %810 = vmatpush1.msra.mxu0 0.0
        %811 = vmatprep.subr.mxu0 0.0
        %812 = vmatpush1.msra.mxu0 0.0
        %813 = vmatprep.subr.mxu0 0.0
        %814 = vmatpush1.msra.mxu0 0.0
        %815 = vmatprep.subr.mxu0 0.0
        %816 = vmatpush1.msra.mxu0 0.0
        %817 = vmatprep.subr.mxu0 0.0
        %818 = vmatpush1.msra.mxu0 0.0
        %819 = vmatprep.subr.mxu0 0.0
        %820 = vmatpush1.msra.mxu0 0.0
        %821 = vmatprep.subr.mxu0 0.0
        %822 = vmatpush1.msra.mxu0 0.0
        %823 = vmatprep.subr.mxu0 0.0
        %824 = vmatpush1.msra.mxu0 0.0
        %825 = vmatprep.subr.mxu0 0.0
        %826 = vmatpush1.msra.mxu0 0.0
        %827 = vmatprep.subr.mxu0 0.0
        %828 = vmatpush1.msra.mxu0 0.0
        %829 = vmatprep.subr.mxu0 0.0
        %830 = vmatpush1.msra.mxu0 0.0
        %831 = vmatprep.subr.mxu0 0.0
        %832 = vmatpush1.msra.mxu0 0.0
        %833 = vmatprep.mubr.f32.mxu0 0.0
        %834 = vmatmul.mubr.f32.gmra.mrb[0].mxu0 %v722
        %v835 = vpop.f32.mrb[0].mxu0
        %v836 = vadd.f32 %v719, %v835
        %v837 = vpop.f32.mrb[0].mxu0
        %838 = vmatprep.mubr.f32.mxu0 0.0
        %839 = vmatmul.mubr.f32.gmra.mrb[0].mxu0 %v725
        %v840 = vpop.f32.mrb[0].mxu0
        %v841 = vadd.f32 %v719, %v840
        %v842 = vpop.f32.mrb[0].mxu0
        %843 = vmatprep.mubr.f32.mxu0 0.0
        %844 = vmatmul.mubr.f32.gmra.mrb[0].mxu0 %v728
        %v845 = vpop.f32.mrb[0].mxu0
        %v846 = vadd.f32 %v719, %v845
        %v847 = vpop.f32.mrb[0].mxu0
        %848 = vmatprep.mubr.f32.mxu0 0.0
        %849 = vmatmul.mubr.f32.gmra.mrb[0].mxu0 %v731
        %v850 = vpop.f32.mrb[0].mxu0
        %v851 = vadd.f32 %v719, %v850
        %v852 = vpop.f32.mrb[0].mxu0
        %853 = vmatprep.mubr.f32.mxu0 0.0
        %854 = vmatmul.mubr.f32.gmra.mrb[0].mxu0 %v734
        %v855 = vpop.f32.mrb[0].mxu0
        %v856 = vadd.f32 %v719, %v855
        %v857 = vpop.f32.mrb[0].mxu0
        %858 = vmatprep.mubr.f32.mxu0 0.0
        %859 = vmatmul.mubr.f32.gmra.mrb[0].mxu0 %v737
        %v860 = vpop.f32.mrb[0].mxu0
        %v861 = vadd.f32 %v719, %v860
        %v862 = vpop.f32.mrb[0].mxu0
        %863 = vmatprep.mubr.f32.mxu0 0.0
        %864 = vmatmul.mubr.f32.gmra.mrb[0].mxu0 %v740
        %v865 = vpop.f32.mrb[0].mxu0
        %v866 = vadd.f32 %v719, %v865
        %v867 = vpop.f32.mrb[0].mxu0
        %868 = vmatprep.mubr.f32.mxu0 0.0
        %869 = vmatmul.mubr.f32.gmra.mrb[0].mxu0 %v743
        %v870 = vpop.f32.mrb[0].mxu0
        %v871 = vadd.f32 %v719, %v870
        %v872 = vpop.f32.mrb[0].mxu0
        %873 = vmatprep.mubr.f32.mxu0 0.0
        %874 = vmatmul.mubr.f32.gmra.mrb[0].mxu0 %v746
        %v875 = vpop.f32.mrb[0].mxu0
        %v876 = vadd.f32 %v719, %v875
        %v877 = vpop.f32.mrb[0].mxu0
        %878 = vmatprep.mubr.f32.mxu0 0.0
        %879 = vmatmul.mubr.f32.gmra.mrb[0].mxu0 %v749
        %v880 = vpop.f32.mrb[0].mxu0
        %v881 = vadd.f32 %v719, %v880
        %v882 = vpop.f32.mrb[0].mxu0
        %883 = vmatprep.mubr.f32.mxu0 0.0
        %884 = vmatmul.mubr.f32.gmra.mrb[0].mxu0 %v752
        %v885 = vpop.f32.mrb[0].mxu0
        %v886 = vadd.f32 %v719, %v885
        %v887 = vpop.f32.mrb[0].mxu0
        %888 = vmatprep.mubr.f32.mxu0 0.0
        %889 = vmatmul.mubr.f32.gmra.mrb[0].mxu0 %v755
        %v890 = vpop.f32.mrb[0].mxu0
        %v891 = vadd.f32 %v719, %v890
        %v892 = vpop.f32.mrb[0].mxu0
        %893 = vmatprep.mubr.f32.mxu0 0.0
        %894 = vmatmul.mubr.f32.gmra.mrb[0].mxu0 %v758
        %v895 = vpop.f32.mrb[0].mxu0
        %v896 = vadd.f32 %v719, %v895
        %v897 = vpop.f32.mrb[0].mxu0
        %898 = vmatprep.mubr.f32.mxu0 0.0
        %899 = vmatmul.mubr.f32.gmra.mrb[0].mxu0 %v761
        %v900 = vpop.f32.mrb[0].mxu0
        %v901 = vadd.f32 %v719, %v900
        %v902 = vpop.f32.mrb[0].mxu0
        %903 = vmatprep.mubr.f32.mxu0 0.0
        %904 = vmatmul.mubr.f32.gmra.mrb[0].mxu0 %v764
        %v905 = vpop.f32.mrb[0].mxu0
        %v906 = vadd.f32 %v719, %v905
        %v907 = vpop.f32.mrb[0].mxu0
        %908 = vmatprep.mubr.f32.mxu0 0.0
        %909 = vmatmul.mubr.f32.gmra.mrb[0].mxu0 %v767
        %v910 = vpop.f32.mrb[0].mxu0
        %v911 = vadd.f32 %v719, %v910
        %v912 = vpop.f32.mrb[0].mxu0
        %913 = vdwg.mxu0
        %v914 = vld [vmem:[%s590] sm:$0xff]
        %v915 = vld [vmem:[%s590 + $0x8] sm:$0xff]
        %v916 = vld [vmem:[%s590 + $0x10] sm:$0xff]
        %v917 = vld [vmem:[%s590 + $0x18] sm:$0xff]
        %v918 = vld [vmem:[%s590 + $0x20] sm:$0xff]
        %v919 = vld [vmem:[%s590 + $0x28] sm:$0xff]
        %v920 = vld [vmem:[%s590 + $0x30] sm:$0xff]
        %v921 = vld [vmem:[%s590 + $0x38] sm:$0xff]
        %v922 = vld [vmem:[%s590 + $0x40] sm:$0xff]
        %v923 = vld [vmem:[%s590 + $0x48] sm:$0xff]
        %v924 = vld [vmem:[%s590 + $0x50] sm:$0xff]
        %v925 = vld [vmem:[%s590 + $0x58] sm:$0xff]
        %v926 = vld [vmem:[%s590 + $0x60] sm:$0xff]
        %v927 = vld [vmem:[%s590 + $0x68] sm:$0xff]
        %v928 = vld [vmem:[%s590 + $0x70] sm:$0xff]
        %v929 = vld [vmem:[%s590 + $0x78] sm:$0xff]
        %v931 = vlaneseq
        %v932 = vshrl.u32 %v931, 7
        %v933 = vsub.s32 0, %v932
        %v934 = vrot.slane %v615, %v933
        %v937 = vsel %vm625, %v914, 0
        %v940 = vsel %vm625, %v915, 0
        %v943 = vsel %vm625, %v916, 0
        %v946 = vsel %vm625, %v917, 0
        %v949 = vsel %vm625, %v918, 0
        %v952 = vsel %vm625, %v919, 0
        %v955 = vsel %vm625, %v920, 0
        %v958 = vsel %vm625, %v921, 0
        %v961 = vsel %vm625, %v922, 0
        %v964 = vsel %vm625, %v923, 0
        %v967 = vsel %vm625, %v924, 0
        %v970 = vsel %vm625, %v925, 0
        %v973 = vsel %vm625, %v926, 0
        %v976 = vsel %vm625, %v927, 0
        %v979 = vsel %vm625, %v928, 0
        %v982 = vsel %vm625, %v929, 0
        %984 = vmatprep.subr.mxu0 0.0
        %985 = vmatpush1.msra.mxu0 %v609
        %986 = vmatprep.subr.mxu0 0.0
        %987 = vmatpush1.msra.mxu0 %v610
        %988 = vmatprep.subr.mxu0 0.0
        %989 = vmatpush1.msra.mxu0 %v611
        %990 = vmatprep.subr.mxu0 0.0
        %991 = vmatpush1.msra.mxu0 %v612
        %992 = vmatprep.subr.mxu0 0.0
        %993 = vmatpush1.msra.mxu0 0.0
        %994 = vmatprep.subr.mxu0 0.0
        %995 = vmatpush1.msra.mxu0 0.0
        %996 = vmatprep.subr.mxu0 0.0
        %997 = vmatpush1.msra.mxu0 0.0
        %998 = vmatprep.subr.mxu0 0.0
        %999 = vmatpush1.msra.mxu0 0.0
        %1000 = vmatprep.subr.mxu0 0.0
        %1001 = vmatpush1.msra.mxu0 0.0
        %1002 = vmatprep.subr.mxu0 0.0
        %1003 = vmatpush1.msra.mxu0 0.0
        %1004 = vmatprep.subr.mxu0 0.0
        %1005 = vmatpush1.msra.mxu0 0.0
        %1006 = vmatprep.subr.mxu0 0.0
        %1007 = vmatpush1.msra.mxu0 0.0
        %1008 = vmatprep.subr.mxu0 0.0
        %1009 = vmatpush1.msra.mxu0 0.0
        %1010 = vmatprep.subr.mxu0 0.0
        %1011 = vmatpush1.msra.mxu0 0.0
        %1012 = vmatprep.subr.mxu0 0.0
        %1013 = vmatpush1.msra.mxu0 0.0
        %1014 = vmatprep.subr.mxu0 0.0
        %1015 = vmatpush1.msra.mxu0 0.0
        %1016 = vmatprep.subr.mxu0 0.0
        %1017 = vmatpush1.msra.mxu0 0.0
        %1018 = vmatprep.subr.mxu0 0.0
        %1019 = vmatpush1.msra.mxu0 0.0
        %1020 = vmatprep.subr.mxu0 0.0
        %1021 = vmatpush1.msra.mxu0 0.0
        %1022 = vmatprep.subr.mxu0 0.0
        %1023 = vmatpush1.msra.mxu0 0.0
        %1024 = vmatprep.subr.mxu0 0.0
        %1025 = vmatpush1.msra.mxu0 0.0
        %1026 = vmatprep.subr.mxu0 0.0
        %1027 = vmatpush1.msra.mxu0 0.0
        %1028 = vmatprep.subr.mxu0 0.0
        %1029 = vmatpush1.msra.mxu0 0.0
        %1030 = vmatprep.subr.mxu0 0.0
        %1031 = vmatpush1.msra.mxu0 0.0
        %1032 = vmatprep.subr.mxu0 0.0
        %1033 = vmatpush1.msra.mxu0 0.0
        %1034 = vmatprep.subr.mxu0 0.0
        %1035 = vmatpush1.msra.mxu0 0.0
        %1036 = vmatprep.subr.mxu0 0.0
        %1037 = vmatpush1.msra.mxu0 0.0
        %1038 = vmatprep.subr.mxu0 0.0
        %1039 = vmatpush1.msra.mxu0 0.0
        %1040 = vmatprep.subr.mxu0 0.0
        %1041 = vmatpush1.msra.mxu0 0.0
        %1042 = vmatprep.subr.mxu0 0.0
        %1043 = vmatpush1.msra.mxu0 0.0
        %1044 = vmatprep.subr.mxu0 0.0
        %1045 = vmatpush1.msra.mxu0 0.0
        %1046 = vmatprep.subr.mxu0 0.0
        %1047 = vmatpush1.msra.mxu0 0.0
        %1048 = vmatprep.mubr.f32.mxu0 0.0
        %1049 = vmatmul.mubr.f32.gmra.mrb[0].mxu0 %v937
        %v1050 = vpop.f32.mrb[0].mxu0
        %v1051 = vadd.f32 %v934, %v1050
        %v1052 = vpop.f32.mrb[0].mxu0
        %1053 = vmatprep.mubr.f32.mxu0 0.0
        %1054 = vmatmul.mubr.f32.gmra.mrb[0].mxu0 %v940
        %v1055 = vpop.f32.mrb[0].mxu0
        %v1056 = vadd.f32 %v934, %v1055
        %v1057 = vpop.f32.mrb[0].mxu0
        %1058 = vmatprep.mubr.f32.mxu0 0.0
        %1059 = vmatmul.mubr.f32.gmra.mrb[0].mxu0 %v943
        %v1060 = vpop.f32.mrb[0].mxu0
        %v1061 = vadd.f32 %v934, %v1060
        %v1062 = vpop.f32.mrb[0].mxu0
        %1063 = vmatprep.mubr.f32.mxu0 0.0
        %1064 = vmatmul.mubr.f32.gmra.mrb[0].mxu0 %v946
        %v1065 = vpop.f32.mrb[0].mxu0
        %v1066 = vadd.f32 %v934, %v1065
        %v1067 = vpop.f32.mrb[0].mxu0
        %1068 = vmatprep.mubr.f32.mxu0 0.0
        %1069 = vmatmul.mubr.f32.gmra.mrb[0].mxu0 %v949
        %v1070 = vpop.f32.mrb[0].mxu0
        %v1071 = vadd.f32 %v934, %v1070
        %v1072 = vpop.f32.mrb[0].mxu0
        %1073 = vmatprep.mubr.f32.mxu0 0.0
        %1074 = vmatmul.mubr.f32.gmra.mrb[0].mxu0 %v952
        %v1075 = vpop.f32.mrb[0].mxu0
        %v1076 = vadd.f32 %v934, %v1075
        %v1077 = vpop.f32.mrb[0].mxu0
        %1078 = vmatprep.mubr.f32.mxu0 0.0
        %1079 = vmatmul.mubr.f32.gmra.mrb[0].mxu0 %v955
        %v1080 = vpop.f32.mrb[0].mxu0
        %v1081 = vadd.f32 %v934, %v1080
        %v1082 = vpop.f32.mrb[0].mxu0
        %1083 = vmatprep.mubr.f32.mxu0 0.0
        %1084 = vmatmul.mubr.f32.gmra.mrb[0].mxu0 %v958
        %v1085 = vpop.f32.mrb[0].mxu0
        %v1086 = vadd.f32 %v934, %v1085
        %v1087 = vpop.f32.mrb[0].mxu0
        %1088 = vmatprep.mubr.f32.mxu0 0.0
        %1089 = vmatmul.mubr.f32.gmra.mrb[0].mxu0 %v961
        %v1090 = vpop.f32.mrb[0].mxu0
        %v1091 = vadd.f32 %v934, %v1090
        %v1092 = vpop.f32.mrb[0].mxu0
        %1093 = vmatprep.mubr.f32.mxu0 0.0
        %1094 = vmatmul.mubr.f32.gmra.mrb[0].mxu0 %v964
        %v1095 = vpop.f32.mrb[0].mxu0
        %v1096 = vadd.f32 %v934, %v1095
        %v1097 = vpop.f32.mrb[0].mxu0
        %1098 = vmatprep.mubr.f32.mxu0 0.0
        %1099 = vmatmul.mubr.f32.gmra.mrb[0].mxu0 %v967
        %v1100 = vpop.f32.mrb[0].mxu0
        %v1101 = vadd.f32 %v934, %v1100
        %v1102 = vpop.f32.mrb[0].mxu0
        %1103 = vmatprep.mubr.f32.mxu0 0.0
        %1104 = vmatmul.mubr.f32.gmra.mrb[0].mxu0 %v970
        %v1105 = vpop.f32.mrb[0].mxu0
        %v1106 = vadd.f32 %v934, %v1105
        %v1107 = vpop.f32.mrb[0].mxu0
        %1108 = vmatprep.mubr.f32.mxu0 0.0
        %1109 = vmatmul.mubr.f32.gmra.mrb[0].mxu0 %v973
        %v1110 = vpop.f32.mrb[0].mxu0
        %v1111 = vadd.f32 %v934, %v1110
        %v1112 = vpop.f32.mrb[0].mxu0
        %1113 = vmatprep.mubr.f32.mxu0 0.0
        %1114 = vmatmul.mubr.f32.gmra.mrb[0].mxu0 %v976
        %v1115 = vpop.f32.mrb[0].mxu0
        %v1116 = vadd.f32 %v934, %v1115
        %v1117 = vpop.f32.mrb[0].mxu0
        %1118 = vmatprep.mubr.f32.mxu0 0.0
        %1119 = vmatmul.mubr.f32.gmra.mrb[0].mxu0 %v979
        %v1120 = vpop.f32.mrb[0].mxu0
        %v1121 = vadd.f32 %v934, %v1120
        %v1122 = vpop.f32.mrb[0].mxu0
        %1123 = vmatprep.mubr.f32.mxu0 0.0
        %1124 = vmatmul.mubr.f32.gmra.mrb[0].mxu0 %v982
        %v1125 = vpop.f32.mrb[0].mxu0
        %v1126 = vadd.f32 %v934, %v1125
        %v1127 = vpop.f32.mrb[0].mxu0
        %1128 = vdwg.mxu0
        %v1130 = vlaneseq
        %v1131 = vshrl.u32 %v1130, 7
        %v1132 = vsub.s32 0, %v1131
        %v1133 = vrot.slane %v616, %v1132
        %v1135 = vadd.f32 %v696, %v1133
        %v1136 = vmul.f32 %v1135, 0.35355338
        %v1138 = vlaneseq
        %v1139 = vshrl.u32 %v1138, 7
        %v1140 = vsub.s32 0, %v1139
        %v1141 = vrot.slane %v617, %v1140
        %v1143 = vadd.f32 %v696, %v1141
        %v1144 = vmul.f32 %v1143, 0.35355338
        %v1145 = vld [vmem:[%s593] sm:$0x1]
        %v1146 = vld [vmem:[%s596] sm:$0x1]
        %v1147 = vld [vmem:[%s3] sm:$0xff]
        %v1148 = vld [vmem:[%s3 + $0x8] sm:$0xff]
        %vm1149 = vcmask 64512
        %v1151 = vsel %vm1149, %v1144, 0
        %1153 = vmatprep.subr.mxu0 %v1148
        %1154 = vmatpush1.msra.mxu0 %v1147
        %1155 = vmatprep.subr.mxu0 0.0
        %1156 = vmatpush1.msra.mxu0 0.0
        %1157 = vmatprep.subr.mxu0 0.0
        %1158 = vmatpush1.msra.mxu0 0.0
        %1159 = vmatprep.subr.mxu0 0.0
        %1160 = vmatpush1.msra.mxu0 0.0
        %1161 = vmatprep.subr.mxu0 0.0
        %1162 = vmatpush1.msra.mxu0 0.0
        %1163 = vmatprep.subr.mxu0 0.0
        %1164 = vmatpush1.msra.mxu0 0.0
        %1165 = vmatprep.subr.mxu0 0.0
        %1166 = vmatpush1.msra.mxu0 0.0
        %1167 = vmatprep.subr.mxu0 0.0
        %1168 = vmatpush1.msra.mxu0 0.0
        %1169 = vmatprep.subr.mxu0 0.0
        %1170 = vmatpush1.msra.mxu0 0.0
        %1171 = vmatprep.subr.mxu0 0.0
        %1172 = vmatpush1.msra.mxu0 0.0
        %1173 = vmatprep.subr.mxu0 0.0
        %1174 = vmatpush1.msra.mxu0 0.0
        %1175 = vmatprep.subr.mxu0 0.0
        %1176 = vmatpush1.msra.mxu0 0.0
        %1177 = vmatprep.subr.mxu0 0.0
        %1178 = vmatpush1.msra.mxu0 0.0
        %1179 = vmatprep.subr.mxu0 0.0
        %1180 = vmatpush1.msra.mxu0 0.0
        %1181 = vmatprep.subr.mxu0 0.0
        %1182 = vmatpush1.msra.mxu0 0.0
        %1183 = vmatprep.subr.mxu0 0.0
        %1184 = vmatpush1.msra.mxu0 0.0
        %1185 = vmatprep.subr.mxu0 0.0
        %1186 = vmatpush1.msra.mxu0 0.0
        %1187 = vmatprep.subr.mxu0 0.0
        %1188 = vmatpush1.msra.mxu0 0.0
        %1189 = vmatprep.subr.mxu0 0.0
        %1190 = vmatpush1.msra.mxu0 0.0
        %1191 = vmatprep.subr.mxu0 0.0
        %1192 = vmatpush1.msra.mxu0 0.0
        %1193 = vmatprep.subr.mxu0 0.0
        %1194 = vmatpush1.msra.mxu0 0.0
        %1195 = vmatprep.subr.mxu0 0.0
        %1196 = vmatpush1.msra.mxu0 0.0
        %1197 = vmatprep.subr.mxu0 0.0
        %1198 = vmatpush1.msra.mxu0 0.0
        %1199 = vmatprep.subr.mxu0 0.0
        %1200 = vmatpush1.msra.mxu0 0.0
        %1201 = vmatprep.subr.mxu0 0.0
        %1202 = vmatpush1.msra.mxu0 0.0
        %1203 = vmatprep.subr.mxu0 0.0
        %1204 = vmatpush1.msra.mxu0 0.0
        %1205 = vmatprep.subr.mxu0 0.0
        %1206 = vmatpush1.msra.mxu0 0.0
        %1207 = vmatprep.subr.mxu0 0.0
        %1208 = vmatpush1.msra.mxu0 0.0
        %1209 = vmatprep.subr.mxu0 0.0
        %1210 = vmatpush1.msra.mxu0 0.0
        %1211 = vmatprep.subr.mxu0 0.0
        %1212 = vmatpush1.msra.mxu0 0.0
        %1213 = vmatprep.subr.mxu0 0.0
        %1214 = vmatpush1.msra.mxu0 0.0
        %1215 = vmatprep.subr.mxu0 0.0
        %1216 = vmatpush1.msra.mxu0 0.0
        %1217 = vmatprep.mubr.f32.mxu0 0.0
        %1218 = vmatmul.mubr.f32.gmra.mrb[0].mxu0 %v1151
        %v1219 = vpop.f32.mrb[0].mxu0
        %v1220 = vadd.f32 0.0, %v1219
        %v1221 = vpop.f32.mrb[0].mxu0
        %v1222 = vadd.f32 0.0, %v1221
        %1223 = vdwg.mxu0
        %s1225 = sor.u32 256, 121
        %1226 = vrot.lane.b32.xlu0 %v1220, %s1225
        %v1227 = vpop.permute.xlu0 %1226
        %s1229 = sor.u32 256, 121
        %1230 = vrot.lane.b32.xlu0 %v1222, %s1229
        %v1231 = vpop.permute.xlu0 %1230
        %v1232 = vlaneseq
        %v1233 = vshrl.u32 %v1232, 7
        %v1234 = vadd.s32 %v1233, 121
        %v1235 = vlaneseq
        %v1236 = vand.u32 %v1235, 127
        %vm1237 = vcmp.lt.s32.totalorder %v1236, %v1234
        %v1238 = vsel %vm1237, %v1227, %v1231
        %v1240 = vsel %vm1149, %v1136, 0
        %v1243 = vsel %vm1149, %v836, 0
        %v1246 = vsel %vm1149, %v841, 0
        %v1249 = vsel %vm1149, %v846, 0
        %v1252 = vsel %vm1149, %v851, 0
        %v1255 = vsel %vm1149, %v856, 0
        %v1258 = vsel %vm1149, %v861, 0
        %v1261 = vsel %vm1149, %v866, 0
        %v1264 = vsel %vm1149, %v871, 0
        %v1267 = vsel %vm1149, %v876, 0
        %v1270 = vsel %vm1149, %v881, 0
        %v1273 = vsel %vm1149, %v886, 0
        %v1276 = vsel %vm1149, %v891, 0
        %v1279 = vsel %vm1149, %v896, 0
        %v1282 = vsel %vm1149, %v901, 0
        %v1285 = vsel %vm1149, %v906, 0
        %v1288 = vsel %vm1149, %v911, 0
        %1290 = vmatprep.subr.mxu0 0.0
        %1291 = vmatpush1.xpose.msra.mxu0 %v1243
        %1292 = vmatprep.subr.mxu0 0.0
        %1293 = vmatpush1.xpose.msra.mxu0 %v1246
        %1294 = vmatprep.subr.mxu0 0.0
        %1295 = vmatpush1.xpose.msra.mxu0 %v1249
        %1296 = vmatprep.subr.mxu0 0.0
        %1297 = vmatpush1.xpose.msra.mxu0 %v1252
        %1298 = vmatprep.subr.mxu0 0.0
        %1299 = vmatpush1.xpose.msra.mxu0 %v1255
        %1300 = vmatprep.subr.mxu0 0.0
        %1301 = vmatpush1.xpose.msra.mxu0 %v1258
        %1302 = vmatprep.subr.mxu0 0.0
        %1303 = vmatpush1.xpose.msra.mxu0 %v1261
        %1304 = vmatprep.subr.mxu0 0.0
        %1305 = vmatpush1.xpose.msra.mxu0 %v1264
        %1306 = vmatprep.subr.mxu0 0.0
        %1307 = vmatpush1.xpose.msra.mxu0 %v1267
        %1308 = vmatprep.subr.mxu0 0.0
        %1309 = vmatpush1.xpose.msra.mxu0 %v1270
        %1310 = vmatprep.subr.mxu0 0.0
        %1311 = vmatpush1.xpose.msra.mxu0 %v1273
        %1312 = vmatprep.subr.mxu0 0.0
        %1313 = vmatpush1.xpose.msra.mxu0 %v1276
        %1314 = vmatprep.subr.mxu0 0.0
        %1315 = vmatpush1.xpose.msra.mxu0 %v1279
        %1316 = vmatprep.subr.mxu0 0.0
        %1317 = vmatpush1.xpose.msra.mxu0 %v1282
        %1318 = vmatprep.subr.mxu0 0.0
        %1319 = vmatpush1.xpose.msra.mxu0 %v1285
        %1320 = vmatprep.subr.mxu0 0.0
        %1321 = vmatpush1.xpose.msra.mxu0 %v1288
        %1322 = vmatprep.subr.mxu0 0.0
        %1323 = vmatpush1.xpose.msra.mxu0 0.0
        %1324 = vmatprep.subr.mxu0 0.0
        %1325 = vmatpush1.xpose.msra.mxu0 0.0
        %1326 = vmatprep.subr.mxu0 0.0
        %1327 = vmatpush1.xpose.msra.mxu0 0.0
        %1328 = vmatprep.subr.mxu0 0.0
        %1329 = vmatpush1.xpose.msra.mxu0 0.0
        %1330 = vmatprep.subr.mxu0 0.0
        %1331 = vmatpush1.xpose.msra.mxu0 0.0
        %1332 = vmatprep.subr.mxu0 0.0
        %1333 = vmatpush1.xpose.msra.mxu0 0.0
        %1334 = vmatprep.subr.mxu0 0.0
        %1335 = vmatpush1.xpose.msra.mxu0 0.0
        %1336 = vmatprep.subr.mxu0 0.0
        %1337 = vmatpush1.xpose.msra.mxu0 0.0
        %1338 = vmatprep.subr.mxu0 0.0
        %1339 = vmatpush1.xpose.msra.mxu0 0.0
        %1340 = vmatprep.subr.mxu0 0.0
        %1341 = vmatpush1.xpose.msra.mxu0 0.0
        %1342 = vmatprep.subr.mxu0 0.0
        %1343 = vmatpush1.xpose.msra.mxu0 0.0
        %1344 = vmatprep.subr.mxu0 0.0
        %1345 = vmatpush1.xpose.msra.mxu0 0.0
        %1346 = vmatprep.subr.mxu0 0.0
        %1347 = vmatpush1.xpose.msra.mxu0 0.0
        %1348 = vmatprep.subr.mxu0 0.0
        %1349 = vmatpush1.xpose.msra.mxu0 0.0
        %1350 = vmatprep.subr.mxu0 0.0
        %1351 = vmatpush1.xpose.msra.mxu0 0.0
        %1352 = vmatprep.subr.mxu0 0.0
        %1353 = vmatpush1.xpose.msra.mxu0 0.0
        %1354 = vmatprep.mubr.f32.mxu0 0.0
        %1355 = vmatmul.mubr.f32.gmra.mrb[0].mxu0 %v1240
        %v1356 = vpop.f32.mrb[0].mxu0
        %v1357 = vadd.f32 %v1238, %v1356
        %v1358 = vpop.f32.mrb[0].mxu0
        %1359 = vdwg.mxu0
        %v1361 = vlaneseq
        %v1362 = vshrl.u32 %v1361, 7
        %v1363 = vsub.s32 0, %v1362
        %v1364 = vrot.slane %v1145, %v1363
        %v1366 = vadd.f32 %v1357, %v1364
        %1367 = vmax.xlane.f32.xlu0 %v1366
        %v1368 = vpop.xlane.xlu0 %1367
        %v1369 = vsub.f32 %v1366, %v1368
        %v1370 = vmul.f32 %v1369, 1.442695
        %v1371 = vpow.pop %v1370
        %1372 = vadd.xlane.f32.xlu0 %v1371
        %v1373 = vpop.xlane.xlu0 %1372
        %v1374 = vrcp.pop %v1373
        %v1375 = vmul.f32 %v1371, %v1374
        %v1377 = vlaneseq
        %v1378 = vshrl.u32 %v1377, 7
        %v1379 = vsub.s32 0, %v1378
        %v1380 = vrot.slane %v1146, %v1379
        %v1382 = vmul.f32 %v1375, %v1380
        %1383 = vmatprep.subr.mxu0 0.0
        %1384 = vmatpush1.msra.mxu0 %v1051
        %1385 = vmatprep.subr.mxu0 0.0
        %1386 = vmatpush1.msra.mxu0 %v1056
        %1387 = vmatprep.subr.mxu0 0.0
        %1388 = vmatpush1.msra.mxu0 %v1061
        %1389 = vmatprep.subr.mxu0 0.0
        %1390 = vmatpush1.msra.mxu0 %v1066
        %1391 = vmatprep.subr.mxu0 0.0
        %1392 = vmatpush1.msra.mxu0 %v1071
        %1393 = vmatprep.subr.mxu0 0.0
        %1394 = vmatpush1.msra.mxu0 %v1076
        %1395 = vmatprep.subr.mxu0 0.0
        %1396 = vmatpush1.msra.mxu0 %v1081
        %1397 = vmatprep.subr.mxu0 0.0
        %1398 = vmatpush1.msra.mxu0 %v1086
        %1399 = vmatprep.subr.mxu0 0.0
        %1400 = vmatpush1.msra.mxu0 %v1091
        %1401 = vmatprep.subr.mxu0 0.0
        %1402 = vmatpush1.msra.mxu0 %v1096
        %1403 = vmatprep.subr.mxu0 0.0
        %1404 = vmatpush1.msra.mxu0 %v1101
        %1405 = vmatprep.subr.mxu0 0.0
        %1406 = vmatpush1.msra.mxu0 %v1106
        %1407 = vmatprep.subr.mxu0 0.0
        %1408 = vmatpush1.msra.mxu0 %v1111
        %1409 = vmatprep.subr.mxu0 0.0
        %1410 = vmatpush1.msra.mxu0 %v1116
        %1411 = vmatprep.subr.mxu0 0.0
        %1412 = vmatpush1.msra.mxu0 %v1121
        %1413 = vmatprep.subr.mxu0 0.0
        %1414 = vmatpush1.msra.mxu0 %v1126
        %1415 = vmatprep.subr.mxu0 0.0
        %1416 = vmatpush1.msra.mxu0 0.0
        %1417 = vmatprep.subr.mxu0 0.0
        %1418 = vmatpush1.msra.mxu0 0.0
        %1419 = vmatprep.subr.mxu0 0.0
        %1420 = vmatpush1.msra.mxu0 0.0
        %1421 = vmatprep.subr.mxu0 0.0
        %1422 = vmatpush1.msra.mxu0 0.0
        %1423 = vmatprep.subr.mxu0 0.0
        %1424 = vmatpush1.msra.mxu0 0.0
        %1425 = vmatprep.subr.mxu0 0.0
        %1426 = vmatpush1.msra.mxu0 0.0
        %1427 = vmatprep.subr.mxu0 0.0
        %1428 = vmatpush1.msra.mxu0 0.0
        %1429 = vmatprep.subr.mxu0 0.0
        %1430 = vmatpush1.msra.mxu0 0.0
        %1431 = vmatprep.subr.mxu0 0.0
        %1432 = vmatpush1.msra.mxu0 0.0
        %1433 = vmatprep.subr.mxu0 0.0
        %1434 = vmatpush1.msra.mxu0 0.0
        %1435 = vmatprep.subr.mxu0 0.0
        %1436 = vmatpush1.msra.mxu0 0.0
        %1437 = vmatprep.subr.mxu0 0.0
        %1438 = vmatpush1.msra.mxu0 0.0
        %1439 = vmatprep.subr.mxu0 0.0
        %1440 = vmatpush1.msra.mxu0 0.0
        %1441 = vmatprep.subr.mxu0 0.0
        %1442 = vmatpush1.msra.mxu0 0.0
        %1443 = vmatprep.subr.mxu0 0.0
        %1444 = vmatpush1.msra.mxu0 0.0
        %1445 = vmatprep.subr.mxu0 0.0
        %1446 = vmatpush1.msra.mxu0 0.0
        %1447 = vmatprep.mubr.f32.mxu0 0.0
        %1448 = vmatmul.mubr.f32.gmra.mrb[0].mxu0 %v1382
        %v1449 = vpop.f32.mrb[0].mxu0
        %v1450 = vadd.f32 0.0, %v1449
        %v1451 = vpop.f32.mrb[0].mxu0
        %1452 = vdwg.mxu0
        %v1453 = vld [vmem:[%s3 + $0x10] sm:$0xff]
        %v1454 = vld [vmem:[%s3 + $0x18] sm:$0xff]
        %1455 = vrot.lane.b32.xlu0 %v1144, 120
        %v1456 = vpop.permute.xlu0 %1455
        %v1457 = vsel %vm1149, %v1456, 0
        %1459 = vmatprep.subr.mxu0 %v1454
        %1460 = vmatpush1.msra.mxu0 %v1453
        %1461 = vmatprep.subr.mxu0 0.0
        %1462 = vmatpush1.msra.mxu0 0.0
        %1463 = vmatprep.subr.mxu0 0.0
        %1464 = vmatpush1.msra.mxu0 0.0
        %1465 = vmatprep.subr.mxu0 0.0
        %1466 = vmatpush1.msra.mxu0 0.0
        %1467 = vmatprep.subr.mxu0 0.0
        %1468 = vmatpush1.msra.mxu0 0.0
        %1469 = vmatprep.subr.mxu0 0.0
        %1470 = vmatpush1.msra.mxu0 0.0
        %1471 = vmatprep.subr.mxu0 0.0
        %1472 = vmatpush1.msra.mxu0 0.0
        %1473 = vmatprep.subr.mxu0 0.0
        %1474 = vmatpush1.msra.mxu0 0.0
        %1475 = vmatprep.subr.mxu0 0.0
        %1476 = vmatpush1.msra.mxu0 0.0
        %1477 = vmatprep.subr.mxu0 0.0
        %1478 = vmatpush1.msra.mxu0 0.0
        %1479 = vmatprep.subr.mxu0 0.0
        %1480 = vmatpush1.msra.mxu0 0.0
        %1481 = vmatprep.subr.mxu0 0.0
        %1482 = vmatpush1.msra.mxu0 0.0
        %1483 = vmatprep.subr.mxu0 0.0
        %1484 = vmatpush1.msra.mxu0 0.0
        %1485 = vmatprep.subr.mxu0 0.0
        %1486 = vmatpush1.msra.mxu0 0.0
        %1487 = vmatprep.subr.mxu0 0.0
        %1488 = vmatpush1.msra.mxu0 0.0
        %1489 = vmatprep.subr.mxu0 0.0
        %1490 = vmatpush1.msra.mxu0 0.0
        %1491 = vmatprep.subr.mxu0 0.0
        %1492 = vmatpush1.msra.mxu0 0.0
        %1493 = vmatprep.subr.mxu0 0.0
        %1494 = vmatpush1.msra.mxu0 0.0
        %1495 = vmatprep.subr.mxu0 0.0
        %1496 = vmatpush1.msra.mxu0 0.0
        %1497 = vmatprep.subr.mxu0 0.0
        %1498 = vmatpush1.msra.mxu0 0.0
        %1499 = vmatprep.subr.mxu0 0.0
        %1500 = vmatpush1.msra.mxu0 0.0
        %1501 = vmatprep.subr.mxu0 0.0
        %1502 = vmatpush1.msra.mxu0 0.0
        %1503 = vmatprep.subr.mxu0 0.0
        %1504 = vmatpush1.msra.mxu0 0.0
        %1505 = vmatprep.subr.mxu0 0.0
        %1506 = vmatpush1.msra.mxu0 0.0
        %1507 = vmatprep.subr.mxu0 0.0
        %1508 = vmatpush1.msra.mxu0 0.0
        %1509 = vmatprep.subr.mxu0 0.0
        %1510 = vmatpush1.msra.mxu0 0.0
        %1511 = vmatprep.subr.mxu0 0.0
        %1512 = vmatpush1.msra.mxu0 0.0
        %1513 = vmatprep.subr.mxu0 0.0
        %1514 = vmatpush1.msra.mxu0 0.0
        %1515 = vmatprep.subr.mxu0 0.0
        %1516 = vmatpush1.msra.mxu0 0.0
        %1517 = vmatprep.subr.mxu0 0.0
        %1518 = vmatpush1.msra.mxu0 0.0
        %1519 = vmatprep.subr.mxu0 0.0
        %1520 = vmatpush1.msra.mxu0 0.0
        %1521 = vmatprep.subr.mxu0 0.0
        %1522 = vmatpush1.msra.mxu0 0.0
        %1523 = vmatprep.mubr.f32.mxu0 0.0
        %1524 = vmatmul.mubr.f32.gmra.mrb[0].mxu0 %v1457
        %v1525 = vpop.f32.mrb[0].mxu0
        %v1526 = vadd.f32 0.0, %v1525
        %v1527 = vpop.f32.mrb[0].mxu0
        %v1528 = vadd.f32 0.0, %v1527
        %1529 = vdwg.mxu0
        %s1531 = sor.u32 256, 121
        %1532 = vrot.lane.b32.xlu0 %v1526, %s1531
        %v1533 = vpop.permute.xlu0 %1532
        %s1535 = sor.u32 256, 121
        %1536 = vrot.lane.b32.xlu0 %v1528, %s1535
        %v1537 = vpop.permute.xlu0 %1536
        %v1538 = vsel %vm1237, %v1533, %v1537
        %1539 = vrot.lane.b32.xlu0 %v1136, 120
        %v1540 = vpop.permute.xlu0 %1539
        %1541 = vrot.lane.b32.xlu0 %v836, 120
        %v1542 = vpop.permute.xlu0 %1541
        %1543 = vrot.lane.b32.xlu0 %v841, 120
        %v1544 = vpop.permute.xlu0 %1543
        %1545 = vrot.lane.b32.xlu0 %v846, 120
        %v1546 = vpop.permute.xlu0 %1545
        %1547 = vrot.lane.b32.xlu0 %v851, 120
        %v1548 = vpop.permute.xlu0 %1547
        %1549 = vrot.lane.b32.xlu0 %v856, 120
        %v1550 = vpop.permute.xlu0 %1549
        %1551 = vrot.lane.b32.xlu0 %v861, 120
        %v1552 = vpop.permute.xlu0 %1551
        %1553 = vrot.lane.b32.xlu0 %v866, 120
        %v1554 = vpop.permute.xlu0 %1553
        %1555 = vrot.lane.b32.xlu0 %v871, 120
        %v1556 = vpop.permute.xlu0 %1555
        %1557 = vrot.lane.b32.xlu0 %v876, 120
        %v1558 = vpop.permute.xlu0 %1557
        %1559 = vrot.lane.b32.xlu0 %v881, 120
        %v1560 = vpop.permute.xlu0 %1559
        %1561 = vrot.lane.b32.xlu0 %v886, 120
        %v1562 = vpop.permute.xlu0 %1561
        %1563 = vrot.lane.b32.xlu0 %v891, 120
        %v1564 = vpop.permute.xlu0 %1563
        %1565 = vrot.lane.b32.xlu0 %v896, 120
        %v1566 = vpop.permute.xlu0 %1565
        %1567 = vrot.lane.b32.xlu0 %v901, 120
        %v1568 = vpop.permute.xlu0 %1567
        %1569 = vrot.lane.b32.xlu0 %v906, 120
        %v1570 = vpop.permute.xlu0 %1569
        %1571 = vrot.lane.b32.xlu0 %v911, 120
        %v1572 = vpop.permute.xlu0 %1571
        %v1573 = vsel %vm1149, %v1540, 0
        %v1575 = vsel %vm1149, %v1542, 0
        %v1577 = vsel %vm1149, %v1544, 0
        %v1579 = vsel %vm1149, %v1546, 0
        %v1581 = vsel %vm1149, %v1548, 0
        %v1583 = vsel %vm1149, %v1550, 0
        %v1585 = vsel %vm1149, %v1552, 0
        %v1587 = vsel %vm1149, %v1554, 0
        %v1589 = vsel %vm1149, %v1556, 0
        %v1591 = vsel %vm1149, %v1558, 0
        %v1593 = vsel %vm1149, %v1560, 0
        %v1595 = vsel %vm1149, %v1562, 0
        %v1597 = vsel %vm1149, %v1564, 0
        %v1599 = vsel %vm1149, %v1566, 0
        %v1601 = vsel %vm1149, %v1568, 0
        %v1603 = vsel %vm1149, %v1570, 0
        %v1605 = vsel %vm1149, %v1572, 0
        %1607 = vmatprep.subr.mxu0 0.0
        %1608 = vmatpush1.xpose.msra.mxu0 %v1575
        %1609 = vmatprep.subr.mxu0 0.0
        %1610 = vmatpush1.xpose.msra.mxu0 %v1577
        %1611 = vmatprep.subr.mxu0 0.0
        %1612 = vmatpush1.xpose.msra.mxu0 %v1579
        %1613 = vmatprep.subr.mxu0 0.0
        %1614 = vmatpush1.xpose.msra.mxu0 %v1581
        %1615 = vmatprep.subr.mxu0 0.0
        %1616 = vmatpush1.xpose.msra.mxu0 %v1583
        %1617 = vmatprep.subr.mxu0 0.0
        %1618 = vmatpush1.xpose.msra.mxu0 %v1585
        %1619 = vmatprep.subr.mxu0 0.0
        %1620 = vmatpush1.xpose.msra.mxu0 %v1587
        %1621 = vmatprep.subr.mxu0 0.0
        %1622 = vmatpush1.xpose.msra.mxu0 %v1589
        %1623 = vmatprep.subr.mxu0 0.0
        %1624 = vmatpush1.xpose.msra.mxu0 %v1591
        %1625 = vmatprep.subr.mxu0 0.0
        %1626 = vmatpush1.xpose.msra.mxu0 %v1593
        %1627 = vmatprep.subr.mxu0 0.0
        %1628 = vmatpush1.xpose.msra.mxu0 %v1595
        %1629 = vmatprep.subr.mxu0 0.0
        %1630 = vmatpush1.xpose.msra.mxu0 %v1597
        %1631 = vmatprep.subr.mxu0 0.0
        %1632 = vmatpush1.xpose.msra.mxu0 %v1599
        %1633 = vmatprep.subr.mxu0 0.0
        %1634 = vmatpush1.xpose.msra.mxu0 %v1601
        %1635 = vmatprep.subr.mxu0 0.0
        %1636 = vmatpush1.xpose.msra.mxu0 %v1603
        %1637 = vmatprep.subr.mxu0 0.0
        %1638 = vmatpush1.xpose.msra.mxu0 %v1605
        %1639 = vmatprep.subr.mxu0 0.0
        %1640 = vmatpush1.xpose.msra.mxu0 0.0
        %1641 = vmatprep.subr.mxu0 0.0
        %1642 = vmatpush1.xpose.msra.mxu0 0.0
        %1643 = vmatprep.subr.mxu0 0.0
        %1644 = vmatpush1.xpose.msra.mxu0 0.0
        %1645 = vmatprep.subr.mxu0 0.0
        %1646 = vmatpush1.xpose.msra.mxu0 0.0
        %1647 = vmatprep.subr.mxu0 0.0
        %1648 = vmatpush1.xpose.msra.mxu0 0.0
        %1649 = vmatprep.subr.mxu0 0.0
        %1650 = vmatpush1.xpose.msra.mxu0 0.0
        %1651 = vmatprep.subr.mxu0 0.0
        %1652 = vmatpush1.xpose.msra.mxu0 0.0
        %1653 = vmatprep.subr.mxu0 0.0
        %1654 = vmatpush1.xpose.msra.mxu0 0.0
        %1655 = vmatprep.subr.mxu0 0.0
        %1656 = vmatpush1.xpose.msra.mxu0 0.0
        %1657 = vmatprep.subr.mxu0 0.0
        %1658 = vmatpush1.xpose.msra.mxu0 0.0
        %1659 = vmatprep.subr.mxu0 0.0
        %1660 = vmatpush1.xpose.msra.mxu0 0.0
        %1661 = vmatprep.subr.mxu0 0.0
        %1662 = vmatpush1.xpose.msra.mxu0 0.0
        %1663 = vmatprep.subr.mxu0 0.0
        %1664 = vmatpush1.xpose.msra.mxu0 0.0
        %1665 = vmatprep.subr.mxu0 0.0
        %1666 = vmatpush1.xpose.msra.mxu0 0.0
        %1667 = vmatprep.subr.mxu0 0.0
        %1668 = vmatpush1.xpose.msra.mxu0 0.0
        %1669 = vmatprep.subr.mxu0 0.0
        %1670 = vmatpush1.xpose.msra.mxu0 0.0
        %1671 = vmatprep.mubr.f32.mxu0 0.0
        %1672 = vmatmul.mubr.f32.gmra.mrb[0].mxu0 %v1573
        %v1673 = vpop.f32.mrb[0].mxu0
        %v1674 = vadd.f32 %v1538, %v1673
        %v1675 = vpop.f32.mrb[0].mxu0
        %1676 = vdwg.mxu0
        %v1677 = vadd.f32 %v1674, %v1364
        %1678 = vmax.xlane.f32.xlu0 %v1677
        %v1679 = vpop.xlane.xlu0 %1678
        %v1680 = vsub.f32 %v1677, %v1679
        %v1681 = vmul.f32 %v1680, 1.442695
        %v1682 = vpow.pop %v1681
        %1683 = vadd.xlane.f32.xlu0 %v1682
        %v1684 = vpop.xlane.xlu0 %1683
        %v1685 = vrcp.pop %v1684
        %v1686 = vmul.f32 %v1682, %v1685
        %v1687 = vmul.f32 %v1686, %v1380
        %1704 = vrot.lane.b32.xlu0 %v1051, 120
        %v1705 = vpop.permute.xlu0 %1704
        %1706 = vrot.lane.b32.xlu0 %v1056, 120
        %v1707 = vpop.permute.xlu0 %1706
        %1708 = vrot.lane.b32.xlu0 %v1061, 120
        %v1709 = vpop.permute.xlu0 %1708
        %1710 = vrot.lane.b32.xlu0 %v1066, 120
        %v1711 = vpop.permute.xlu0 %1710
        %1712 = vrot.lane.b32.xlu0 %v1071, 120
        %v1713 = vpop.permute.xlu0 %1712
        %1714 = vrot.lane.b32.xlu0 %v1076, 120
        %v1715 = vpop.permute.xlu0 %1714
        %1716 = vrot.lane.b32.xlu0 %v1081, 120
        %v1717 = vpop.permute.xlu0 %1716
        %1718 = vrot.lane.b32.xlu0 %v1086, 120
        %v1719 = vpop.permute.xlu0 %1718
        %1720 = vrot.lane.b32.xlu0 %v1091, 120
        %v1721 = vpop.permute.xlu0 %1720
        %1722 = vrot.lane.b32.xlu0 %v1096, 120
        %v1723 = vpop.permute.xlu0 %1722
        %1724 = vrot.lane.b32.xlu0 %v1101, 120
        %v1725 = vpop.permute.xlu0 %1724
        %1726 = vrot.lane.b32.xlu0 %v1106, 120
        %v1727 = vpop.permute.xlu0 %1726
        %1728 = vrot.lane.b32.xlu0 %v1111, 120
        %v1729 = vpop.permute.xlu0 %1728
        %1730 = vrot.lane.b32.xlu0 %v1116, 120
        %v1731 = vpop.permute.xlu0 %1730
        %1732 = vrot.lane.b32.xlu0 %v1121, 120
        %v1733 = vpop.permute.xlu0 %1732
        %1734 = vrot.lane.b32.xlu0 %v1126, 120
        %v1735 = vpop.permute.xlu0 %1734
        %1752 = vmatprep.subr.mxu0 0.0
        %1753 = vmatpush1.msra.mxu0 %v1705
        %1754 = vmatprep.subr.mxu0 0.0
        %1755 = vmatpush1.msra.mxu0 %v1707
        %1756 = vmatprep.subr.mxu0 0.0
        %1757 = vmatpush1.msra.mxu0 %v1709
        %1758 = vmatprep.subr.mxu0 0.0
        %1759 = vmatpush1.msra.mxu0 %v1711
        %1760 = vmatprep.subr.mxu0 0.0
        %1761 = vmatpush1.msra.mxu0 %v1713
        %1762 = vmatprep.subr.mxu0 0.0
        %1763 = vmatpush1.msra.mxu0 %v1715
        %1764 = vmatprep.subr.mxu0 0.0
        %1765 = vmatpush1.msra.mxu0 %v1717
        %1766 = vmatprep.subr.mxu0 0.0
        %1767 = vmatpush1.msra.mxu0 %v1719
        %1768 = vmatprep.subr.mxu0 0.0
        %1769 = vmatpush1.msra.mxu0 %v1721
        %1770 = vmatprep.subr.mxu0 0.0
        %1771 = vmatpush1.msra.mxu0 %v1723
        %1772 = vmatprep.subr.mxu0 0.0
        %1773 = vmatpush1.msra.mxu0 %v1725
        %1774 = vmatprep.subr.mxu0 0.0
        %1775 = vmatpush1.msra.mxu0 %v1727
        %1776 = vmatprep.subr.mxu0 0.0
        %1777 = vmatpush1.msra.mxu0 %v1729
        %1778 = vmatprep.subr.mxu0 0.0
        %1779 = vmatpush1.msra.mxu0 %v1731
        %1780 = vmatprep.subr.mxu0 0.0
        %1781 = vmatpush1.msra.mxu0 %v1733
        %1782 = vmatprep.subr.mxu0 0.0
        %1783 = vmatpush1.msra.mxu0 %v1735
        %1784 = vmatprep.subr.mxu0 0.0
        %1785 = vmatpush1.msra.mxu0 0.0
        %1786 = vmatprep.subr.mxu0 0.0
        %1787 = vmatpush1.msra.mxu0 0.0
        %1788 = vmatprep.subr.mxu0 0.0
        %1789 = vmatpush1.msra.mxu0 0.0
        %1790 = vmatprep.subr.mxu0 0.0
        %1791 = vmatpush1.msra.mxu0 0.0
        %1792 = vmatprep.subr.mxu0 0.0
        %1793 = vmatpush1.msra.mxu0 0.0
        %1794 = vmatprep.subr.mxu0 0.0
        %1795 = vmatpush1.msra.mxu0 0.0
        %1796 = vmatprep.subr.mxu0 0.0
        %1797 = vmatpush1.msra.mxu0 0.0
        %1798 = vmatprep.subr.mxu0 0.0
        %1799 = vmatpush1.msra.mxu0 0.0
        %1800 = vmatprep.subr.mxu0 0.0
        %1801 = vmatpush1.msra.mxu0 0.0
        %1802 = vmatprep.subr.mxu0 0.0
        %1803 = vmatpush1.msra.mxu0 0.0
        %1804 = vmatprep.subr.mxu0 0.0
        %1805 = vmatpush1.msra.mxu0 0.0
        %1806 = vmatprep.subr.mxu0 0.0
        %1807 = vmatpush1.msra.mxu0 0.0
        %1808 = vmatprep.subr.mxu0 0.0
        %1809 = vmatpush1.msra.mxu0 0.0
        %1810 = vmatprep.subr.mxu0 0.0
        %1811 = vmatpush1.msra.mxu0 0.0
        %1812 = vmatprep.subr.mxu0 0.0
        %1813 = vmatpush1.msra.mxu0 0.0
        %1814 = vmatprep.subr.mxu0 0.0
        %1815 = vmatpush1.msra.mxu0 0.0
        %1816 = vmatprep.mubr.f32.mxu0 0.0
        %1817 = vmatmul.mubr.f32.gmra.mrb[0].mxu0 %v1687
        %v1818 = vpop.f32.mrb[0].mxu0
        %v1819 = vadd.f32 0.0, %v1818
        %v1820 = vpop.f32.mrb[0].mxu0
        %1821 = vdwg.mxu0
        %v1822 = vld [vmem:[%s3 + $0x20] sm:$0xff]
        %v1823 = vld [vmem:[%s3 + $0x28] sm:$0xff]
        %1824 = vrot.lane.b32.xlu0 %v1144, 112
        %v1825 = vpop.permute.xlu0 %1824
        %v1826 = vsel %vm1149, %v1825, 0
        %1828 = vmatprep.subr.mxu0 %v1823
        %1829 = vmatpush1.msra.mxu0 %v1822
        %1830 = vmatprep.subr.mxu0 0.0
        %1831 = vmatpush1.msra.mxu0 0.0
        %1832 = vmatprep.subr.mxu0 0.0
        %1833 = vmatpush1.msra.mxu0 0.0
        %1834 = vmatprep.subr.mxu0 0.0
        %1835 = vmatpush1.msra.mxu0 0.0
        %1836 = vmatprep.subr.mxu0 0.0
        %1837 = vmatpush1.msra.mxu0 0.0
        %1838 = vmatprep.subr.mxu0 0.0
        %1839 = vmatpush1.msra.mxu0 0.0
        %1840 = vmatprep.subr.mxu0 0.0
        %1841 = vmatpush1.msra.mxu0 0.0
        %1842 = vmatprep.subr.mxu0 0.0
        %1843 = vmatpush1.msra.mxu0 0.0
        %1844 = vmatprep.subr.mxu0 0.0
        %1845 = vmatpush1.msra.mxu0 0.0
        %1846 = vmatprep.subr.mxu0 0.0
        %1847 = vmatpush1.msra.mxu0 0.0
        %1848 = vmatprep.subr.mxu0 0.0
        %1849 = vmatpush1.msra.mxu0 0.0
        %1850 = vmatprep.subr.mxu0 0.0
        %1851 = vmatpush1.msra.mxu0 0.0
        %1852 = vmatprep.subr.mxu0 0.0
        %1853 = vmatpush1.msra.mxu0 0.0
        %1854 = vmatprep.subr.mxu0 0.0
        %1855 = vmatpush1.msra.mxu0 0.0
        %1856 = vmatprep.subr.mxu0 0.0
        %1857 = vmatpush1.msra.mxu0 0.0
        %1858 = vmatprep.subr.mxu0 0.0
        %1859 = vmatpush1.msra.mxu0 0.0
        %1860 = vmatprep.subr.mxu0 0.0
        %1861 = vmatpush1.msra.mxu0 0.0
        %1862 = vmatprep.subr.mxu0 0.0
        %1863 = vmatpush1.msra.mxu0 0.0
        %1864 = vmatprep.subr.mxu0 0.0
        %1865 = vmatpush1.msra.mxu0 0.0
        %1866 = vmatprep.subr.mxu0 0.0
        %1867 = vmatpush1.msra.mxu0 0.0
        %1868 = vmatprep.subr.mxu0 0.0
        %1869 = vmatpush1.msra.mxu0 0.0
        %1870 = vmatprep.subr.mxu0 0.0
        %1871 = vmatpush1.msra.mxu0 0.0
        %1872 = vmatprep.subr.mxu0 0.0
        %1873 = vmatpush1.msra.mxu0 0.0
        %1874 = vmatprep.subr.mxu0 0.0
        %1875 = vmatpush1.msra.mxu0 0.0
        %1876 = vmatprep.subr.mxu0 0.0
        %1877 = vmatpush1.msra.mxu0 0.0
        %1878 = vmatprep.subr.mxu0 0.0
        %1879 = vmatpush1.msra.mxu0 0.0
        %1880 = vmatprep.subr.mxu0 0.0
        %1881 = vmatpush1.msra.mxu0 0.0
        %1882 = vmatprep.subr.mxu0 0.0
        %1883 = vmatpush1.msra.mxu0 0.0
        %1884 = vmatprep.subr.mxu0 0.0
        %1885 = vmatpush1.msra.mxu0 0.0
        %1886 = vmatprep.subr.mxu0 0.0
        %1887 = vmatpush1.msra.mxu0 0.0
        %1888 = vmatprep.subr.mxu0 0.0
        %1889 = vmatpush1.msra.mxu0 0.0
        %1890 = vmatprep.subr.mxu0 0.0
        %1891 = vmatpush1.msra.mxu0 0.0
        %1892 = vmatprep.mubr.f32.mxu0 0.0
        %1893 = vmatmul.mubr.f32.gmra.mrb[0].mxu0 %v1826
        %v1894 = vpop.f32.mrb[0].mxu0
        %v1895 = vadd.f32 0.0, %v1894
        %v1896 = vpop.f32.mrb[0].mxu0
        %v1897 = vadd.f32 0.0, %v1896
        %1898 = vdwg.mxu0
        %s1900 = sor.u32 256, 121
        %1901 = vrot.lane.b32.xlu0 %v1895, %s1900
        %v1902 = vpop.permute.xlu0 %1901
        %s1904 = sor.u32 256, 121
        %1905 = vrot.lane.b32.xlu0 %v1897, %s1904
        %v1906 = vpop.permute.xlu0 %1905
        %v1907 = vsel %vm1237, %v1902, %v1906
        %1908 = vrot.lane.b32.xlu0 %v1136, 112
        %v1909 = vpop.permute.xlu0 %1908
        %1910 = vrot.lane.b32.xlu0 %v836, 112
        %v1911 = vpop.permute.xlu0 %1910
        %1912 = vrot.lane.b32.xlu0 %v841, 112
        %v1913 = vpop.permute.xlu0 %1912
        %1914 = vrot.lane.b32.xlu0 %v846, 112
        %v1915 = vpop.permute.xlu0 %1914
        %1916 = vrot.lane.b32.xlu0 %v851, 112
        %v1917 = vpop.permute.xlu0 %1916
        %1918 = vrot.lane.b32.xlu0 %v856, 112
        %v1919 = vpop.permute.xlu0 %1918
        %1920 = vrot.lane.b32.xlu0 %v861, 112
        %v1921 = vpop.permute.xlu0 %1920
        %1922 = vrot.lane.b32.xlu0 %v866, 112
        %v1923 = vpop.permute.xlu0 %1922
        %1924 = vrot.lane.b32.xlu0 %v871, 112
        %v1925 = vpop.permute.xlu0 %1924
        %1926 = vrot.lane.b32.xlu0 %v876, 112
        %v1927 = vpop.permute.xlu0 %1926
        %1928 = vrot.lane.b32.xlu0 %v881, 112
        %v1929 = vpop.permute.xlu0 %1928
        %1930 = vrot.lane.b32.xlu0 %v886, 112
        %v1931 = vpop.permute.xlu0 %1930
        %1932 = vrot.lane.b32.xlu0 %v891, 112
        %v1933 = vpop.permute.xlu0 %1932
        %1934 = vrot.lane.b32.xlu0 %v896, 112
        %v1935 = vpop.permute.xlu0 %1934
        %1936 = vrot.lane.b32.xlu0 %v901, 112
        %v1937 = vpop.permute.xlu0 %1936
        %1938 = vrot.lane.b32.xlu0 %v906, 112
        %v1939 = vpop.permute.xlu0 %1938
        %1940 = vrot.lane.b32.xlu0 %v911, 112
        %v1941 = vpop.permute.xlu0 %1940
        %v1942 = vsel %vm1149, %v1909, 0
        %v1944 = vsel %vm1149, %v1911, 0
        %v1946 = vsel %vm1149, %v1913, 0
        %v1948 = vsel %vm1149, %v1915, 0
        %v1950 = vsel %vm1149, %v1917, 0
        %v1952 = vsel %vm1149, %v1919, 0
        %v1954 = vsel %vm1149, %v1921, 0
        %v1956 = vsel %vm1149, %v1923, 0
        %v1958 = vsel %vm1149, %v1925, 0
        %v1960 = vsel %vm1149, %v1927, 0
        %v1962 = vsel %vm1149, %v1929, 0
        %v1964 = vsel %vm1149, %v1931, 0
        %v1966 = vsel %vm1149, %v1933, 0
        %v1968 = vsel %vm1149, %v1935, 0
        %v1970 = vsel %vm1149, %v1937, 0
        %v1972 = vsel %vm1149, %v1939, 0
        %v1974 = vsel %vm1149, %v1941, 0
        %1976 = vmatprep.subr.mxu0 0.0
        %1977 = vmatpush1.xpose.msra.mxu0 %v1944
        %1978 = vmatprep.subr.mxu0 0.0
        %1979 = vmatpush1.xpose.msra.mxu0 %v1946
        %1980 = vmatprep.subr.mxu0 0.0
        %1981 = vmatpush1.xpose.msra.mxu0 %v1948
        %1982 = vmatprep.subr.mxu0 0.0
        %1983 = vmatpush1.xpose.msra.mxu0 %v1950
        %1984 = vmatprep.subr.mxu0 0.0
        %1985 = vmatpush1.xpose.msra.mxu0 %v1952
        %1986 = vmatprep.subr.mxu0 0.0
        %1987 = vmatpush1.xpose.msra.mxu0 %v1954
        %1988 = vmatprep.subr.mxu0 0.0
        %1989 = vmatpush1.xpose.msra.mxu0 %v1956
        %1990 = vmatprep.subr.mxu0 0.0
        %1991 = vmatpush1.xpose.msra.mxu0 %v1958
        %1992 = vmatprep.subr.mxu0 0.0
        %1993 = vmatpush1.xpose.msra.mxu0 %v1960
        %1994 = vmatprep.subr.mxu0 0.0
        %1995 = vmatpush1.xpose.msra.mxu0 %v1962
        %1996 = vmatprep.subr.mxu0 0.0
        %1997 = vmatpush1.xpose.msra.mxu0 %v1964
        %1998 = vmatprep.subr.mxu0 0.0
        %1999 = vmatpush1.xpose.msra.mxu0 %v1966
        %2000 = vmatprep.subr.mxu0 0.0
        %2001 = vmatpush1.xpose.msra.mxu0 %v1968
        %2002 = vmatprep.subr.mxu0 0.0
        %2003 = vmatpush1.xpose.msra.mxu0 %v1970
        %2004 = vmatprep.subr.mxu0 0.0
        %2005 = vmatpush1.xpose.msra.mxu0 %v1972
        %2006 = vmatprep.subr.mxu0 0.0
        %2007 = vmatpush1.xpose.msra.mxu0 %v1974
        %2008 = vmatprep.subr.mxu0 0.0
        %2009 = vmatpush1.xpose.msra.mxu0 0.0
        %2010 = vmatprep.subr.mxu0 0.0
        %2011 = vmatpush1.xpose.msra.mxu0 0.0
        %2012 = vmatprep.subr.mxu0 0.0
        %2013 = vmatpush1.xpose.msra.mxu0 0.0
        %2014 = vmatprep.subr.mxu0 0.0
        %2015 = vmatpush1.xpose.msra.mxu0 0.0
        %2016 = vmatprep.subr.mxu0 0.0
        %2017 = vmatpush1.xpose.msra.mxu0 0.0
        %2018 = vmatprep.subr.mxu0 0.0
        %2019 = vmatpush1.xpose.msra.mxu0 0.0
        %2020 = vmatprep.subr.mxu0 0.0
        %2021 = vmatpush1.xpose.msra.mxu0 0.0
        %2022 = vmatprep.subr.mxu0 0.0
        %2023 = vmatpush1.xpose.msra.mxu0 0.0
        %2024 = vmatprep.subr.mxu0 0.0
        %2025 = vmatpush1.xpose.msra.mxu0 0.0
        %2026 = vmatprep.subr.mxu0 0.0
        %2027 = vmatpush1.xpose.msra.mxu0 0.0
        %2028 = vmatprep.subr.mxu0 0.0
        %2029 = vmatpush1.xpose.msra.mxu0 0.0
        %2030 = vmatprep.subr.mxu0 0.0
        %2031 = vmatpush1.xpose.msra.mxu0 0.0
        %2032 = vmatprep.subr.mxu0 0.0
        %2033 = vmatpush1.xpose.msra.mxu0 0.0
        %2034 = vmatprep.subr.mxu0 0.0
        %2035 = vmatpush1.xpose.msra.mxu0 0.0
        %2036 = vmatprep.subr.mxu0 0.0
        %2037 = vmatpush1.xpose.msra.mxu0 0.0
        %2038 = vmatprep.subr.mxu0 0.0
        %2039 = vmatpush1.xpose.msra.mxu0 0.0
        %2040 = vmatprep.mubr.f32.mxu0 0.0
        %2041 = vmatmul.mubr.f32.gmra.mrb[0].mxu0 %v1942
        %v2042 = vpop.f32.mrb[0].mxu0
        %v2043 = vadd.f32 %v1907, %v2042
        %v2044 = vpop.f32.mrb[0].mxu0
        %2045 = vdwg.mxu0
        %v2046 = vadd.f32 %v2043, %v1364
        %2047 = vmax.xlane.f32.xlu0 %v2046
        %v2048 = vpop.xlane.xlu0 %2047
        %v2049 = vsub.f32 %v2046, %v2048
        %v2050 = vmul.f32 %v2049, 1.442695
        %v2051 = vpow.pop %v2050
        %2052 = vadd.xlane.f32.xlu0 %v2051
        %v2053 = vpop.xlane.xlu0 %2052
        %v2054 = vrcp.pop %v2053
        %v2055 = vmul.f32 %v2051, %v2054
        %v2056 = vmul.f32 %v2055, %v1380
        %2057 = vrot.lane.b32.xlu0 %v1051, 112
        %v2058 = vpop.permute.xlu0 %2057
        %2059 = vrot.lane.b32.xlu0 %v1056, 112
        %v2060 = vpop.permute.xlu0 %2059
        %2061 = vrot.lane.b32.xlu0 %v1061, 112
        %v2062 = vpop.permute.xlu0 %2061
        %2063 = vrot.lane.b32.xlu0 %v1066, 112
        %v2064 = vpop.permute.xlu0 %2063
        %2065 = vrot.lane.b32.xlu0 %v1071, 112
        %v2066 = vpop.permute.xlu0 %2065
        %2067 = vrot.lane.b32.xlu0 %v1076, 112
        %v2068 = vpop.permute.xlu0 %2067
        %2069 = vrot.lane.b32.xlu0 %v1081, 112
        %v2070 = vpop.permute.xlu0 %2069
        %2071 = vrot.lane.b32.xlu0 %v1086, 112
        %v2072 = vpop.permute.xlu0 %2071
        %2073 = vrot.lane.b32.xlu0 %v1091, 112
        %v2074 = vpop.permute.xlu0 %2073
        %2075 = vrot.lane.b32.xlu0 %v1096, 112
        %v2076 = vpop.permute.xlu0 %2075
        %2077 = vrot.lane.b32.xlu0 %v1101, 112
        %v2078 = vpop.permute.xlu0 %2077
        %2079 = vrot.lane.b32.xlu0 %v1106, 112
        %v2080 = vpop.permute.xlu0 %2079
        %2081 = vrot.lane.b32.xlu0 %v1111, 112
        %v2082 = vpop.permute.xlu0 %2081
        %2083 = vrot.lane.b32.xlu0 %v1116, 112
        %v2084 = vpop.permute.xlu0 %2083
        %2085 = vrot.lane.b32.xlu0 %v1121, 112
        %v2086 = vpop.permute.xlu0 %2085
        %2087 = vrot.lane.b32.xlu0 %v1126, 112
        %v2088 = vpop.permute.xlu0 %2087
        %2105 = vmatprep.subr.mxu0 0.0
        %2106 = vmatpush1.msra.mxu0 %v2058
        %2107 = vmatprep.subr.mxu0 0.0
        %2108 = vmatpush1.msra.mxu0 %v2060
        %2109 = vmatprep.subr.mxu0 0.0
        %2110 = vmatpush1.msra.mxu0 %v2062
        %2111 = vmatprep.subr.mxu0 0.0
        %2112 = vmatpush1.msra.mxu0 %v2064
        %2113 = vmatprep.subr.mxu0 0.0
        %2114 = vmatpush1.msra.mxu0 %v2066
        %2115 = vmatprep.subr.mxu0 0.0
        %2116 = vmatpush1.msra.mxu0 %v2068
        %2117 = vmatprep.subr.mxu0 0.0
        %2118 = vmatpush1.msra.mxu0 %v2070
        %2119 = vmatprep.subr.mxu0 0.0
        %2120 = vmatpush1.msra.mxu0 %v2072
        %2121 = vmatprep.subr.mxu0 0.0
        %2122 = vmatpush1.msra.mxu0 %v2074
        %2123 = vmatprep.subr.mxu0 0.0
        %2124 = vmatpush1.msra.mxu0 %v2076
        %2125 = vmatprep.subr.mxu0 0.0
        %2126 = vmatpush1.msra.mxu0 %v2078
        %2127 = vmatprep.subr.mxu0 0.0
        %2128 = vmatpush1.msra.mxu0 %v2080
        %2129 = vmatprep.subr.mxu0 0.0
        %2130 = vmatpush1.msra.mxu0 %v2082
        %2131 = vmatprep.subr.mxu0 0.0
        %2132 = vmatpush1.msra.mxu0 %v2084
        %2133 = vmatprep.subr.mxu0 0.0
        %2134 = vmatpush1.msra.mxu0 %v2086
        %2135 = vmatprep.subr.mxu0 0.0
        %2136 = vmatpush1.msra.mxu0 %v2088
        %2137 = vmatprep.subr.mxu0 0.0
        %2138 = vmatpush1.msra.mxu0 0.0
        %2139 = vmatprep.subr.mxu0 0.0
        %2140 = vmatpush1.msra.mxu0 0.0
        %2141 = vmatprep.subr.mxu0 0.0
        %2142 = vmatpush1.msra.mxu0 0.0
        %2143 = vmatprep.subr.mxu0 0.0
        %2144 = vmatpush1.msra.mxu0 0.0
        %2145 = vmatprep.subr.mxu0 0.0
        %2146 = vmatpush1.msra.mxu0 0.0
        %2147 = vmatprep.subr.mxu0 0.0
        %2148 = vmatpush1.msra.mxu0 0.0
        %2149 = vmatprep.subr.mxu0 0.0
        %2150 = vmatpush1.msra.mxu0 0.0
        %2151 = vmatprep.subr.mxu0 0.0
        %2152 = vmatpush1.msra.mxu0 0.0
        %2153 = vmatprep.subr.mxu0 0.0
        %2154 = vmatpush1.msra.mxu0 0.0
        %2155 = vmatprep.subr.mxu0 0.0
        %2156 = vmatpush1.msra.mxu0 0.0
        %2157 = vmatprep.subr.mxu0 0.0
        %2158 = vmatpush1.msra.mxu0 0.0
        %2159 = vmatprep.subr.mxu0 0.0
        %2160 = vmatpush1.msra.mxu0 0.0
        %2161 = vmatprep.subr.mxu0 0.0
        %2162 = vmatpush1.msra.mxu0 0.0
        %2163 = vmatprep.subr.mxu0 0.0
        %2164 = vmatpush1.msra.mxu0 0.0
        %2165 = vmatprep.subr.mxu0 0.0
        %2166 = vmatpush1.msra.mxu0 0.0
        %2167 = vmatprep.subr.mxu0 0.0
        %2168 = vmatpush1.msra.mxu0 0.0
        %2169 = vmatprep.mubr.f32.mxu0 0.0
        %2170 = vmatmul.mubr.f32.gmra.mrb[0].mxu0 %v2056
        %v2171 = vpop.f32.mrb[0].mxu0
        %v2172 = vadd.f32 0.0, %v2171
        %v2173 = vpop.f32.mrb[0].mxu0
        %2174 = vdwg.mxu0
        %v2175 = vld [vmem:[%s3 + $0x30] sm:$0xff]
        %v2176 = vld [vmem:[%s3 + $0x38] sm:$0xff]
        %2177 = vrot.lane.b32.xlu0 %v1144, 104
        %v2178 = vpop.permute.xlu0 %2177
        %v2179 = vsel %vm1149, %v2178, 0
        %2181 = vmatprep.subr.mxu0 %v2176
        %2182 = vmatpush1.msra.mxu0 %v2175
        %2183 = vmatprep.subr.mxu0 0.0
        %2184 = vmatpush1.msra.mxu0 0.0
        %2185 = vmatprep.subr.mxu0 0.0
        %2186 = vmatpush1.msra.mxu0 0.0
        %2187 = vmatprep.subr.mxu0 0.0
        %2188 = vmatpush1.msra.mxu0 0.0
        %2189 = vmatprep.subr.mxu0 0.0
        %2190 = vmatpush1.msra.mxu0 0.0
        %2191 = vmatprep.subr.mxu0 0.0
        %2192 = vmatpush1.msra.mxu0 0.0
        %2193 = vmatprep.subr.mxu0 0.0
        %2194 = vmatpush1.msra.mxu0 0.0
        %2195 = vmatprep.subr.mxu0 0.0
        %2196 = vmatpush1.msra.mxu0 0.0
        %2197 = vmatprep.subr.mxu0 0.0
        %2198 = vmatpush1.msra.mxu0 0.0
        %2199 = vmatprep.subr.mxu0 0.0
        %2200 = vmatpush1.msra.mxu0 0.0
        %2201 = vmatprep.subr.mxu0 0.0
        %2202 = vmatpush1.msra.mxu0 0.0
        %2203 = vmatprep.subr.mxu0 0.0
        %2204 = vmatpush1.msra.mxu0 0.0
        %2205 = vmatprep.subr.mxu0 0.0
        %2206 = vmatpush1.msra.mxu0 0.0
        %2207 = vmatprep.subr.mxu0 0.0
        %2208 = vmatpush1.msra.mxu0 0.0
        %2209 = vmatprep.subr.mxu0 0.0
        %2210 = vmatpush1.msra.mxu0 0.0
        %2211 = vmatprep.subr.mxu0 0.0
        %2212 = vmatpush1.msra.mxu0 0.0
        %2213 = vmatprep.subr.mxu0 0.0
        %2214 = vmatpush1.msra.mxu0 0.0
        %2215 = vmatprep.subr.mxu0 0.0
        %2216 = vmatpush1.msra.mxu0 0.0
        %2217 = vmatprep.subr.mxu0 0.0
        %2218 = vmatpush1.msra.mxu0 0.0
        %2219 = vmatprep.subr.mxu0 0.0
        %2220 = vmatpush1.msra.mxu0 0.0
        %2221 = vmatprep.subr.mxu0 0.0
        %2222 = vmatpush1.msra.mxu0 0.0
        %2223 = vmatprep.subr.mxu0 0.0
        %2224 = vmatpush1.msra.mxu0 0.0
        %2225 = vmatprep.subr.mxu0 0.0
        %2226 = vmatpush1.msra.mxu0 0.0
        %2227 = vmatprep.subr.mxu0 0.0
        %2228 = vmatpush1.msra.mxu0 0.0
        %2229 = vmatprep.subr.mxu0 0.0
        %2230 = vmatpush1.msra.mxu0 0.0
        %2231 = vmatprep.subr.mxu0 0.0
        %2232 = vmatpush1.msra.mxu0 0.0
        %2233 = vmatprep.subr.mxu0 0.0
        %2234 = vmatpush1.msra.mxu0 0.0
        %2235 = vmatprep.subr.mxu0 0.0
        %2236 = vmatpush1.msra.mxu0 0.0
        %2237 = vmatprep.subr.mxu0 0.0
        %2238 = vmatpush1.msra.mxu0 0.0
        %2239 = vmatprep.subr.mxu0 0.0
        %2240 = vmatpush1.msra.mxu0 0.0
        %2241 = vmatprep.subr.mxu0 0.0
        %2242 = vmatpush1.msra.mxu0 0.0
        %2243 = vmatprep.subr.mxu0 0.0
        %2244 = vmatpush1.msra.mxu0 0.0
        %2245 = vmatprep.mubr.f32.mxu0 0.0
        %2246 = vmatmul.mubr.f32.gmra.mrb[0].mxu0 %v2179
        %v2247 = vpop.f32.mrb[0].mxu0
        %v2248 = vadd.f32 0.0, %v2247
        %v2249 = vpop.f32.mrb[0].mxu0
        %v2250 = vadd.f32 0.0, %v2249
        %2251 = vdwg.mxu0
        %s2253 = sor.u32 256, 121
        %2254 = vrot.lane.b32.xlu0 %v2248, %s2253
        %v2255 = vpop.permute.xlu0 %2254
        %s2257 = sor.u32 256, 121
        %2258 = vrot.lane.b32.xlu0 %v2250, %s2257
        %v2259 = vpop.permute.xlu0 %2258
        %v2260 = vsel %vm1237, %v2255, %v2259
        %2261 = vrot.lane.b32.xlu0 %v1136, 104
        %v2262 = vpop.permute.xlu0 %2261
        %2263 = vrot.lane.b32.xlu0 %v836, 104
        %v2264 = vpop.permute.xlu0 %2263
        %2265 = vrot.lane.b32.xlu0 %v841, 104
        %v2266 = vpop.permute.xlu0 %2265
        %2267 = vrot.lane.b32.xlu0 %v846, 104
        %v2268 = vpop.permute.xlu0 %2267
        %2269 = vrot.lane.b32.xlu0 %v851, 104
        %v2270 = vpop.permute.xlu0 %2269
        %2271 = vrot.lane.b32.xlu0 %v856, 104
        %v2272 = vpop.permute.xlu0 %2271
        %2273 = vrot.lane.b32.xlu0 %v861, 104
        %v2274 = vpop.permute.xlu0 %2273
        %2275 = vrot.lane.b32.xlu0 %v866, 104
        %v2276 = vpop.permute.xlu0 %2275
        %2277 = vrot.lane.b32.xlu0 %v871, 104
        %v2278 = vpop.permute.xlu0 %2277
        %2279 = vrot.lane.b32.xlu0 %v876, 104
        %v2280 = vpop.permute.xlu0 %2279
        %2281 = vrot.lane.b32.xlu0 %v881, 104
        %v2282 = vpop.permute.xlu0 %2281
        %2283 = vrot.lane.b32.xlu0 %v886, 104
        %v2284 = vpop.permute.xlu0 %2283
        %2285 = vrot.lane.b32.xlu0 %v891, 104
        %v2286 = vpop.permute.xlu0 %2285
        %2287 = vrot.lane.b32.xlu0 %v896, 104
        %v2288 = vpop.permute.xlu0 %2287
        %2289 = vrot.lane.b32.xlu0 %v901, 104
        %v2290 = vpop.permute.xlu0 %2289
        %2291 = vrot.lane.b32.xlu0 %v906, 104
        %v2292 = vpop.permute.xlu0 %2291
        %2293 = vrot.lane.b32.xlu0 %v911, 104
        %v2294 = vpop.permute.xlu0 %2293
        %v2295 = vsel %vm1149, %v2262, 0
        %v2297 = vsel %vm1149, %v2264, 0
        %v2299 = vsel %vm1149, %v2266, 0
        %v2301 = vsel %vm1149, %v2268, 0
        %v2303 = vsel %vm1149, %v2270, 0
        %v2305 = vsel %vm1149, %v2272, 0
        %v2307 = vsel %vm1149, %v2274, 0
        %v2309 = vsel %vm1149, %v2276, 0
        %v2311 = vsel %vm1149, %v2278, 0
        %v2313 = vsel %vm1149, %v2280, 0
        %v2315 = vsel %vm1149, %v2282, 0
        %v2317 = vsel %vm1149, %v2284, 0
        %v2319 = vsel %vm1149, %v2286, 0
        %v2321 = vsel %vm1149, %v2288, 0
        %v2323 = vsel %vm1149, %v2290, 0
        %v2325 = vsel %vm1149, %v2292, 0
        %v2327 = vsel %vm1149, %v2294, 0
        %2329 = vmatprep.subr.mxu0 0.0
        %2330 = vmatpush1.xpose.msra.mxu0 %v2297
        %2331 = vmatprep.subr.mxu0 0.0
        %2332 = vmatpush1.xpose.msra.mxu0 %v2299
        %2333 = vmatprep.subr.mxu0 0.0
        %2334 = vmatpush1.xpose.msra.mxu0 %v2301
        %2335 = vmatprep.subr.mxu0 0.0
        %2336 = vmatpush1.xpose.msra.mxu0 %v2303
        %2337 = vmatprep.subr.mxu0 0.0
        %2338 = vmatpush1.xpose.msra.mxu0 %v2305
        %2339 = vmatprep.subr.mxu0 0.0
        %2340 = vmatpush1.xpose.msra.mxu0 %v2307
        %2341 = vmatprep.subr.mxu0 0.0
        %2342 = vmatpush1.xpose.msra.mxu0 %v2309
        %2343 = vmatprep.subr.mxu0 0.0
        %2344 = vmatpush1.xpose.msra.mxu0 %v2311
        %2345 = vmatprep.subr.mxu0 0.0
        %2346 = vmatpush1.xpose.msra.mxu0 %v2313
        %2347 = vmatprep.subr.mxu0 0.0
        %2348 = vmatpush1.xpose.msra.mxu0 %v2315
        %2349 = vmatprep.subr.mxu0 0.0
        %2350 = vmatpush1.xpose.msra.mxu0 %v2317
        %2351 = vmatprep.subr.mxu0 0.0
        %2352 = vmatpush1.xpose.msra.mxu0 %v2319
        %2353 = vmatprep.subr.mxu0 0.0
        %2354 = vmatpush1.xpose.msra.mxu0 %v2321
        %2355 = vmatprep.subr.mxu0 0.0
        %2356 = vmatpush1.xpose.msra.mxu0 %v2323
        %2357 = vmatprep.subr.mxu0 0.0
        %2358 = vmatpush1.xpose.msra.mxu0 %v2325
        %2359 = vmatprep.subr.mxu0 0.0
        %2360 = vmatpush1.xpose.msra.mxu0 %v2327
        %2361 = vmatprep.subr.mxu0 0.0
        %2362 = vmatpush1.xpose.msra.mxu0 0.0
        %2363 = vmatprep.subr.mxu0 0.0
        %2364 = vmatpush1.xpose.msra.mxu0 0.0
        %2365 = vmatprep.subr.mxu0 0.0
        %2366 = vmatpush1.xpose.msra.mxu0 0.0
        %2367 = vmatprep.subr.mxu0 0.0
        %2368 = vmatpush1.xpose.msra.mxu0 0.0
        %2369 = vmatprep.subr.mxu0 0.0
        %2370 = vmatpush1.xpose.msra.mxu0 0.0
        %2371 = vmatprep.subr.mxu0 0.0
        %2372 = vmatpush1.xpose.msra.mxu0 0.0
        %2373 = vmatprep.subr.mxu0 0.0
        %2374 = vmatpush1.xpose.msra.mxu0 0.0
        %2375 = vmatprep.subr.mxu0 0.0
        %2376 = vmatpush1.xpose.msra.mxu0 0.0
        %2377 = vmatprep.subr.mxu0 0.0
        %2378 = vmatpush1.xpose.msra.mxu0 0.0
        %2379 = vmatprep.subr.mxu0 0.0
        %2380 = vmatpush1.xpose.msra.mxu0 0.0
        %2381 = vmatprep.subr.mxu0 0.0
        %2382 = vmatpush1.xpose.msra.mxu0 0.0
        %2383 = vmatprep.subr.mxu0 0.0
        %2384 = vmatpush1.xpose.msra.mxu0 0.0
        %2385 = vmatprep.subr.mxu0 0.0
        %2386 = vmatpush1.xpose.msra.mxu0 0.0
        %2387 = vmatprep.subr.mxu0 0.0
        %2388 = vmatpush1.xpose.msra.mxu0 0.0
        %2389 = vmatprep.subr.mxu0 0.0
        %2390 = vmatpush1.xpose.msra.mxu0 0.0
        %2391 = vmatprep.subr.mxu0 0.0
        %2392 = vmatpush1.xpose.msra.mxu0 0.0
        %2393 = vmatprep.mubr.f32.mxu0 0.0
        %2394 = vmatmul.mubr.f32.gmra.mrb[0].mxu0 %v2295
        %v2395 = vpop.f32.mrb[0].mxu0
        %v2396 = vadd.f32 %v2260, %v2395
        %v2397 = vpop.f32.mrb[0].mxu0
        %2398 = vdwg.mxu0
        %v2399 = vadd.f32 %v2396, %v1364
        %2400 = vmax.xlane.f32.xlu0 %v2399
        %v2401 = vpop.xlane.xlu0 %2400
        %v2402 = vsub.f32 %v2399, %v2401
        %v2403 = vmul.f32 %v2402, 1.442695
        %v2404 = vpow.pop %v2403
        %2405 = vadd.xlane.f32.xlu0 %v2404
        %v2406 = vpop.xlane.xlu0 %2405
        %v2407 = vrcp.pop %v2406
        %v2408 = vmul.f32 %v2404, %v2407
        %v2409 = vmul.f32 %v2408, %v1380
        %2410 = vrot.lane.b32.xlu0 %v1051, 104
        %v2411 = vpop.permute.xlu0 %2410
        %2412 = vrot.lane.b32.xlu0 %v1056, 104
        %v2413 = vpop.permute.xlu0 %2412
        %2414 = vrot.lane.b32.xlu0 %v1061, 104
        %v2415 = vpop.permute.xlu0 %2414
        %2416 = vrot.lane.b32.xlu0 %v1066, 104
        %v2417 = vpop.permute.xlu0 %2416
        %2418 = vrot.lane.b32.xlu0 %v1071, 104
        %v2419 = vpop.permute.xlu0 %2418
        %2420 = vrot.lane.b32.xlu0 %v1076, 104
        %v2421 = vpop.permute.xlu0 %2420
        %2422 = vrot.lane.b32.xlu0 %v1081, 104
        %v2423 = vpop.permute.xlu0 %2422
        %2424 = vrot.lane.b32.xlu0 %v1086, 104
        %v2425 = vpop.permute.xlu0 %2424
        %2426 = vrot.lane.b32.xlu0 %v1091, 104
        %v2427 = vpop.permute.xlu0 %2426
        %2428 = vrot.lane.b32.xlu0 %v1096, 104
        %v2429 = vpop.permute.xlu0 %2428
        %2430 = vrot.lane.b32.xlu0 %v1101, 104
        %v2431 = vpop.permute.xlu0 %2430
        %2432 = vrot.lane.b32.xlu0 %v1106, 104
        %v2433 = vpop.permute.xlu0 %2432
        %2434 = vrot.lane.b32.xlu0 %v1111, 104
        %v2435 = vpop.permute.xlu0 %2434
        %2436 = vrot.lane.b32.xlu0 %v1116, 104
        %v2437 = vpop.permute.xlu0 %2436
        %2438 = vrot.lane.b32.xlu0 %v1121, 104
        %v2439 = vpop.permute.xlu0 %2438
        %2440 = vrot.lane.b32.xlu0 %v1126, 104
        %v2441 = vpop.permute.xlu0 %2440
        %2458 = vmatprep.subr.mxu0 0.0
        %2459 = vmatpush1.msra.mxu0 %v2411
        %2460 = vmatprep.subr.mxu0 0.0
        %2461 = vmatpush1.msra.mxu0 %v2413
        %2462 = vmatprep.subr.mxu0 0.0
        %2463 = vmatpush1.msra.mxu0 %v2415
        %2464 = vmatprep.subr.mxu0 0.0
        %2465 = vmatpush1.msra.mxu0 %v2417
        %2466 = vmatprep.subr.mxu0 0.0
        %2467 = vmatpush1.msra.mxu0 %v2419
        %2468 = vmatprep.subr.mxu0 0.0
        %2469 = vmatpush1.msra.mxu0 %v2421
        %2470 = vmatprep.subr.mxu0 0.0
        %2471 = vmatpush1.msra.mxu0 %v2423
        %2472 = vmatprep.subr.mxu0 0.0
        %2473 = vmatpush1.msra.mxu0 %v2425
        %2474 = vmatprep.subr.mxu0 0.0
        %2475 = vmatpush1.msra.mxu0 %v2427
        %2476 = vmatprep.subr.mxu0 0.0
        %2477 = vmatpush1.msra.mxu0 %v2429
        %2478 = vmatprep.subr.mxu0 0.0
        %2479 = vmatpush1.msra.mxu0 %v2431
        %2480 = vmatprep.subr.mxu0 0.0
        %2481 = vmatpush1.msra.mxu0 %v2433
        %2482 = vmatprep.subr.mxu0 0.0
        %2483 = vmatpush1.msra.mxu0 %v2435
        %2484 = vmatprep.subr.mxu0 0.0
        %2485 = vmatpush1.msra.mxu0 %v2437
        %2486 = vmatprep.subr.mxu0 0.0
        %2487 = vmatpush1.msra.mxu0 %v2439
        %2488 = vmatprep.subr.mxu0 0.0
        %2489 = vmatpush1.msra.mxu0 %v2441
        %2490 = vmatprep.subr.mxu0 0.0
        %2491 = vmatpush1.msra.mxu0 0.0
        %2492 = vmatprep.subr.mxu0 0.0
        %2493 = vmatpush1.msra.mxu0 0.0
        %2494 = vmatprep.subr.mxu0 0.0
        %2495 = vmatpush1.msra.mxu0 0.0
        %2496 = vmatprep.subr.mxu0 0.0
        %2497 = vmatpush1.msra.mxu0 0.0
        %2498 = vmatprep.subr.mxu0 0.0
        %2499 = vmatpush1.msra.mxu0 0.0
        %2500 = vmatprep.subr.mxu0 0.0
        %2501 = vmatpush1.msra.mxu0 0.0
        %2502 = vmatprep.subr.mxu0 0.0
        %2503 = vmatpush1.msra.mxu0 0.0
        %2504 = vmatprep.subr.mxu0 0.0
        %2505 = vmatpush1.msra.mxu0 0.0
        %2506 = vmatprep.subr.mxu0 0.0
        %2507 = vmatpush1.msra.mxu0 0.0
        %2508 = vmatprep.subr.mxu0 0.0
        %2509 = vmatpush1.msra.mxu0 0.0
        %2510 = vmatprep.subr.mxu0 0.0
        %2511 = vmatpush1.msra.mxu0 0.0
        %2512 = vmatprep.subr.mxu0 0.0
        %2513 = vmatpush1.msra.mxu0 0.0
        %2514 = vmatprep.subr.mxu0 0.0
        %2515 = vmatpush1.msra.mxu0 0.0
        %2516 = vmatprep.subr.mxu0 0.0
        %2517 = vmatpush1.msra.mxu0 0.0
        %2518 = vmatprep.subr.mxu0 0.0
        %2519 = vmatpush1.msra.mxu0 0.0
        %2520 = vmatprep.subr.mxu0 0.0
        %2521 = vmatpush1.msra.mxu0 0.0
        %2522 = vmatprep.mubr.f32.mxu0 0.0
        %2523 = vmatmul.mubr.f32.gmra.mrb[0].mxu0 %v2409
        %v2524 = vpop.f32.mrb[0].mxu0
        %v2525 = vadd.f32 0.0, %v2524
        %v2526 = vpop.f32.mrb[0].mxu0
        %2527 = vdwg.mxu0
        %2529 = vrot.lane.b32.xlu0 %v1819, 8
        %v2530 = vpop.permute.xlu0 %2529
        %2533 = vrot.lane.b32.xlu0 %v2172, 16
        %v2534 = vpop.permute.xlu0 %2533
        %2537 = vrot.lane.b32.xlu0 %v2525, 24
        %v2538 = vpop.permute.xlu0 %2537
        %v2540 = vsel %vm1149, %v1450, %v2530
        %vm2541 = vcmask 130048
        %v2542 = vsel %vm2541, %v2540, %v2534
        %vm2543 = vcmask 195584
        %v2544 = vsel %vm2543, %v2542, %v2538
        %v2545 = vld [vmem:[%s13] sm:$0x1]
        %v2547 = vlaneseq
        %v2548 = vshrl.u32 %v2547, 7
        %v2549 = vsub.s32 0, %v2548
        %v2550 = vrot.slane %v2545, %v2549
        %v2553 = vsel %vm625, %v2544, 0
        %2555 = vmatprep.subr.mxu0 0.0
        %2556 = vmatpush1.msra.mxu0 %v597
        %2557 = vmatprep.subr.mxu0 0.0
        %2558 = vmatpush1.msra.mxu0 %v598
        %2559 = vmatprep.subr.mxu0 0.0
        %2560 = vmatpush1.msra.mxu0 %v599
        %2561 = vmatprep.subr.mxu0 0.0
        %2562 = vmatpush1.msra.mxu0 %v600
        %2563 = vmatprep.subr.mxu0 0.0
        %2564 = vmatpush1.msra.mxu0 0.0
        %2565 = vmatprep.subr.mxu0 0.0
        %2566 = vmatpush1.msra.mxu0 0.0
        %2567 = vmatprep.subr.mxu0 0.0
        %2568 = vmatpush1.msra.mxu0 0.0
        %2569 = vmatprep.subr.mxu0 0.0
        %2570 = vmatpush1.msra.mxu0 0.0
        %2571 = vmatprep.subr.mxu0 0.0
        %2572 = vmatpush1.msra.mxu0 0.0
        %2573 = vmatprep.subr.mxu0 0.0
        %2574 = vmatpush1.msra.mxu0 0.0
        %2575 = vmatprep.subr.mxu0 0.0
        %2576 = vmatpush1.msra.mxu0 0.0
        %2577 = vmatprep.subr.mxu0 0.0
        %2578 = vmatpush1.msra.mxu0 0.0
        %2579 = vmatprep.subr.mxu0 0.0
        %2580 = vmatpush1.msra.mxu0 0.0
        %2581 = vmatprep.subr.mxu0 0.0
        %2582 = vmatpush1.msra.mxu0 0.0
        %2583 = vmatprep.subr.mxu0 0.0
        %2584 = vmatpush1.msra.mxu0 0.0
        %2585 = vmatprep.subr.mxu0 0.0
        %2586 = vmatpush1.msra.mxu0 0.0
        %2587 = vmatprep.subr.mxu0 0.0
        %2588 = vmatpush1.msra.mxu0 0.0
        %2589 = vmatprep.subr.mxu0 0.0
        %2590 = vmatpush1.msra.mxu0 0.0
        %2591 = vmatprep.subr.mxu0 0.0
        %2592 = vmatpush1.msra.mxu0 0.0
        %2593 = vmatprep.subr.mxu0 0.0
        %2594 = vmatpush1.msra.mxu0 0.0
        %2595 = vmatprep.subr.mxu0 0.0
        %2596 = vmatpush1.msra.mxu0 0.0
        %2597 = vmatprep.subr.mxu0 0.0
        %2598 = vmatpush1.msra.mxu0 0.0
        %2599 = vmatprep.subr.mxu0 0.0
        %2600 = vmatpush1.msra.mxu0 0.0
        %2601 = vmatprep.subr.mxu0 0.0
        %2602 = vmatpush1.msra.mxu0 0.0
        %2603 = vmatprep.subr.mxu0 0.0
        %2604 = vmatpush1.msra.mxu0 0.0
        %2605 = vmatprep.subr.mxu0 0.0
        %2606 = vmatpush1.msra.mxu0 0.0
        %2607 = vmatprep.subr.mxu0 0.0
        %2608 = vmatpush1.msra.mxu0 0.0
        %2609 = vmatprep.subr.mxu0 0.0
        %2610 = vmatpush1.msra.mxu0 0.0
        %2611 = vmatprep.subr.mxu0 0.0
        %2612 = vmatpush1.msra.mxu0 0.0
        %2613 = vmatprep.subr.mxu0 0.0
        %2614 = vmatpush1.msra.mxu0 0.0
        %2615 = vmatprep.subr.mxu0 0.0
        %2616 = vmatpush1.msra.mxu0 0.0
        %2617 = vmatprep.subr.mxu0 0.0
        %2618 = vmatpush1.msra.mxu0 0.0
        %2619 = vmatprep.mubr.f32.mxu0 0.0
        %2620 = vmatmul.mubr.f32.gmra.mrb[0].mxu0 %v2553
        %v2621 = vpop.f32.mrb[0].mxu0
        %v2622 = vadd.f32 %v2550, %v2621
        %v2623 = vpop.f32.mrb[0].mxu0
        %2624 = vdwg.mxu0
        %2625 = vst.msk [vmem:[%s576] sm:$0xff] %vm625, %v2622
        %s2626 = sand.u32 %s411, 1
        %s2627 = scalar_lea.sflag [#allocation4], %s2626
        %s2628 = sand.u32 %s411, 1
        %s2629 = smul.addr %s2628, 8
        %s2630 = scalar_lea.vmem [#allocation3], %s2629
        // Predicated region
        $region85: #{tpu_custom_call.1} parent=83 // pred_check
          %p2631 = pneg %p421
        $region86: #{tpu_custom_call.1} parent=83 // pred_check_branch
          %2633 = sbr.rel (%p2631) target = $region88
        $region87: #{tpu_custom_call.1} parent=83 // pred_region
          %s2635 = ssub.s32 128, 128
          %2636 = vsyncadd %s2627, %s2635
          %s2637 = smul.addr %s34, 128
          %s2638 = scalar_lea.hbm %s16, %s2637
          %s2640 = sshll.u32 %s2630, 4
          %s2641 = int_to_ptr.vmem [resolvable:$true] %s2640
          %2643 = dma.vmem_to_hbm [thread:$0]  %s2641, 128, %s2638, %s2627
        $region88: #{tpu_custom_call.1} parent=83 // pred_fallthru
          _
      $region84: #{tpu_custom_call.1} parent=5 // pred_fallthru
        _
      %p2644 = scmp.le.s32.totalorder 2, %s25
      // Predicated region
      $region89: #{tpu_custom_call.1} parent=5 // pred_check
        %p2645 = pneg %p2644
      $region90: #{tpu_custom_call.1} parent=5 // pred_check_branch
        %2647 = sbr.rel (%p2645) target = $region92
      $region91: #{tpu_custom_call.1} parent=5 // pred_region
        %s2648 = ssub.s32 %s25, 2
        // Predicated region
        $region93: #{tpu_custom_call.1} parent=91 // pred_check
          %p2649 = pneg %p427
        $region94: #{tpu_custom_call.1} parent=91 // pred_check_branch
          %2651 = sbr.rel (%p2649) target = $region96
        $region95: #{tpu_custom_call.1} parent=91 // pred_region
          %s2652 = sand.u32 %s412, 1
          %s2653 = scalar_lea.sflag [#allocation4], %s2652
          %s2654 = sand.u32 %s412, 1
          %s2655 = smul.addr %s2654, 8
          %s2656 = scalar_lea.vmem [#allocation3], %s2655
          %2657 = dma.done %s2653, 128
        $region96: #{tpu_custom_call.1} parent=91 // pred_fallthru
          _
      $region92: #{tpu_custom_call.1} parent=5 // pred_fallthru
        _
    $region6: #{tpu_custom_call.1} parent=1 // loop_footer
      %s29 = sadd.s32 1, %s25
    $region7: #{tpu_custom_call.1} parent=1 // loop_footer_branch
      %24 = sbr.rel target = $region3
    $region8: #{tpu_custom_call.1} parent=1 // loop_exit
      _
    %2658 = vsyncpa [#allocation4], 1
    %s2659 = scalar_lea.sflag [#allocation4], 1
    %2660 = vsyncpa %s2659, 1

</llo_original>
